<compile_context>
chip_gen: v7x
topology: tpu7x:2x2x1
jax: 0.10.0
libtpu: 0.0.40
codegen_flags: <defaults>
</compile_context>

<pallas_src>
import functools

import jax
import jax.numpy as jnp
from jax import lax
from jax.experimental import pallas as pl
from jax.experimental.pallas import tpu as pltpu


# --------------------------------------------------------------------------
# Kernel 1: fused backbone per image
#   patch-embed matmul (+bias, ReLU)  ->  VMEM scratch (halo-zeroed)  ->
#   3x3 conv (9 shifted-tap matmuls, f32 accumulation)
# --------------------------------------------------------------------------
def _backbone_kernel(x_ref, wf_ref, bf_ref, wp_ref, bp_ref, o_ref, fpad_ref,
                     *, h, w, cmid, cout):
    HW = h * w
    # patch-embed (resnet18 stand-in) + ReLU; bf16 operands, f32 accumulation
    feat = jnp.dot(x_ref[0], wf_ref[...], preferred_element_type=jnp.float32)
    feat = jnp.maximum(feat + bf_ref[...], 0.0)                   # (HW, cmid) f32

    # Zero only the 1-pixel halo; interior is fully overwritten each step.
    zrow = jnp.zeros((1, w + 2, cmid), jnp.float32)
    zcol = jnp.zeros((h + 2, 1, cmid), jnp.float32)
    fpad_ref[pl.ds(0, 1), :, :] = zrow
    fpad_ref[pl.ds(h + 1, 1), :, :] = zrow
    fpad_ref[:, pl.ds(0, 1), :] = zcol
    fpad_ref[:, pl.ds(w + 1, 1), :] = zcol
    fpad_ref[pl.ds(1, h), pl.ds(1, w), :] = feat.reshape(h, w, cmid)

    acc = jnp.zeros((HW, cout), jnp.float32)
    for ky in range(3):
        for kx in range(3):
            tap = fpad_ref[pl.ds(ky, h), pl.ds(kx, w), :]
            tap = tap.reshape(HW, cmid).astype(jnp.bfloat16)
            acc = acc + jnp.dot(tap, wp_ref[ky * 3 + kx],
                                preferred_element_type=jnp.float32)
    o_ref[0] = (acc + bp_ref[...]).astype(o_ref.dtype)


def backbone(x_patches, w_feat, b_feat, w_post, b_post, *, h, w):
    # x_patches: (N_img, HW, Kp) bf16 ; output features (N_img, HW, cout) bf16
    N, HW, Kp = x_patches.shape
    cmid = w_feat.shape[-1]
    cout = w_post.shape[-1]
    kernel = functools.partial(_backbone_kernel, h=h, w=w, cmid=cmid, cout=cout)
    flops = int(N * (2 * HW * Kp * cmid + 9 * 2 * HW * cmid * cout))
    bytes_accessed = int(2 * (x_patches.size + w_feat.size + w_post.size
                              + N * HW * cout) + 4 * (b_feat.size + b_post.size))
    return pl.pallas_call(
        kernel,
        out_shape=jax.ShapeDtypeStruct((N, HW, cout), jnp.bfloat16),
        grid_spec=pltpu.PrefetchScalarGridSpec(
            num_scalar_prefetch=0,
            grid=(N,),
            in_specs=[
                pl.BlockSpec((1, HW, Kp), lambda i: (i, 0, 0)),
                pl.BlockSpec((Kp, cmid), lambda i: (0, 0)),
                pl.BlockSpec((1, cmid), lambda i: (0, 0)),
                pl.BlockSpec((9, cmid, cout), lambda i: (0, 0, 0)),
                pl.BlockSpec((1, cout), lambda i: (0, 0)),
            ],
            out_specs=pl.BlockSpec((1, HW, cout), lambda i: (i, 0, 0)),
            scratch_shapes=[pltpu.VMEM((h + 2, w + 2, cmid), jnp.float32)],
        ),
        compiler_params=pltpu.CompilerParams(dimension_semantics=("parallel",)),
        cost_estimate=pl.CostEstimate(flops=flops, transcendentals=0,
                                      bytes_accessed=bytes_accessed),
    )(x_patches, w_feat, b_feat, w_post, b_post)


# --------------------------------------------------------------------------
# Kernel 2: colorizer attention copy + per-batch InfoNCE scalar
#   qr carries an extra all-ones row: one matmul produces both the label copy
#   and the softmax denominator. Outputs are lane-dense (C, HW) + scalar loss.
# --------------------------------------------------------------------------
def _colorizer_kernel(col_ref, ft_ref, fr_ref, qr_ref, qt_ref, loss_ref, *, d, c):
    scale = 1.0 / float(d) ** 0.5
    ft = (ft_ref[0].astype(jnp.float32) * scale).astype(jnp.bfloat16)  # (HW, d)
    fr = fr_ref[0]                                                     # (RHW, d)

    # similarity (contract on d; fr kept (RHW, d) -> no wrapper transpose)
    s = lax.dot_general(ft, fr, (((1,), (1,)), ((), ())),
                        preferred_element_type=jnp.float32)            # (HW, RHW)
    m = jnp.max(s, axis=-1, keepdims=True)                             # (HW, 1)
    p = jnp.exp(s - m)                                                 # (HW, RHW) f32

    # attention copy of quantized reference labels: row `c` of qr is all ones,
    # so rows 0..c-1 are the unnormalized copy and row c is the denominator.
    pb = p.astype(jnp.bfloat16)
    qt_den = lax.dot_general(qr_ref[0], pb, (((1,), (1,)), ((), ())),
                             preferred_element_type=jnp.float32)       # (c+1, HW)
    denom_row = qt_den[c:c + 1, :]                                     # (1, HW)
    inv_row = pl.reciprocal(denom_row, approx=True)
    qt_ref[0] = (qt_den[:c, :] * inv_row).astype(qt_ref.dtype)

    # InfoNCE (reuse p): positives = same spatial index in each reference frame
    rows = lax.broadcasted_iota(jnp.int32, p.shape, 0)                 # (HW, RHW)
    pos = col_ref[...] == rows
    pos_sum = jnp.sum(jnp.where(pos, p, 0.0), axis=-1, keepdims=True)  # (HW, 1)
    loss = jnp.mean(jnp.log(denom_row)) - jnp.mean(jnp.log(pos_sum))
    loss_ref[...] = jnp.reshape(loss, (1, 1, 1)).astype(loss_ref.dtype)


def colorizer_attention(ft, fr, qr_aug, col_within):
    # ft: (B, HW, d) bf16 ; fr: (B, R*HW, d) bf16 ; qr_aug: (B, C+1, R*HW) bf16
    B, HW, d = ft.shape
    RHW = fr.shape[1]
    C1 = qr_aug.shape[1]
    C = C1 - 1
    kernel = functools.partial(_colorizer_kernel, d=d, c=C)
    flops = int(B * (2 * HW * RHW * d + 2 * C1 * HW * RHW + 8 * HW * RHW))
    bytes_accessed = int(2 * (ft.size + fr.size + qr_aug.size)
                         + 4 * (B * C * HW + B) + 4 * col_within.size)
    return pl.pallas_call(
        kernel,
        out_shape=[
            jax.ShapeDtypeStruct((B, C, HW), jnp.float32),
            jax.ShapeDtypeStruct((B, 1, 1), jnp.float32),
        ],
        grid_spec=pltpu.PrefetchScalarGridSpec(
            num_scalar_prefetch=0,
            grid=(B,),
            in_specs=[
                pl.BlockSpec((1, RHW), lambda b: (0, 0)),
                pl.BlockSpec((1, HW, d), lambda b: (b, 0, 0)),
                pl.BlockSpec((1, RHW, d), lambda b: (b, 0, 0)),
                pl.BlockSpec((1, C1, RHW), lambda b: (b, 0, 0)),
            ],
            out_specs=[
                pl.BlockSpec((1, C, HW), lambda b: (b, 0, 0)),
                pl.BlockSpec((1, 1, 1), lambda b: (b, 0, 0)),
            ],
        ),
        compiler_params=pltpu.CompilerParams(dimension_semantics=("parallel",)),
        cost_estimate=pl.CostEstimate(flops=flops,
                                      transcendentals=int(B * HW * (RHW + 2)),
                                      bytes_accessed=bytes_accessed),
    )(col_within, ft, fr, qr_aug)


# --------------------------------------------------------------------------
# Model wrapper (parameter setup + layout reshapes = glue; compute = Pallas)
# --------------------------------------------------------------------------
class NeworkPallas:
    def __init__(self, training=True, key=jax.random.PRNGKey(42)):
        self.C = 7
        self.training = training
        self.R = 6 if training else 14
        self.patch = 4          # feature map is at 1/4 input resolution
        self.feat_dim = 256     # backbone output channels (matches Conv2d(256, .))
        self.embed_dim = 64     # post_convolution output channels
        self.kpad = 128         # patch-embed contraction dim padded 48 -> 128

        k1, k2 = jax.random.split(key, 2)
        feat_in = 3 * self.patch * self.patch
        w_feat = 0.05 * jax.random.normal(k1, (feat_in, self.feat_dim), jnp.float32)
        self.w_feat = (jnp.zeros((self.kpad, self.feat_dim), jnp.float32)
                       .at[:feat_in].set(w_feat).astype(jnp.bfloat16))
        self.b_feat = jnp.zeros((1, self.feat_dim), jnp.float32)
        self.w_post = (0.05 * jax.random.normal(
            k2, (9, self.feat_dim, self.embed_dim), jnp.float32)).astype(jnp.bfloat16)
        self.b_post = jnp.zeros((1, self.embed_dim), jnp.float32)

    def forward(self, lab_r, lab_t, quantized_r, negatives=None):
        R, C, p = self.R, self.C, self.patch
        B, Cc, H, W = lab_t.shape
        h, w = H // p, W // p
        HW = h * w
        nframes = R + 1

        # --- stack all frames (references + target) -> ONE backbone call ------
        x = jnp.stack(list(lab_r) + [lab_t], axis=1)           # (B, F, 3, H, W)
        x = jnp.transpose(x, (0, 1, 3, 4, 2))                  # NHWC
        x = x.reshape(B, nframes, h, p, w, p, Cc).transpose(0, 1, 2, 4, 3, 5, 6)
        x = x.reshape(B * nframes, HW, p * p * Cc)
        x = jnp.pad(x, ((0, 0), (0, 0), (0, self.kpad - p * p * Cc)))
        x = x.astype(jnp.bfloat16)

        feats = backbone(x, self.w_feat, self.b_feat, self.w_post, self.b_post,
                         h=h, w=w)                             # (B*F, HW, 64) bf16
        feats = feats.reshape(B, nframes, HW, self.embed_dim)
        fr = feats[:, :R].reshape(B, R * HW, self.embed_dim)   # frame-major concat
        ft = feats[:, R]                                       # (B, HW, 64)

        # quantized reference labels, lane-dense (B, C, R*HW), same frame order;
        # append an all-ones row (-> 8 sublanes) to fuse the softmax denominator.
        qr = jnp.concatenate([q.reshape(B, C, HW) for q in quantized_r], axis=-1)
        qr_aug = jnp.concatenate(
            [qr, jnp.ones((B, 1, R * HW), qr.dtype)], axis=1).astype(jnp.bfloat16)
        # within-frame spatial index of every reference column (for InfoNCE)
        col_within = jnp.tile(jnp.arange(HW, dtype=jnp.int32), R).reshape(1, R * HW)

        qt, loss_b = colorizer_attention(ft, fr, qr_aug, col_within)
        quantized_t = qt.reshape(B, C, h, w)                   # already NCHW

        if self.training:
            return quantized_t, jnp.mean(loss_b)
        return quantized_t


if __name__ == "__main__":
    key = jax.random.PRNGKey(0)
    model = NeworkPallas(training=True, key=jax.random.PRNGKey(42))

    B, H, W = 2, 32, 32
    R, C = model.R, model.C
    h, w = H // model.patch, W // model.patch

    keys = jax.random.split(key, 2 * R + 2)
    lab_r = [jax.random.normal(keys[i], (B, 3, H, W), jnp.float32) for i in range(R)]
    lab_t = jax.random.normal(keys[R], (B, 3, H, W), jnp.float32)
    quantized_r = [jax.random.normal(keys[R + 1 + i], (B, C, h, w), jnp.float32)
                   for i in range(R)]

    fwd = jax.jit(lambda lr, lt, qr: model.forward(lr, lt, qr, negatives=None))
    quantized_t, info_nce_loss = fwd(lab_r, lab_t, quantized_r)
    jax.block_until_ready((quantized_t, info_nce_loss))

    assert quantized_t.shape == (B, C, h, w)
    assert info_nce_loss.shape == ()
    print("KERNEL_OK")
</pallas_src>

<mosaic_0001>
module attributes {stable_mosaic.version = 11 : i64} {
  func.func @_backbone_kernel(%arg0: i32, %arg1: memref<1x64x128xbf16, #tpu.memory_space<vmem>>, %arg2: memref<128x256xbf16, #tpu.memory_space<vmem>>, %arg3: memref<1x256xf32, #tpu.memory_space<vmem>>, %arg4: memref<9x256x64xbf16, #tpu.memory_space<vmem>>, %arg5: memref<1x64xf32, #tpu.memory_space<vmem>>, %arg6: memref<1x64x64xbf16, #tpu.memory_space<vmem>>, %arg7: memref<10x10x256xf32, #tpu.memory_space<vmem>>) attributes {dimension_semantics = [#tpu.dimension_semantics<parallel>], iteration_bounds = array<i64: 14>, scalar_prefetch = 0 : i64, scratch_operands = 1 : i64, tpu.core_type = #tpu.core_type<tc>, window_params = [{transform_indices = @transform_0, window_bounds = array<i64: 1, 64, 128>}, {pipeline_mode = #tpu.pipeline_mode<synchronous>, transform_indices = @transform_1, window_bounds = array<i64: 128, 256>}, {pipeline_mode = #tpu.pipeline_mode<synchronous>, transform_indices = @transform_2, window_bounds = array<i64: 1, 256>}, {pipeline_mode = #tpu.pipeline_mode<synchronous>, transform_indices = @transform_3, window_bounds = array<i64: 9, 256, 64>}, {pipeline_mode = #tpu.pipeline_mode<synchronous>, transform_indices = @transform_4, window_bounds = array<i64: 1, 64>}, {transform_indices = @transform_5, window_bounds = array<i64: 1, 64, 64>}]} {
    %c0 = arith.constant 0 : index
    %c0_0 = arith.constant 0 : index
    %c0_1 = arith.constant 0 : index
    %0 = vector.load %arg1[%c0, %c0_0, %c0_1] : memref<1x64x128xbf16, #tpu.memory_space<vmem>>, vector<1x64x128xbf16>
    %1 = vector.shape_cast %0 : vector<1x64x128xbf16> to vector<64x128xbf16>
    %c0_2 = arith.constant 0 : index
    %c0_3 = arith.constant 0 : index
    %2 = vector.load %arg2[%c0_2, %c0_3] : memref<128x256xbf16, #tpu.memory_space<vmem>>, vector<128x256xbf16>
    %cst = arith.constant dense<0.000000e+00> : vector<64x256xf32>
    %3 = tpu.matmul %1, %2, %cst {dimension_numbers = #tpu.dot_dimension_numbers<[1], [0], [0], [1], [0, 0, 1, 1], [], []>} : vector<64x128xbf16>, vector<128x256xbf16>, vector<64x256xf32> -> vector<64x256xf32>
    %c0_4 = arith.constant 0 : index
    %c0_5 = arith.constant 0 : index
    %4 = vector.load %arg3[%c0_4, %c0_5] : memref<1x256xf32, #tpu.memory_space<vmem>>, vector<1x256xf32>
    %5 = vector.broadcast %4 : vector<1x256xf32> to vector<64x256xf32>
    %6 = arith.addf %3, %5 : vector<64x256xf32>
    %cst_6 = arith.constant 0.000000e+00 : f32
    %7 = vector.broadcast %cst_6 : f32 to vector<64x256xf32>
    %8 = arith.maximumf %6, %7 : vector<64x256xf32>
    %cst_7 = arith.constant 0.000000e+00 : f32
    %9 = vector.broadcast %cst_7 : f32 to vector<1x10x256xf32>
    %cst_8 = arith.constant 0.000000e+00 : f32
    %10 = vector.broadcast %cst_8 : f32 to vector<10x1x256xf32>
    %c0_9 = arith.constant 0 : index
    %c0_10 = arith.constant 0 : index
    %c0_11 = arith.constant 0 : index
    %11 = vector.load %arg7[%c0_9, %c0_10, %c0_11] : memref<10x10x256xf32, #tpu.memory_space<vmem>>, vector<1x10x256xf32>
    tpu.vector_store %arg7[%c0_9, %c0_10, %c0_11], %9 {strides = array<i32>} : memref<10x10x256xf32, #tpu.memory_space<vmem>>, vector<1x10x256xf32>,
    %c9 = arith.constant 9 : index
    %c0_12 = arith.constant 0 : index
    %c0_13 = arith.constant 0 : index
    %12 = vector.load %arg7[%c9, %c0_12, %c0_13] : memref<10x10x256xf32, #tpu.memory_space<vmem>>, vector<1x10x256xf32>
    tpu.vector_store %arg7[%c9, %c0_12, %c0_13], %9 {strides = array<i32>} : memref<10x10x256xf32, #tpu.memory_space<vmem>>, vector<1x10x256xf32>,
    %c0_14 = arith.constant 0 : index
    %c0_15 = arith.constant 0 : index
    %c0_16 = arith.constant 0 : index
    %13 = vector.load %arg7[%c0_14, %c0_15, %c0_16] : memref<10x10x256xf32, #tpu.memory_space<vmem>>, vector<10x1x256xf32>
    tpu.vector_store %arg7[%c0_14, %c0_15, %c0_16], %10 {strides = array<i32>} : memref<10x10x256xf32, #tpu.memory_space<vmem>>, vector<10x1x256xf32>,
    %c0_17 = arith.constant 0 : index
    %c9_18 = arith.constant 9 : index
    %c0_19 = arith.constant 0 : index
    %14 = vector.load %arg7[%c0_17, %c9_18, %c0_19] : memref<10x10x256xf32, #tpu.memory_space<vmem>>, vector<10x1x256xf32>
    tpu.vector_store %arg7[%c0_17, %c9_18, %c0_19], %10 {strides = array<i32>} : memref<10x10x256xf32, #tpu.memory_space<vmem>>, vector<10x1x256xf32>,
    %15 = vector.shape_cast %8 : vector<64x256xf32> to vector<8x8x256xf32>
    %c1 = arith.constant 1 : index
    %c1_20 = arith.constant 1 : index
    %c0_21 = arith.constant 0 : index
    %16 = vector.load %arg7[%c1, %c1_20, %c0_21] : memref<10x10x256xf32, #tpu.memory_space<vmem>>, vector<8x8x256xf32>
    tpu.vector_store %arg7[%c1, %c1_20, %c0_21], %15 {strides = array<i32>} : memref<10x10x256xf32, #tpu.memory_space<vmem>>, vector<8x8x256xf32>,
    %cst_22 = arith.constant 0.000000e+00 : f32
    %17 = vector.broadcast %cst_22 : f32 to vector<64x64xf32>
    %c0_23 = arith.constant 0 : index
    %c0_24 = arith.constant 0 : index
    %c0_25 = arith.constant 0 : index
    %18 = vector.load %arg7[%c0_23, %c0_24, %c0_25] : memref<10x10x256xf32, #tpu.memory_space<vmem>>, vector<8x8x256xf32>
    %19 = vector.shape_cast %18 : vector<8x8x256xf32> to vector<64x256xf32>
    %20 = arith.truncf %19 : vector<64x256xf32> to vector<64x256xbf16>
    %c0_26 = arith.constant 0 : index
    %c0_27 = arith.constant 0 : index
    %c0_28 = arith.constant 0 : index
    %21 = vector.load %arg4[%c0_26, %c0_27, %c0_28] : memref<9x256x64xbf16, #tpu.memory_space<vmem>>, vector<1x256x64xbf16>
    %22 = vector.shape_cast %21 : vector<1x256x64xbf16> to vector<256x64xbf16>
    %cst_29 = arith.constant dense<0.000000e+00> : vector<64x64xf32>
    %23 = tpu.matmul %20, %22, %cst_29 {dimension_numbers = #tpu.dot_dimension_numbers<[1], [0], [0], [1], [0, 0, 1, 1], [], []>} : vector<64x256xbf16>, vector<256x64xbf16>, vector<64x64xf32> -> vector<64x64xf32>
    %24 = arith.addf %17, %23 : vector<64x64xf32>
    %c0_30 = arith.constant 0 : index
    %c1_31 = arith.constant 1 : index
    %c0_32 = arith.constant 0 : index
    %25 = vector.load %arg7[%c0_30, %c1_31, %c0_32] : memref<10x10x256xf32, #tpu.memory_space<vmem>>, vector<8x8x256xf32>
    %26 = vector.shape_cast %25 : vector<8x8x256xf32> to vector<64x256xf32>
    %27 = arith.truncf %26 : vector<64x256xf32> to vector<64x256xbf16>
    %c1_33 = arith.constant 1 : index
    %c0_34 = arith.constant 0 : index
    %c0_35 = arith.constant 0 : index
    %28 = vector.load %arg4[%c1_33, %c0_34, %c0_35] : memref<9x256x64xbf16, #tpu.memory_space<vmem>>, vector<1x256x64xbf16>
    %29 = vector.shape_cast %28 : vector<1x256x64xbf16> to vector<256x64xbf16>
    %cst_36 = arith.constant dense<0.000000e+00> : vector<64x64xf32>
    %30 = tpu.matmul %27, %29, %cst_36 {dimension_numbers = #tpu.dot_dimension_numbers<[1], [0], [0], [1], [0, 0, 1, 1], [], []>} : vector<64x256xbf16>, vector<256x64xbf16>, vector<64x64xf32> -> vector<64x64xf32>
    %31 = arith.addf %24, %30 : vector<64x64xf32>
    %c0_37 = arith.constant 0 : index
    %c2 = arith.constant 2 : index
    %c0_38 = arith.constant 0 : index
    %32 = vector.load %arg7[%c0_37, %c2, %c0_38] : memref<10x10x256xf32, #tpu.memory_space<vmem>>, vector<8x8x256xf32>
    %33 = vector.shape_cast %32 : vector<8x8x256xf32> to vector<64x256xf32>
    %34 = arith.truncf %33 : vector<64x256xf32> to vector<64x256xbf16>
    %c2_39 = arith.constant 2 : index
    %c0_40 = arith.constant 0 : index
    %c0_41 = arith.constant 0 : index
    %35 = vector.load %arg4[%c2_39, %c0_40, %c0_41] : memref<9x256x64xbf16, #tpu.memory_space<vmem>>, vector<1x256x64xbf16>
    %36 = vector.shape_cast %35 : vector<1x256x64xbf16> to vector<256x64xbf16>
    %cst_42 = arith.constant dense<0.000000e+00> : vector<64x64xf32>
    %37 = tpu.matmul %34, %36, %cst_42 {dimension_numbers = #tpu.dot_dimension_numbers<[1], [0], [0], [1], [0, 0, 1, 1], [], []>} : vector<64x256xbf16>, vector<256x64xbf16>, vector<64x64xf32> -> vector<64x64xf32>
    %38 = arith.addf %31, %37 : vector<64x64xf32>
    %c1_43 = arith.constant 1 : index
    %c0_44 = arith.constant 0 : index
    %c0_45 = arith.constant 0 : index
    %39 = vector.load %arg7[%c1_43, %c0_44, %c0_45] : memref<10x10x256xf32, #tpu.memory_space<vmem>>, vector<8x8x256xf32>
    %40 = vector.shape_cast %39 : vector<8x8x256xf32> to vector<64x256xf32>
    %41 = arith.truncf %40 : vector<64x256xf32> to vector<64x256xbf16>
    %c3 = arith.constant 3 : index
    %c0_46 = arith.constant 0 : index
    %c0_47 = arith.constant 0 : index
    %42 = vector.load %arg4[%c3, %c0_46, %c0_47] : memref<9x256x64xbf16, #tpu.memory_space<vmem>>, vector<1x256x64xbf16>
    %43 = vector.shape_cast %42 : vector<1x256x64xbf16> to vector<256x64xbf16>
    %cst_48 = arith.constant dense<0.000000e+00> : vector<64x64xf32>
    %44 = tpu.matmul %41, %43, %cst_48 {dimension_numbers = #tpu.dot_dimension_numbers<[1], [0], [0], [1], [0, 0, 1, 1], [], []>} : vector<64x256xbf16>, vector<256x64xbf16>, vector<64x64xf32> -> vector<64x64xf32>
    %45 = arith.addf %38, %44 : vector<64x64xf32>
    %c1_49 = arith.constant 1 : index
    %c1_50 = arith.constant 1 : index
    %c0_51 = arith.constant 0 : index
    %46 = vector.load %arg7[%c1_49, %c1_50, %c0_51] : memref<10x10x256xf32, #tpu.memory_space<vmem>>, vector<8x8x256xf32>
    %47 = vector.shape_cast %46 : vector<8x8x256xf32> to vector<64x256xf32>
    %48 = arith.truncf %47 : vector<64x256xf32> to vector<64x256xbf16>
    %c4 = arith.constant 4 : index
    %c0_52 = arith.constant 0 : index
    %c0_53 = arith.constant 0 : index
    %49 = vector.load %arg4[%c4, %c0_52, %c0_53] : memref<9x256x64xbf16, #tpu.memory_space<vmem>>, vector<1x256x64xbf16>
    %50 = vector.shape_cast %49 : vector<1x256x64xbf16> to vector<256x64xbf16>
    %cst_54 = arith.constant dense<0.000000e+00> : vector<64x64xf32>
    %51 = tpu.matmul %48, %50, %cst_54 {dimension_numbers = #tpu.dot_dimension_numbers<[1], [0], [0], [1], [0, 0, 1, 1], [], []>} : vector<64x256xbf16>, vector<256x64xbf16>, vector<64x64xf32> -> vector<64x64xf32>
    %52 = arith.addf %45, %51 : vector<64x64xf32>
    %c1_55 = arith.constant 1 : index
    %c2_56 = arith.constant 2 : index
    %c0_57 = arith.constant 0 : index
    %53 = vector.load %arg7[%c1_55, %c2_56, %c0_57] : memref<10x10x256xf32, #tpu.memory_space<vmem>>, vector<8x8x256xf32>
    %54 = vector.shape_cast %53 : vector<8x8x256xf32> to vector<64x256xf32>
    %55 = arith.truncf %54 : vector<64x256xf32> to vector<64x256xbf16>
    %c5 = arith.constant 5 : index
    %c0_58 = arith.constant 0 : index
    %c0_59 = arith.constant 0 : index
    %56 = vector.load %arg4[%c5, %c0_58, %c0_59] : memref<9x256x64xbf16, #tpu.memory_space<vmem>>, vector<1x256x64xbf16>
    %57 = vector.shape_cast %56 : vector<1x256x64xbf16> to vector<256x64xbf16>
    %cst_60 = arith.constant dense<0.000000e+00> : vector<64x64xf32>
    %58 = tpu.matmul %55, %57, %cst_60 {dimension_numbers = #tpu.dot_dimension_numbers<[1], [0], [0], [1], [0, 0, 1, 1], [], []>} : vector<64x256xbf16>, vector<256x64xbf16>, vector<64x64xf32> -> vector<64x64xf32>
    %59 = arith.addf %52, %58 : vector<64x64xf32>
    %c2_61 = arith.constant 2 : index
    %c0_62 = arith.constant 0 : index
    %c0_63 = arith.constant 0 : index
    %60 = vector.load %arg7[%c2_61, %c0_62, %c0_63] : memref<10x10x256xf32, #tpu.memory_space<vmem>>, vector<8x8x256xf32>
    %61 = vector.shape_cast %60 : vector<8x8x256xf32> to vector<64x256xf32>
    %62 = arith.truncf %61 : vector<64x256xf32> to vector<64x256xbf16>
    %c6 = arith.constant 6 : index
    %c0_64 = arith.constant 0 : index
    %c0_65 = arith.constant 0 : index
    %63 = vector.load %arg4[%c6, %c0_64, %c0_65] : memref<9x256x64xbf16, #tpu.memory_space<vmem>>, vector<1x256x64xbf16>
    %64 = vector.shape_cast %63 : vector<1x256x64xbf16> to vector<256x64xbf16>
    %cst_66 = arith.constant dense<0.000000e+00> : vector<64x64xf32>
    %65 = tpu.matmul %62, %64, %cst_66 {dimension_numbers = #tpu.dot_dimension_numbers<[1], [0], [0], [1], [0, 0, 1, 1], [], []>} : vector<64x256xbf16>, vector<256x64xbf16>, vector<64x64xf32> -> vector<64x64xf32>
    %66 = arith.addf %59, %65 : vector<64x64xf32>
    %c2_67 = arith.constant 2 : index
    %c1_68 = arith.constant 1 : index
    %c0_69 = arith.constant 0 : index
    %67 = vector.load %arg7[%c2_67, %c1_68, %c0_69] : memref<10x10x256xf32, #tpu.memory_space<vmem>>, vector<8x8x256xf32>
    %68 = vector.shape_cast %67 : vector<8x8x256xf32> to vector<64x256xf32>
    %69 = arith.truncf %68 : vector<64x256xf32> to vector<64x256xbf16>
    %c7 = arith.constant 7 : index
    %c0_70 = arith.constant 0 : index
    %c0_71 = arith.constant 0 : index
    %70 = vector.load %arg4[%c7, %c0_70, %c0_71] : memref<9x256x64xbf16, #tpu.memory_space<vmem>>, vector<1x256x64xbf16>
    %71 = vector.shape_cast %70 : vector<1x256x64xbf16> to vector<256x64xbf16>
    %cst_72 = arith.constant dense<0.000000e+00> : vector<64x64xf32>
    %72 = tpu.matmul %69, %71, %cst_72 {dimension_numbers = #tpu.dot_dimension_numbers<[1], [0], [0], [1], [0, 0, 1, 1], [], []>} : vector<64x256xbf16>, vector<256x64xbf16>, vector<64x64xf32> -> vector<64x64xf32>
    %73 = arith.addf %66, %72 : vector<64x64xf32>
    %c2_73 = arith.constant 2 : index
    %c2_74 = arith.constant 2 : index
    %c0_75 = arith.constant 0 : index
    %74 = vector.load %arg7[%c2_73, %c2_74, %c0_75] : memref<10x10x256xf32, #tpu.memory_space<vmem>>, vector<8x8x256xf32>
    %75 = vector.shape_cast %74 : vector<8x8x256xf32> to vector<64x256xf32>
    %76 = arith.truncf %75 : vector<64x256xf32> to vector<64x256xbf16>
    %c8 = arith.constant 8 : index
    %c0_76 = arith.constant 0 : index
    %c0_77 = arith.constant 0 : index
    %77 = vector.load %arg4[%c8, %c0_76, %c0_77] : memref<9x256x64xbf16, #tpu.memory_space<vmem>>, vector<1x256x64xbf16>
    %78 = vector.shape_cast %77 : vector<1x256x64xbf16> to vector<256x64xbf16>
    %cst_78 = arith.constant dense<0.000000e+00> : vector<64x64xf32>
    %79 = tpu.matmul %76, %78, %cst_78 {dimension_numbers = #tpu.dot_dimension_numbers<[1], [0], [0], [1], [0, 0, 1, 1], [], []>} : vector<64x256xbf16>, vector<256x64xbf16>, vector<64x64xf32> -> vector<64x64xf32>
    %80 = arith.addf %73, %79 : vector<64x64xf32>
    %c0_79 = arith.constant 0 : index
    %c0_80 = arith.constant 0 : index
    %81 = vector.load %arg5[%c0_79, %c0_80] : memref<1x64xf32, #tpu.memory_space<vmem>>, vector<1x64xf32>
    %82 = vector.broadcast %81 : vector<1x64xf32> to vector<64x64xf32>
    %83 = arith.addf %80, %82 : vector<64x64xf32>
    %84 = arith.truncf %83 : vector<64x64xf32> to vector<64x64xbf16>
    %c0_81 = arith.constant 0 : index
    %c0_82 = arith.constant 0 : index
    %c0_83 = arith.constant 0 : index
    %85 = vector.load %arg6[%c0_81, %c0_82, %c0_83] : memref<1x64x64xbf16, #tpu.memory_space<vmem>>, vector<1x64x64xbf16>
    %86 = vector.shape_cast %85 : vector<1x64x64xbf16> to vector<64x64xbf16>
    %87 = vector.shape_cast %84 : vector<64x64xbf16> to vector<1x64x64xbf16>
    tpu.vector_store %arg6[%c0_81, %c0_82, %c0_83], %87 {strides = array<i32>} : memref<1x64x64xbf16, #tpu.memory_space<vmem>>, vector<1x64x64xbf16>,
    return
  }
  func.func @transform_0(%arg0: i32) -> (i32, i32, i32) {
    %c0_i32 = arith.constant 0 : i32
    %c0_i32_0 = arith.constant 0 : i32
    %c0_i32_1 = arith.constant 0 : i32
    return %arg0, %c0_i32, %c0_i32_0 : i32, i32, i32
  }
  func.func @transform_1(%arg0: i32) -> (i32, i32) {
    %c0_i32 = arith.constant 0 : i32
    %c0_i32_0 = arith.constant 0 : i32
    %c0_i32_1 = arith.constant 0 : i32
    return %c0_i32, %c0_i32_0 : i32, i32
  }
  func.func @transform_2(%arg0: i32) -> (i32, i32) {
    %c0_i32 = arith.constant 0 : i32
    %c0_i32_0 = arith.constant 0 : i32
    %c0_i32_1 = arith.constant 0 : i32
    return %c0_i32, %c0_i32_0 : i32, i32
  }
  func.func @transform_3(%arg0: i32) -> (i32, i32, i32) {
    %c0_i32 = arith.constant 0 : i32
    %c0_i32_0 = arith.constant 0 : i32
    %c0_i32_1 = arith.constant 0 : i32
    %c0_i32_2 = arith.constant 0 : i32
    return %c0_i32, %c0_i32_0, %c0_i32_1 : i32, i32, i32
  }
  func.func @transform_4(%arg0: i32) -> (i32, i32) {
    %c0_i32 = arith.constant 0 : i32
    %c0_i32_0 = arith.constant 0 : i32
    %c0_i32_1 = arith.constant 0 : i32
    return %c0_i32, %c0_i32_0 : i32, i32
  }
  func.func @transform_5(%arg0: i32) -> (i32, i32, i32) {
    %c0_i32 = arith.constant 0 : i32
    %c0_i32_0 = arith.constant 0 : i32
    %c0_i32_1 = arith.constant 0 : i32
    return %arg0, %c0_i32, %c0_i32_0 : i32, i32, i32
  }
}

module attributes {stable_mosaic.version = 11 : i64} {
  func.func @_colorizer_kernel(%arg0: i32, %arg1: memref<1x384xi32, #tpu.memory_space<vmem>>, %arg2: memref<1x64x64xbf16, #tpu.memory_space<vmem>>, %arg3: memref<1x384x64xbf16, #tpu.memory_space<vmem>>, %arg4: memref<1x8x384xbf16, #tpu.memory_space<vmem>>, %arg5: memref<1x7x64xf32, #tpu.memory_space<vmem>>, %arg6: memref<1x1x1xf32, #tpu.memory_space<vmem>>) attributes {dimension_semantics = [#tpu.dimension_semantics<parallel>], iteration_bounds = array<i64: 2>, scalar_prefetch = 0 : i64, scratch_operands = 0 : i64, tpu.core_type = #tpu.core_type<tc>, window_params = [{pipeline_mode = #tpu.pipeline_mode<synchronous>, transform_indices = @transform_0, window_bounds = array<i64: 1, 384>}, {transform_indices = @transform_1, window_bounds = array<i64: 1, 64, 64>}, {transform_indices = @transform_2, window_bounds = array<i64: 1, 384, 64>}, {transform_indices = @transform_3, window_bounds = array<i64: 1, 8, 384>}, {transform_indices = @transform_4, window_bounds = array<i64: 1, 7, 64>}, {transform_indices = @transform_5, window_bounds = array<i64: 1, 1, 1>}]} {
    %c0 = arith.constant 0 : index
    %c0_0 = arith.constant 0 : index
    %c0_1 = arith.constant 0 : index
    %0 = vector.load %arg2[%c0, %c0_0, %c0_1] : memref<1x64x64xbf16, #tpu.memory_space<vmem>>, vector<1x64x64xbf16>
    %1 = vector.shape_cast %0 : vector<1x64x64xbf16> to vector<64x64xbf16>
    %2 = arith.extf %1 : vector<64x64xbf16> to vector<64x64xf32>
    %cst = arith.constant 1.250000e-01 : f32
    %3 = vector.broadcast %cst : f32 to vector<64x64xf32>
    %4 = arith.mulf %2, %3 : vector<64x64xf32>
    %5 = arith.truncf %4 : vector<64x64xf32> to vector<64x64xbf16>
    %c0_2 = arith.constant 0 : index
    %c0_3 = arith.constant 0 : index
    %c0_4 = arith.constant 0 : index
    %6 = vector.load %arg3[%c0_2, %c0_3, %c0_4] : memref<1x384x64xbf16, #tpu.memory_space<vmem>>, vector<1x384x64xbf16>
    %7 = vector.shape_cast %6 : vector<1x384x64xbf16> to vector<384x64xbf16>
    %cst_5 = arith.constant dense<0.000000e+00> : vector<64x384xf32>
    %8 = tpu.matmul %5, %7, %cst_5 {dimension_numbers = #tpu.dot_dimension_numbers<[1], [1], [0], [0], [0, 0, 1, 0], [], []>} : vector<64x64xbf16>, vector<384x64xbf16>, vector<64x384xf32> -> vector<64x384xf32>
    %cst_6 = arith.constant dense<0xFF800000> : vector<64xf32>
    %9 = vector.multi_reduction <maximumf>, %8, %cst_6 [1] : vector<64x384xf32> to vector<64xf32>
    %10 = vector.shape_cast %9 : vector<64xf32> to vector<64x1xf32>
    %11 = vector.broadcast %10 : vector<64x1xf32> to vector<64x384xf32>
    %12 = arith.subf %8, %11 : vector<64x384xf32>
    %13 = math.exp %12 : vector<64x384xf32>
    %14 = arith.truncf %13 : vector<64x384xf32> to vector<64x384xbf16>
    %c0_7 = arith.constant 0 : index
    %c0_8 = arith.constant 0 : index
    %c0_9 = arith.constant 0 : index
    %15 = vector.load %arg4[%c0_7, %c0_8, %c0_9] : memref<1x8x384xbf16, #tpu.memory_space<vmem>>, vector<1x8x384xbf16>
    %16 = vector.shape_cast %15 : vector<1x8x384xbf16> to vector<8x384xbf16>
    %cst_10 = arith.constant dense<0.000000e+00> : vector<8x64xf32>
    %17 = tpu.matmul %16, %14, %cst_10 {dimension_numbers = #tpu.dot_dimension_numbers<[1], [1], [0], [0], [0, 0, 1, 0], [], []>} : vector<8x384xbf16>, vector<64x384xbf16>, vector<8x64xf32> -> vector<8x64xf32>
    %18 = vector.extract_strided_slice %17 {offsets = [7, 0], sizes = [1, 64], strides = [1, 1]} : vector<8x64xf32> to vector<1x64xf32>
    %19 = tpu.reciprocal %18 {approx = true} : vector<1x64xf32> -> vector<1x64xf32>
    %20 = vector.extract_strided_slice %17 {offsets = [0, 0], sizes = [7, 64], strides = [1, 1]} : vector<8x64xf32> to vector<7x64xf32>
    %21 = vector.broadcast %19 : vector<1x64xf32> to vector<7x64xf32>
    %22 = arith.mulf %20, %21 : vector<7x64xf32>
    %c0_11 = arith.constant 0 : index
    %c0_12 = arith.constant 0 : index
    %c0_13 = arith.constant 0 : index
    %23 = vector.load %arg5[%c0_11, %c0_12, %c0_13] : memref<1x7x64xf32, #tpu.memory_space<vmem>>, vector<1x7x64xf32>
    %24 = vector.shape_cast %23 : vector<1x7x64xf32> to vector<7x64xf32>
    %25 = vector.shape_cast %22 : vector<7x64xf32> to vector<1x7x64xf32>
    tpu.vector_store %arg5[%c0_11, %c0_12, %c0_13], %25 {strides = array<i32>} : memref<1x7x64xf32, #tpu.memory_space<vmem>>, vector<1x7x64xf32>,
    %26 = tpu.iota {dimensions = array<i32: 0>} : vector<64x384xi32>
    %c0_14 = arith.constant 0 : index
    %c0_15 = arith.constant 0 : index
    %27 = vector.load %arg1[%c0_14, %c0_15] : memref<1x384xi32, #tpu.memory_space<vmem>>, vector<1x384xi32>
    %28 = vector.broadcast %27 : vector<1x384xi32> to vector<64x384xi32>
    %29 = arith.cmpi eq, %28, %26 : vector<64x384xi32>
    %cst_16 = arith.constant 0.000000e+00 : f32
    %30 = vector.broadcast %cst_16 : f32 to vector<64x384xf32>
    %31 = arith.select %29, %13, %30 : vector<64x384xi1>, vector<64x384xf32>
    %cst_17 = arith.constant dense<0.000000e+00> : vector<64xf32>
    %32 = vector.multi_reduction <add>, %31, %cst_17 [1] : vector<64x384xf32> to vector<64xf32>
    %33 = vector.shape_cast %32 : vector<64xf32> to vector<64x1xf32>
    %34 = math.log %18 : vector<1x64xf32>
    %35 = vector.shape_cast %34 : vector<1x64xf32> to vector<1x1x64xf32>
    %cst_18 = arith.constant dense<0.000000e+00> : vector<1xf32>
    %36 = vector.multi_reduction <add>, %35, %cst_18 [1, 2] : vector<1x1x64xf32> to vector<1xf32>
    %37 = vector.shape_cast %36 : vector<1xf32> to vector<1x1x1xf32>
    %38 = vector.extract %37[0, 0, 0] : f32 from vector<1x1x1xf32>
    %cst_19 = arith.constant 6.400000e+01 : f32
    %39 = arith.divf %38, %cst_19 : f32
    %40 = math.log %33 : vector<64x1xf32>
    %41 = vector.shape_cast %40 : vector<64x1xf32> to vector<1x64x1xf32>
    %cst_20 = arith.constant dense<0.000000e+00> : vector<1xf32>
    %42 = vector.multi_reduction <add>, %41, %cst_20 [1, 2] : vector<1x64x1xf32> to vector<1xf32>
    %43 = vector.shape_cast %42 : vector<1xf32> to vector<1x1x1xf32>
    %44 = vector.extract %43[0, 0, 0] : f32 from vector<1x1x1xf32>
    %cst_21 = arith.constant 6.400000e+01 : f32
    %45 = arith.divf %44, %cst_21 : f32
    %46 = arith.subf %39, %45 : f32
    %47 = vector.broadcast %46 : f32 to vector<1x1x1xf32>
    %c0_22 = arith.constant 0 : index
    %c0_23 = arith.constant 0 : index
    %c0_24 = arith.constant 0 : index
    %48 = vector.load %arg6[%c0_22, %c0_23, %c0_24] : memref<1x1x1xf32, #tpu.memory_space<vmem>>, vector<1x1x1xf32>
    tpu.vector_store %arg6[%c0_22, %c0_23, %c0_24], %47 {strides = array<i32>} : memref<1x1x1xf32, #tpu.memory_space<vmem>>, vector<1x1x1xf32>,
    return
  }
  func.func @transform_0(%arg0: i32) -> (i32, i32) {
    %c0_i32 = arith.constant 0 : i32
    %c0_i32_0 = arith.constant 0 : i32
    %c0_i32_1 = arith.constant 0 : i32
    return %c0_i32, %c0_i32_0 : i32, i32
  }
  func.func @transform_1(%arg0: i32) -> (i32, i32, i32) {
    %c0_i32 = arith.constant 0 : i32
    %c0_i32_0 = arith.constant 0 : i32
    %c0_i32_1 = arith.constant 0 : i32
    return %arg0, %c0_i32, %c0_i32_0 : i32, i32, i32
  }
  func.func @transform_2(%arg0: i32) -> (i32, i32, i32) {
    %c0_i32 = arith.constant 0 : i32
    %c0_i32_0 = arith.constant 0 : i32
    %c0_i32_1 = arith.constant 0 : i32
    return %arg0, %c0_i32, %c0_i32_0 : i32, i32, i32
  }
  func.func @transform_3(%arg0: i32) -> (i32, i32, i32) {
    %c0_i32 = arith.constant 0 : i32
    %c0_i32_0 = arith.constant 0 : i32
    %c0_i32_1 = arith.constant 0 : i32
    return %arg0, %c0_i32, %c0_i32_0 : i32, i32, i32
  }
  func.func @transform_4(%arg0: i32) -> (i32, i32, i32) {
    %c0_i32 = arith.constant 0 : i32
    %c0_i32_0 = arith.constant 0 : i32
    %c0_i32_1 = arith.constant 0 : i32
    return %arg0, %c0_i32, %c0_i32_0 : i32, i32, i32
  }
  func.func @transform_5(%arg0: i32) -> (i32, i32, i32) {
    %c0_i32 = arith.constant 0 : i32
    %c0_i32_0 = arith.constant 0 : i32
    %c0_i32_1 = arith.constant 0 : i32
    return %arg0, %c0_i32, %c0_i32_0 : i32, i32, i32
  }
}

</mosaic_0001>

<llo_original>
// kernel: _lambda_.2
$region0: #{_lambda_.2}
  #allocation0 [shape = 'u32[]', space=smem, size = 0x4, offset = 0x4, fixed_abs, tag = 'smem constant byte address 0x4 - core index']
  #allocation1 [shape = 'u32[144,128]{1,0:T(1,128)}', space=vmem, size = 0x12000, scoped, tag = 'internal scratch']
  #allocation2 [shape = 'f32[10,10,256]{2,1,0:T(8,128)}', space=vmem, size = 0x28000, scoped, tag = 'scratch operand']
  %s0 = inlined_call_operand.vmem [shape: bf16[14,64,128], index: 0, kind: input, shape index: {}]
  %s1 = inlined_call_operand.vmem [shape: bf16[128,256], index: 1, kind: input, shape index: {}]
  %s2 = inlined_call_operand.vmem [shape: f32[1,256], index: 2, kind: input, shape index: {}]
  %s3 = inlined_call_operand.vmem [shape: bf16[9,256,64], index: 3, kind: input, shape index: {}]
  %s4 = inlined_call_operand.vmem [shape: f32[1,64], index: 4, kind: input, shape index: {}]
  %s5 = inlined_call_operand.vmem [shape: bf16[14,64,64], index: 5, kind: output, shape index: {}]
  %s6 = sld [smem:[#allocation0]]
  $region53: #{_lambda_.2} parent=0
    _
  %s8 = ssub.s32 1, %s6
  %s9 = scalar_select 0, %s8, %s6
  loop: start=0, step=1, limit=16
  $region2: #{_lambda_.2} parent=0 // loop_pre_header
    _
  $region3: #{_lambda_.2} parent=0 // loop_header
    %s11 = sphi 0, %s15
    %p12 = scmp.ge.s32.totalorder %s11, 16
    %s21 = sphi 0, %s23
    %s24 = sphi 0, %s21
    %s25 = sphi 0, %s24
    %s41 = sphi 0, %s25
    %s45 = sphi 0, %s45
    %s47 = sphi 0, %s45
    %s48 = sphi 0, %s47
    %s62 = sphi 0, %s48
    %s66 = sphi 0, %s66
    %s68 = sphi 0, %s66
    %s69 = sphi 0, %s68
    %s83 = sphi 0, %s69
    %s87 = sphi 0, %s87
    %s89 = sphi 0, %s87
    %s90 = sphi 0, %s89
    %s104 = sphi 0, %s90
    %s108 = sphi 0, %s108
    %s110 = sphi 0, %s108
    %s111 = sphi 0, %s110
    %s125 = sphi 0, %s111
    %s131 = sphi 0, %s133
    %s134 = sphi 0, %s131
    %s135 = sphi 0, %s134
    %s151 = sphi 0, %s135
  $region4: #{_lambda_.2} parent=0 // loop_header_branch
    %14 = sbr.rel (%p12) target = $region8
  $region5: #{_lambda_.2} parent=0 // loop_body
    %s16 = ssub.s32 %s11, 1
    %s17 = ssub.s32 %s11, 2
    %s18 = sadd.s32 %s11, 1
    %s19 = ssub.s32 %s11, %s18
    %p20 = scmp.eq.s32.totalorder %s19, 0
    %s22 = sadd.s32 %s21, 1
    %s23 = scalar_select %p20, %s21, %s22
    %p26 = pneg %p20
    %p27 = scmp.eq.s32.totalorder %s11, 13
    %p28 = por %p26, %p27
    %p29 = scmp.ne.s32.totalorder %s21, %s24
    %p30 = scmp.eq.s32.totalorder %s11, 0
    %p31 = por %p29, %p30
    %p32 = scmp.ne.s32.totalorder %s21, %s24
    %p33 = scmp.eq.s32.totalorder %s16, 13
    %p34 = por %p32, %p33
    %p35 = scmp.ne.s32.totalorder %s24, %s25
    %p36 = scmp.eq.s32.totalorder %s16, 0
    %p37 = por %p35, %p36
    %p38 = scmp.ne.s32.totalorder %s24, %s25
    %p39 = scmp.eq.s32.totalorder %s17, 13
    %p40 = por %p38, %p39
    %p42 = scmp.ne.s32.totalorder %s25, %s41
    %p43 = scmp.eq.s32.totalorder %s17, 0
    %p44 = por %p42, %p43
    %s46 = sadd.s32 %s45, 1
    %p49 = scmp.eq.s32.totalorder %s11, 13
    %p50 = scmp.ne.s32.totalorder %s45, %s47
    %p51 = scmp.eq.s32.totalorder %s11, 0
    %p52 = por %p50, %p51
    %p53 = scmp.ne.s32.totalorder %s45, %s47
    %p54 = scmp.eq.s32.totalorder %s16, 13
    %p55 = por %p53, %p54
    %p56 = scmp.ne.s32.totalorder %s47, %s48
    %p57 = scmp.eq.s32.totalorder %s16, 0
    %p58 = por %p56, %p57
    %p59 = scmp.ne.s32.totalorder %s47, %s48
    %p60 = scmp.eq.s32.totalorder %s17, 13
    %p61 = por %p59, %p60
    %p63 = scmp.ne.s32.totalorder %s48, %s62
    %p64 = scmp.eq.s32.totalorder %s17, 0
    %p65 = por %p63, %p64
    %s67 = sadd.s32 %s66, 1
    %p70 = scmp.eq.s32.totalorder %s11, 13
    %p71 = scmp.ne.s32.totalorder %s66, %s68
    %p72 = scmp.eq.s32.totalorder %s11, 0
    %p73 = por %p71, %p72
    %p74 = scmp.ne.s32.totalorder %s66, %s68
    %p75 = scmp.eq.s32.totalorder %s16, 13
    %p76 = por %p74, %p75
    %p77 = scmp.ne.s32.totalorder %s68, %s69
    %p78 = scmp.eq.s32.totalorder %s16, 0
    %p79 = por %p77, %p78
    %p80 = scmp.ne.s32.totalorder %s68, %s69
    %p81 = scmp.eq.s32.totalorder %s17, 13
    %p82 = por %p80, %p81
    %p84 = scmp.ne.s32.totalorder %s69, %s83
    %p85 = scmp.eq.s32.totalorder %s17, 0
    %p86 = por %p84, %p85
    %s88 = sadd.s32 %s87, 1
    %p91 = scmp.eq.s32.totalorder %s11, 13
    %p92 = scmp.ne.s32.totalorder %s87, %s89
    %p93 = scmp.eq.s32.totalorder %s11, 0
    %p94 = por %p92, %p93
    %p95 = scmp.ne.s32.totalorder %s87, %s89
    %p96 = scmp.eq.s32.totalorder %s16, 13
    %p97 = por %p95, %p96
    %p98 = scmp.ne.s32.totalorder %s89, %s90
    %p99 = scmp.eq.s32.totalorder %s16, 0
    %p100 = por %p98, %p99
    %p101 = scmp.ne.s32.totalorder %s89, %s90
    %p102 = scmp.eq.s32.totalorder %s17, 13
    %p103 = por %p101, %p102
    %p105 = scmp.ne.s32.totalorder %s90, %s104
    %p106 = scmp.eq.s32.totalorder %s17, 0
    %p107 = por %p105, %p106
    %s109 = sadd.s32 %s108, 1
    %p112 = scmp.eq.s32.totalorder %s11, 13
    %p113 = scmp.ne.s32.totalorder %s108, %s110
    %p114 = scmp.eq.s32.totalorder %s11, 0
    %p115 = por %p113, %p114
    %p116 = scmp.ne.s32.totalorder %s108, %s110
    %p117 = scmp.eq.s32.totalorder %s16, 13
    %p118 = por %p116, %p117
    %p119 = scmp.ne.s32.totalorder %s110, %s111
    %p120 = scmp.eq.s32.totalorder %s16, 0
    %p121 = por %p119, %p120
    %p122 = scmp.ne.s32.totalorder %s110, %s111
    %p123 = scmp.eq.s32.totalorder %s17, 13
    %p124 = por %p122, %p123
    %p126 = scmp.ne.s32.totalorder %s111, %s125
    %p127 = scmp.eq.s32.totalorder %s17, 0
    %p128 = por %p126, %p127
    %s129 = ssub.s32 %s11, %s18
    %p130 = scmp.eq.s32.totalorder %s129, 0
    %s132 = sadd.s32 %s131, 1
    %s133 = scalar_select %p130, %s131, %s132
    %p136 = pneg %p130
    %p137 = scmp.eq.s32.totalorder %s11, 13
    %p138 = por %p136, %p137
    %p139 = scmp.ne.s32.totalorder %s131, %s134
    %p140 = scmp.eq.s32.totalorder %s11, 0
    %p141 = por %p139, %p140
    %p142 = scmp.ne.s32.totalorder %s131, %s134
    %p143 = scmp.eq.s32.totalorder %s16, 13
    %p144 = por %p142, %p143
    %p145 = scmp.ne.s32.totalorder %s134, %s135
    %p146 = scmp.eq.s32.totalorder %s16, 0
    %p147 = por %p145, %p146
    %p148 = scmp.ne.s32.totalorder %s134, %s135
    %p149 = scmp.eq.s32.totalorder %s17, 13
    %p150 = por %p148, %p149
    %p152 = scmp.ne.s32.totalorder %s135, %s151
    %p153 = scmp.eq.s32.totalorder %s17, 0
    %p154 = por %p152, %p153
    %p155 = scmp.le.s32.totalorder 1, %s11
    %p156 = scmp.lt.s32.totalorder %s11, 15
    %p157 = pnand %p155, %p156
    %p158 = pneg %p157
    // Predicated region
    $region9: #{_lambda_.2} parent=5 // pred_check
      _
    $region10: #{_lambda_.2} parent=5 // pred_check_branch
      %160 = sbr.rel (%p157) target = $region12
    $region11: #{_lambda_.2} parent=5 // pred_region
      %s161 = ssub.s32 %s11, 1
      // Predicated region
      $region13: #{_lambda_.2} parent=11 // pred_check
        %p162 = pneg %p58
      $region14: #{_lambda_.2} parent=11 // pred_check_branch
        %164 = sbr.rel (%p162) target = $region16
      $region15: #{_lambda_.2} parent=11 // pred_region
        _
      $region16: #{_lambda_.2} parent=11 // pred_fallthru
        _
      // Predicated region
      $region17: #{_lambda_.2} parent=11 // pred_check
        %p165 = pneg %p79
      $region18: #{_lambda_.2} parent=11 // pred_check_branch
        %167 = sbr.rel (%p165) target = $region20
      $region19: #{_lambda_.2} parent=11 // pred_region
        _
      $region20: #{_lambda_.2} parent=11 // pred_fallthru
        _
      // Predicated region
      $region21: #{_lambda_.2} parent=11 // pred_check
        %p168 = pneg %p100
      $region22: #{_lambda_.2} parent=11 // pred_check_branch
        %170 = sbr.rel (%p168) target = $region24
      $region23: #{_lambda_.2} parent=11 // pred_region
        _
      $region24: #{_lambda_.2} parent=11 // pred_fallthru
        _
      // Predicated region
      $region25: #{_lambda_.2} parent=11 // pred_check
        %p171 = pneg %p121
      $region26: #{_lambda_.2} parent=11 // pred_check_branch
        %173 = sbr.rel (%p171) target = $region28
      $region27: #{_lambda_.2} parent=11 // pred_region
        _
      $region28: #{_lambda_.2} parent=11 // pred_fallthru
        _
    $region12: #{_lambda_.2} parent=5 // pred_fallthru
      _
    %p174 = scmp.lt.s32.totalorder %s11, 14
    // Predicated region
    $region29: #{_lambda_.2} parent=5 // pred_check
      %p175 = pneg %p174
    $region30: #{_lambda_.2} parent=5 // pred_check_branch
      %177 = sbr.rel (%p175) target = $region32
    $region31: #{_lambda_.2} parent=5 // pred_region
      // Predicated region
      $region33: #{_lambda_.2} parent=31 // pred_check
        %p178 = pneg %p31
      $region34: #{_lambda_.2} parent=31 // pred_check_branch
        %180 = sbr.rel (%p178) target = $region36
      $region35: #{_lambda_.2} parent=31 // pred_region
        %p181 = scmp.lt.s32.totalorder %s11, 13
        %s182 = scalar_select %p181, %s11, 13
        %s183 = smul.addr %s182, 8
        %s184 = smul.addr %s183, 4
        %s185 = scalar_lea.vmem %s0, %s184
      $region36: #{_lambda_.2} parent=31 // pred_fallthru
        _
    $region32: #{_lambda_.2} parent=5 // pred_fallthru
      _
    %p186 = scmp.le.s32.totalorder 1, %s11
    %p187 = scmp.lt.s32.totalorder %s11, 15
    %p188 = pnand %p186, %p187
    %p189 = pneg %p188
    // Predicated region
    $region37: #{_lambda_.2} parent=5 // pred_check
      _
    $region38: #{_lambda_.2} parent=5 // pred_check_branch
      %191 = sbr.rel (%p188) target = $region40
    $region39: #{_lambda_.2} parent=5 // pred_region
      %s192 = ssub.s32 %s11, 1
      %p193 = scmp.lt.s32.totalorder %s16, 13
      %s194 = scalar_select %p193, %s16, 13
      %s195 = smul.addr %s194, 8
      %s196 = smul.addr %s195, 4
      %s197 = scalar_lea.vmem %s0, %s196
      %p198 = pneg %p37
      %p199 = pneg %p34
      %p200 = pneg %p58
      %p201 = pneg %p55
      %p202 = pneg %p79
      %p203 = pneg %p76
      %p204 = pneg %p100
      %p205 = pneg %p97
      %p206 = pneg %p121
      %p207 = pneg %p118
      %p208 = pneg %p147
      %p209 = pneg %p144
      %p210 = scmp.lt.s32.totalorder %s16, 13
      %s211 = scalar_select %p210, %s16, 13
      %s212 = smul.addr %s211, 8
      %s213 = smul.addr %s212, 4
      %s214 = scalar_lea.vmem %s5, %s213
      %p215 = scmp.lt.s32.totalorder %s16, 13
      %s216 = scalar_select %p215, %s16, 13
      %s217 = smul.addr %s216, 8
      %s218 = smul.addr %s217, 4
      %s219 = scalar_lea.vmem %s0, %s218
      %p220 = scmp.lt.s32.totalorder %s16, 13
      %s221 = scalar_select %p220, %s16, 13
      %s222 = smul.addr %s221, 8
      %s223 = smul.addr %s222, 4
      %s224 = scalar_lea.vmem %s5, %s223
      %v226 = vld [vmem:[%s219] sm:$0xf]
      %v227 = vld [vmem:[%s219 + $0x4] sm:$0xf]
      %v228 = vld [vmem:[%s219 + $0x8] sm:$0xf]
      %v229 = vld [vmem:[%s219 + $0xc] sm:$0xf]
      %v230 = vld [vmem:[%s219 + $0x10] sm:$0xf]
      %v231 = vld [vmem:[%s219 + $0x14] sm:$0xf]
      %v232 = vld [vmem:[%s219 + $0x18] sm:$0xf]
      %v233 = vld [vmem:[%s219 + $0x1c] sm:$0xf]
      %v234 = vld [vmem:[%s1] sm:$0xff]
      %v235 = vld [vmem:[%s1 + $0x8] sm:$0xff]
      %v236 = vld [vmem:[%s1 + $0x10] sm:$0xff]
      %v237 = vld [vmem:[%s1 + $0x18] sm:$0xff]
      %v238 = vld [vmem:[%s1 + $0x20] sm:$0xff]
      %v239 = vld [vmem:[%s1 + $0x28] sm:$0xff]
      %v240 = vld [vmem:[%s1 + $0x30] sm:$0xff]
      %v241 = vld [vmem:[%s1 + $0x38] sm:$0xff]
      %v242 = vld [vmem:[%s1 + $0x40] sm:$0xff]
      %v243 = vld [vmem:[%s1 + $0x48] sm:$0xff]
      %v244 = vld [vmem:[%s1 + $0x50] sm:$0xff]
      %v245 = vld [vmem:[%s1 + $0x58] sm:$0xff]
      %v246 = vld [vmem:[%s1 + $0x60] sm:$0xff]
      %v247 = vld [vmem:[%s1 + $0x68] sm:$0xff]
      %v248 = vld [vmem:[%s1 + $0x70] sm:$0xff]
      %v249 = vld [vmem:[%s1 + $0x78] sm:$0xff]
      %v250 = vld [vmem:[%s2] sm:$0x3]
      %v252 = vlaneseq
      %v253 = vshrl.u32 %v252, 7
      %v254 = vsub.s32 0, %v253
      %v255 = vrot.slane %v250, %v254
      %v256 = vlaneseq
      %v257 = vshrl.u32 %v256, 7
      %v258 = vsub.s32 1, %v257
      %v259 = vrot.slane %v250, %v258
      %v270 = vunpack.c.l.b16 %v226
      %v271 = vunpack.c.l.b16 %v227
      %v272 = vunpack.c.l.b16 %v228
      %v273 = vunpack.c.l.b16 %v229
      %v274 = vunpack.c.l.b16 %v230
      %v275 = vunpack.c.l.b16 %v231
      %v276 = vunpack.c.l.b16 %v232
      %v277 = vunpack.c.l.b16 %v233
      %v278 = vpack.c.b16 %v271, %v270
      %v279 = vpack.c.b16 %v273, %v272
      %v280 = vpack.c.b16 %v275, %v274
      %v281 = vpack.c.b16 %v277, %v276
      %v302 = vunpack.c.l.b16 %v234
      %v303 = vunpack.c.h.b16 %v234
      %v304 = vunpack.c.l.b16 %v235
      %v305 = vunpack.c.h.b16 %v235
      %v306 = vunpack.c.l.b16 %v236
      %v307 = vunpack.c.h.b16 %v236
      %v308 = vunpack.c.l.b16 %v237
      %v309 = vunpack.c.h.b16 %v237
      %v310 = vunpack.c.l.b16 %v238
      %v311 = vunpack.c.h.b16 %v238
      %v312 = vunpack.c.l.b16 %v239
      %v313 = vunpack.c.h.b16 %v239
      %v314 = vunpack.c.l.b16 %v240
      %v315 = vunpack.c.h.b16 %v240
      %v316 = vunpack.c.l.b16 %v241
      %v317 = vunpack.c.h.b16 %v241
      %v318 = vunpack.c.l.b16 %v242
      %v319 = vunpack.c.h.b16 %v242
      %v320 = vunpack.c.l.b16 %v243
      %v321 = vunpack.c.h.b16 %v243
      %v322 = vunpack.c.l.b16 %v244
      %v323 = vunpack.c.h.b16 %v244
      %v324 = vunpack.c.l.b16 %v245
      %v325 = vunpack.c.h.b16 %v245
      %v326 = vunpack.c.l.b16 %v246
      %v327 = vunpack.c.h.b16 %v246
      %v328 = vunpack.c.l.b16 %v247
      %v329 = vunpack.c.h.b16 %v247
      %v330 = vunpack.c.l.b16 %v248
      %v331 = vunpack.c.h.b16 %v248
      %v332 = vunpack.c.l.b16 %v249
      %v333 = vunpack.c.h.b16 %v249
      %v334 = vpack.c.b16 %v304, %v302
      %v335 = vpack.c.b16 %v305, %v303
      %v336 = vpack.c.b16 %v308, %v306
      %v337 = vpack.c.b16 %v309, %v307
      %v338 = vpack.c.b16 %v312, %v310
      %v339 = vpack.c.b16 %v313, %v311
      %v340 = vpack.c.b16 %v316, %v314
      %v341 = vpack.c.b16 %v317, %v315
      %v342 = vpack.c.b16 %v320, %v318
      %v343 = vpack.c.b16 %v321, %v319
      %v344 = vpack.c.b16 %v324, %v322
      %v345 = vpack.c.b16 %v325, %v323
      %v346 = vpack.c.b16 %v328, %v326
      %v347 = vpack.c.b16 %v329, %v327
      %v348 = vpack.c.b16 %v332, %v330
      %v349 = vpack.c.b16 %v333, %v331
      %366 = vmatprep.subr.bf16.mxu0 %v335
      %367 = vmatpush1.bf16.msra.mxu0 %v334
      %368 = vmatprep.subr.bf16.mxu0 %v337
      %369 = vmatpush1.bf16.msra.mxu0 %v336
      %370 = vmatprep.subr.bf16.mxu0 %v339
      %371 = vmatpush1.bf16.msra.mxu0 %v338
      %372 = vmatprep.subr.bf16.mxu0 %v341
      %373 = vmatpush1.bf16.msra.mxu0 %v340
      %374 = vmatprep.subr.bf16.mxu0 %v343
      %375 = vmatpush1.bf16.msra.mxu0 %v342
      %376 = vmatprep.subr.bf16.mxu0 %v345
      %377 = vmatpush1.bf16.msra.mxu0 %v344
      %378 = vmatprep.subr.bf16.mxu0 %v347
      %379 = vmatpush1.bf16.msra.mxu0 %v346
      %380 = vmatprep.subr.bf16.mxu0 %v349
      %381 = vmatpush1.bf16.msra.mxu0 %v348
      %382 = vmatprep.subr.bf16.mxu0 0
      %383 = vmatpush1.bf16.msra.mxu0 0
      %384 = vmatprep.subr.bf16.mxu0 0
      %385 = vmatpush1.bf16.msra.mxu0 0
      %386 = vmatprep.subr.bf16.mxu0 0
      %387 = vmatpush1.bf16.msra.mxu0 0
      %388 = vmatprep.subr.bf16.mxu0 0
      %389 = vmatpush1.bf16.msra.mxu0 0
      %390 = vmatprep.subr.bf16.mxu0 0
      %391 = vmatpush1.bf16.msra.mxu0 0
      %392 = vmatprep.subr.bf16.mxu0 0
      %393 = vmatpush1.bf16.msra.mxu0 0
      %394 = vmatprep.subr.bf16.mxu0 0
      %395 = vmatpush1.bf16.msra.mxu0 0
      %396 = vmatprep.subr.bf16.mxu0 0
      %397 = vmatpush1.bf16.msra.mxu0 0
      %398 = vmatprep.mubr.bf16.mxu0 0
      %399 = vmatmul.mubr.bf16.gmra.mrb[0].mxu0 %v278
      %v400 = vpop.f32.mrb[0].mxu0
      %v401 = vadd.f32 %v255, %v400
      %v402 = vpop.f32.mrb[0].mxu0
      %v403 = vadd.f32 %v259, %v402
      %v404 = vpop.f32.mrb[0].mxu0
      %v405 = vadd.f32 %v255, %v404
      %v406 = vpop.f32.mrb[0].mxu0
      %v407 = vadd.f32 %v259, %v406
      %408 = vmatprep.mubr.bf16.mxu0 0
      %409 = vmatmul.mubr.bf16.gmra.mrb[0].mxu0 %v279
      %v410 = vpop.f32.mrb[0].mxu0
      %v411 = vadd.f32 %v255, %v410
      %v412 = vpop.f32.mrb[0].mxu0
      %v413 = vadd.f32 %v259, %v412
      %v414 = vpop.f32.mrb[0].mxu0
      %v415 = vadd.f32 %v255, %v414
      %v416 = vpop.f32.mrb[0].mxu0
      %v417 = vadd.f32 %v259, %v416
      %418 = vmatprep.mubr.bf16.mxu0 0
      %419 = vmatmul.mubr.bf16.gmra.mrb[0].mxu0 %v280
      %v420 = vpop.f32.mrb[0].mxu0
      %v421 = vadd.f32 %v255, %v420
      %v422 = vpop.f32.mrb[0].mxu0
      %v423 = vadd.f32 %v259, %v422
      %v424 = vpop.f32.mrb[0].mxu0
      %v425 = vadd.f32 %v255, %v424
      %v426 = vpop.f32.mrb[0].mxu0
      %v427 = vadd.f32 %v259, %v426
      %428 = vmatprep.mubr.bf16.mxu0 0
      %429 = vmatmul.mubr.bf16.gmra.mrb[0].mxu0 %v281
      %v430 = vpop.f32.mrb[0].mxu0
      %v431 = vadd.f32 %v255, %v430
      %v432 = vpop.f32.mrb[0].mxu0
      %v433 = vadd.f32 %v259, %v432
      %v434 = vpop.f32.mrb[0].mxu0
      %v435 = vadd.f32 %v255, %v434
      %v436 = vpop.f32.mrb[0].mxu0
      %v437 = vadd.f32 %v259, %v436
      %438 = vdwg.mxu0
      %v439 = vmax.f32 %v401, 0.0
      %v440 = vmax.f32 %v403, 0.0
      %v441 = vmax.f32 %v405, 0.0
      %v442 = vmax.f32 %v407, 0.0
      %v443 = vmax.f32 %v411, 0.0
      %v444 = vmax.f32 %v413, 0.0
      %v445 = vmax.f32 %v415, 0.0
      %v446 = vmax.f32 %v417, 0.0
      %v447 = vmax.f32 %v421, 0.0
      %v448 = vmax.f32 %v423, 0.0
      %v449 = vmax.f32 %v425, 0.0
      %v450 = vmax.f32 %v427, 0.0
      %v451 = vmax.f32 %v431, 0.0
      %v452 = vmax.f32 %v433, 0.0
      %v453 = vmax.f32 %v435, 0.0
      %v454 = vmax.f32 %v437, 0.0
      %455 = vst [vmem:[#allocation2] sm:$0xff] 0.0
      %456 = vst [vmem:[#allocation2 + $0x8] sm:$0xff] 0.0
      %457 = vst [vmem:[#allocation2 + $0x10] sm:$0x3] 0.0
      %458 = vst [vmem:[#allocation2 + $0x18] sm:$0x3] 0.0
      %s459 = scalar_lea.vmem [#allocation2], 288
      %460 = vst [vmem:[%s459] sm:$0xff] 0.0
      %461 = vst [vmem:[%s459 + $0x8] sm:$0xff] 0.0
      %462 = vst [vmem:[%s459 + $0x10] sm:$0x3] 0.0
      %463 = vst [vmem:[%s459 + $0x18] sm:$0x3] 0.0
      %v464 = vlaneseq
      %vm465 = vcmp.ge.s32.totalorder %v464, 0
      %vm466 = vcmp.lt.s32.totalorder %v464, 256
      %vm467 = vmand %vm465, %vm466
      %468 = vst.msk [vmem:[#allocation2] ss:$8 sm:$0x3] %vm467, 0.0
      %469 = vst.msk [vmem:[#allocation2] ss:$8 sm:$0x0] %vm467, 0.0
      %s470 = scalar_lea.vmem [#allocation2], 32
      %471 = vst.msk [vmem:[%s470] ss:$8 sm:$0x3] %vm467, 0.0
      %472 = vst.msk [vmem:[%s470] ss:$8 sm:$0x0] %vm467, 0.0
      %s473 = scalar_lea.vmem [#allocation2], 64
      %474 = vst.msk [vmem:[%s473] ss:$8 sm:$0x3] %vm467, 0.0
      %475 = vst.msk [vmem:[%s473] ss:$8 sm:$0x0] %vm467, 0.0
      %s476 = scalar_lea.vmem [#allocation2], 96
      %477 = vst.msk [vmem:[%s476] ss:$8 sm:$0x3] %vm467, 0.0
      %478 = vst.msk [vmem:[%s476] ss:$8 sm:$0x0] %vm467, 0.0
      %s479 = scalar_lea.vmem [#allocation2], 128
      %480 = vst.msk [vmem:[%s479] ss:$8 sm:$0x3] %vm467, 0.0
      %481 = vst.msk [vmem:[%s479] ss:$8 sm:$0x0] %vm467, 0.0
      %s482 = scalar_lea.vmem [#allocation2], 160
      %483 = vst.msk [vmem:[%s482] ss:$8 sm:$0x3] %vm467, 0.0
      %484 = vst.msk [vmem:[%s482] ss:$8 sm:$0x0] %vm467, 0.0
      %s485 = scalar_lea.vmem [#allocation2], 192
      %486 = vst.msk [vmem:[%s485] ss:$8 sm:$0x3] %vm467, 0.0
      %487 = vst.msk [vmem:[%s485] ss:$8 sm:$0x0] %vm467, 0.0
      %s488 = scalar_lea.vmem [#allocation2], 224
      %489 = vst.msk [vmem:[%s488] ss:$8 sm:$0x3] %vm467, 0.0
      %490 = vst.msk [vmem:[%s488] ss:$8 sm:$0x0] %vm467, 0.0
      %s491 = scalar_lea.vmem [#allocation2], 256
      %492 = vst.msk [vmem:[%s491] ss:$8 sm:$0x3] %vm467, 0.0
      %493 = vst.msk [vmem:[%s491] ss:$8 sm:$0x0] %vm467, 0.0
      %s494 = scalar_lea.vmem [#allocation2], 288
      %495 = vst.msk [vmem:[%s494] ss:$8 sm:$0x3] %vm467, 0.0
      %496 = vst.msk [vmem:[%s494] ss:$8 sm:$0x0] %vm467, 0.0
      %s497 = scalar_lea.vmem [#allocation2], 17
      %498 = vst.msk [vmem:[%s497] ss:$8 sm:$0x3] %vm467, 0.0
      %499 = vst.msk [vmem:[%s497] ss:$8 sm:$0x0] %vm467, 0.0
      %s500 = scalar_lea.vmem [#allocation2], 49
      %501 = vst.msk [vmem:[%s500] ss:$8 sm:$0x3] %vm467, 0.0
      %502 = vst.msk [vmem:[%s500] ss:$8 sm:$0x0] %vm467, 0.0
      %s503 = scalar_lea.vmem [#allocation2], 81
      %504 = vst.msk [vmem:[%s503] ss:$8 sm:$0x3] %vm467, 0.0
      %505 = vst.msk [vmem:[%s503] ss:$8 sm:$0x0] %vm467, 0.0
      %s506 = scalar_lea.vmem [#allocation2], 113
      %507 = vst.msk [vmem:[%s506] ss:$8 sm:$0x3] %vm467, 0.0
      %508 = vst.msk [vmem:[%s506] ss:$8 sm:$0x0] %vm467, 0.0
      %s509 = scalar_lea.vmem [#allocation2], 145
      %510 = vst.msk [vmem:[%s509] ss:$8 sm:$0x3] %vm467, 0.0
      %511 = vst.msk [vmem:[%s509] ss:$8 sm:$0x0] %vm467, 0.0
      %s512 = scalar_lea.vmem [#allocation2], 177
      %513 = vst.msk [vmem:[%s512] ss:$8 sm:$0x3] %vm467, 0.0
      %514 = vst.msk [vmem:[%s512] ss:$8 sm:$0x0] %vm467, 0.0
      %s515 = scalar_lea.vmem [#allocation2], 209
      %516 = vst.msk [vmem:[%s515] ss:$8 sm:$0x3] %vm467, 0.0
      %517 = vst.msk [vmem:[%s515] ss:$8 sm:$0x0] %vm467, 0.0
      %s518 = scalar_lea.vmem [#allocation2], 241
      %519 = vst.msk [vmem:[%s518] ss:$8 sm:$0x3] %vm467, 0.0
      %520 = vst.msk [vmem:[%s518] ss:$8 sm:$0x0] %vm467, 0.0
      %s521 = scalar_lea.vmem [#allocation2], 273
      %522 = vst.msk [vmem:[%s521] ss:$8 sm:$0x3] %vm467, 0.0
      %523 = vst.msk [vmem:[%s521] ss:$8 sm:$0x0] %vm467, 0.0
      %s524 = scalar_lea.vmem [#allocation2], 305
      %525 = vst.msk [vmem:[%s524] ss:$8 sm:$0x3] %vm467, 0.0
      %526 = vst.msk [vmem:[%s524] ss:$8 sm:$0x0] %vm467, 0.0
      %v543 = vrot.slane %v439, 7
      %v544 = vrot.slane %v440, 7
      %v545 = vrot.slane %v441, 7
      %v546 = vrot.slane %v442, 7
      %v547 = vrot.slane %v443, 7
      %v548 = vrot.slane %v444, 7
      %v549 = vrot.slane %v445, 7
      %v550 = vrot.slane %v446, 7
      %v551 = vrot.slane %v447, 7
      %v552 = vrot.slane %v448, 7
      %v553 = vrot.slane %v449, 7
      %v554 = vrot.slane %v450, 7
      %v555 = vrot.slane %v451, 7
      %v556 = vrot.slane %v452, 7
      %v557 = vrot.slane %v453, 7
      %v558 = vrot.slane %v454, 7
      %s575 = scalar_lea.vmem [#allocation2], 32
      %576 = vst [vmem:[%s575] sm:$0xfe] %v543
      %577 = vst [vmem:[%s575 + $0x8] sm:$0xfe] %v544
      %578 = vst [vmem:[%s575 + $0x10] sm:$0x1] %v543
      %579 = vst [vmem:[%s575 + $0x18] sm:$0x1] %v544
      %580 = vst [vmem:[%s575 + $0x20] sm:$0xfe] %v545
      %581 = vst [vmem:[%s575 + $0x28] sm:$0xfe] %v546
      %582 = vst [vmem:[%s575 + $0x30] sm:$0x1] %v545
      %583 = vst [vmem:[%s575 + $0x38] sm:$0x1] %v546
      %584 = vst [vmem:[%s575 + $0x40] sm:$0xfe] %v547
      %585 = vst [vmem:[%s575 + $0x48] sm:$0xfe] %v548
      %586 = vst [vmem:[%s575 + $0x50] sm:$0x1] %v547
      %587 = vst [vmem:[%s575 + $0x58] sm:$0x1] %v548
      %588 = vst [vmem:[%s575 + $0x60] sm:$0xfe] %v549
      %589 = vst [vmem:[%s575 + $0x68] sm:$0xfe] %v550
      %590 = vst [vmem:[%s575 + $0x70] sm:$0x1] %v549
      %591 = vst [vmem:[%s575 + $0x78] sm:$0x1] %v550
      %592 = vst [vmem:[%s575 + $0x80] sm:$0xfe] %v551
      %593 = vst [vmem:[%s575 + $0x88] sm:$0xfe] %v552
      %594 = vst [vmem:[%s575 + $0x90] sm:$0x1] %v551
      %595 = vst [vmem:[%s575 + $0x98] sm:$0x1] %v552
      %596 = vst [vmem:[%s575 + $0xa0] sm:$0xfe] %v553
      %597 = vst [vmem:[%s575 + $0xa8] sm:$0xfe] %v554
      %598 = vst [vmem:[%s575 + $0xb0] sm:$0x1] %v553
      %599 = vst [vmem:[%s575 + $0xb8] sm:$0x1] %v554
      %600 = vst [vmem:[%s575 + $0xc0] sm:$0xfe] %v555
      %601 = vst [vmem:[%s575 + $0xc8] sm:$0xfe] %v556
      %602 = vst [vmem:[%s575 + $0xd0] sm:$0x1] %v555
      %603 = vst [vmem:[%s575 + $0xd8] sm:$0x1] %v556
      %604 = vst [vmem:[%s575 + $0xe0] sm:$0xfe] %v557
      %605 = vst [vmem:[%s575 + $0xe8] sm:$0xfe] %v558
      %606 = vst [vmem:[%s575 + $0xf0] sm:$0x1] %v557
      %607 = vst [vmem:[%s575 + $0xf8] sm:$0x1] %v558
      %v608 = vld [vmem:[#allocation2] sm:$0xff]
      %v609 = vld [vmem:[#allocation2 + $0x8] sm:$0xff]
      %v610 = vld [vmem:[#allocation2 + $0x20] sm:$0xff]
      %v611 = vld [vmem:[#allocation2 + $0x28] sm:$0xff]
      %v612 = vld [vmem:[#allocation2 + $0x40] sm:$0xff]
      %v613 = vld [vmem:[#allocation2 + $0x48] sm:$0xff]
      %v614 = vld [vmem:[#allocation2 + $0x60] sm:$0xff]
      %v615 = vld [vmem:[#allocation2 + $0x68] sm:$0xff]
      %v616 = vld [vmem:[#allocation2 + $0x80] sm:$0xff]
      %v617 = vld [vmem:[#allocation2 + $0x88] sm:$0xff]
      %v618 = vld [vmem:[#allocation2 + $0xa0] sm:$0xff]
      %v619 = vld [vmem:[#allocation2 + $0xa8] sm:$0xff]
      %v620 = vld [vmem:[#allocation2 + $0xc0] sm:$0xff]
      %v621 = vld [vmem:[#allocation2 + $0xc8] sm:$0xff]
      %v622 = vld [vmem:[#allocation2 + $0xe0] sm:$0xff]
      %v623 = vld [vmem:[#allocation2 + $0xe8] sm:$0xff]
      %v624 = vpack.c.bf16 %v610, %v608
      %v625 = vpack.c.bf16 %v611, %v609
      %v626 = vpack.c.bf16 %v614, %v612
      %v627 = vpack.c.bf16 %v615, %v613
      %v628 = vpack.c.bf16 %v618, %v616
      %v629 = vpack.c.bf16 %v619, %v617
      %v630 = vpack.c.bf16 %v622, %v620
      %v631 = vpack.c.bf16 %v623, %v621
      %v632 = vld [vmem:[%s3] sm:$0xf]
      %v633 = vld [vmem:[%s3 + $0x4] sm:$0xf]
      %v634 = vld [vmem:[%s3 + $0x8] sm:$0xf]
      %v635 = vld [vmem:[%s3 + $0xc] sm:$0xf]
      %v636 = vld [vmem:[%s3 + $0x10] sm:$0xf]
      %v637 = vld [vmem:[%s3 + $0x14] sm:$0xf]
      %v638 = vld [vmem:[%s3 + $0x18] sm:$0xf]
      %v639 = vld [vmem:[%s3 + $0x1c] sm:$0xf]
      %v640 = vld [vmem:[%s3 + $0x20] sm:$0xf]
      %v641 = vld [vmem:[%s3 + $0x24] sm:$0xf]
      %v642 = vld [vmem:[%s3 + $0x28] sm:$0xf]
      %v643 = vld [vmem:[%s3 + $0x2c] sm:$0xf]
      %v644 = vld [vmem:[%s3 + $0x30] sm:$0xf]
      %v645 = vld [vmem:[%s3 + $0x34] sm:$0xf]
      %v646 = vld [vmem:[%s3 + $0x38] sm:$0xf]
      %v647 = vld [vmem:[%s3 + $0x3c] sm:$0xf]
      %v648 = vld [vmem:[%s3 + $0x40] sm:$0xf]
      %v649 = vld [vmem:[%s3 + $0x44] sm:$0xf]
      %v650 = vld [vmem:[%s3 + $0x48] sm:$0xf]
      %v651 = vld [vmem:[%s3 + $0x4c] sm:$0xf]
      %v652 = vld [vmem:[%s3 + $0x50] sm:$0xf]
      %v653 = vld [vmem:[%s3 + $0x54] sm:$0xf]
      %v654 = vld [vmem:[%s3 + $0x58] sm:$0xf]
      %v655 = vld [vmem:[%s3 + $0x5c] sm:$0xf]
      %v656 = vld [vmem:[%s3 + $0x60] sm:$0xf]
      %v657 = vld [vmem:[%s3 + $0x64] sm:$0xf]
      %v658 = vld [vmem:[%s3 + $0x68] sm:$0xf]
      %v659 = vld [vmem:[%s3 + $0x6c] sm:$0xf]
      %v660 = vld [vmem:[%s3 + $0x70] sm:$0xf]
      %v661 = vld [vmem:[%s3 + $0x74] sm:$0xf]
      %v662 = vld [vmem:[%s3 + $0x78] sm:$0xf]
      %v663 = vld [vmem:[%s3 + $0x7c] sm:$0xf]
      %v664 = vld [vmem:[#allocation2] sm:$0xfe]
      %v665 = vld [vmem:[#allocation2 + $0x8] sm:$0xfe]
      %v666 = vld [vmem:[#allocation2 + $0x10] sm:$0x1]
      %v667 = vld [vmem:[#allocation2 + $0x18] sm:$0x1]
      %v668 = vld [vmem:[#allocation2 + $0x20] sm:$0xfe]
      %v669 = vld [vmem:[#allocation2 + $0x28] sm:$0xfe]
      %v670 = vld [vmem:[#allocation2 + $0x30] sm:$0x1]
      %v671 = vld [vmem:[#allocation2 + $0x38] sm:$0x1]
      %v672 = vld [vmem:[#allocation2 + $0x40] sm:$0xfe]
      %v673 = vld [vmem:[#allocation2 + $0x48] sm:$0xfe]
      %v674 = vld [vmem:[#allocation2 + $0x50] sm:$0x1]
      %v675 = vld [vmem:[#allocation2 + $0x58] sm:$0x1]
      %v676 = vld [vmem:[#allocation2 + $0x60] sm:$0xfe]
      %v677 = vld [vmem:[#allocation2 + $0x68] sm:$0xfe]
      %v678 = vld [vmem:[#allocation2 + $0x70] sm:$0x1]
      %v679 = vld [vmem:[#allocation2 + $0x78] sm:$0x1]
      %v680 = vld [vmem:[#allocation2 + $0x80] sm:$0xfe]
      %v681 = vld [vmem:[#allocation2 + $0x88] sm:$0xfe]
      %v682 = vld [vmem:[#allocation2 + $0x90] sm:$0x1]
      %v683 = vld [vmem:[#allocation2 + $0x98] sm:$0x1]
      %v684 = vld [vmem:[#allocation2 + $0xa0] sm:$0xfe]
      %v685 = vld [vmem:[#allocation2 + $0xa8] sm:$0xfe]
      %v686 = vld [vmem:[#allocation2 + $0xb0] sm:$0x1]
      %v687 = vld [vmem:[#allocation2 + $0xb8] sm:$0x1]
      %v688 = vld [vmem:[#allocation2 + $0xc0] sm:$0xfe]
      %v689 = vld [vmem:[#allocation2 + $0xc8] sm:$0xfe]
      %v690 = vld [vmem:[#allocation2 + $0xd0] sm:$0x1]
      %v691 = vld [vmem:[#allocation2 + $0xd8] sm:$0x1]
      %v692 = vld [vmem:[#allocation2 + $0xe0] sm:$0xfe]
      %v693 = vld [vmem:[#allocation2 + $0xe8] sm:$0xfe]
      %v694 = vld [vmem:[#allocation2 + $0xf0] sm:$0x1]
      %v695 = vld [vmem:[#allocation2 + $0xf8] sm:$0x1]
      %vm728 = vcmask 1046528
      %v729 = vrot.slane %v664, 1
      %v730 = vrot.slane %v666, 1
      %v731 = vsel %vm728, %v729, %v730
      %v732 = vrot.slane %v665, 1
      %v733 = vrot.slane %v667, 1
      %v734 = vsel %vm728, %v732, %v733
      %v735 = vrot.slane %v668, 1
      %v736 = vrot.slane %v670, 1
      %v737 = vsel %vm728, %v735, %v736
      %v738 = vrot.slane %v669, 1
      %v739 = vrot.slane %v671, 1
      %v740 = vsel %vm728, %v738, %v739
      %v741 = vrot.slane %v672, 1
      %v742 = vrot.slane %v674, 1
      %v743 = vsel %vm728, %v741, %v742
      %v744 = vrot.slane %v673, 1
      %v745 = vrot.slane %v675, 1
      %v746 = vsel %vm728, %v744, %v745
      %v747 = vrot.slane %v676, 1
      %v748 = vrot.slane %v678, 1
      %v749 = vsel %vm728, %v747, %v748
      %v750 = vrot.slane %v677, 1
      %v751 = vrot.slane %v679, 1
      %v752 = vsel %vm728, %v750, %v751
      %v753 = vrot.slane %v680, 1
      %v754 = vrot.slane %v682, 1
      %v755 = vsel %vm728, %v753, %v754
      %v756 = vrot.slane %v681, 1
      %v757 = vrot.slane %v683, 1
      %v758 = vsel %vm728, %v756, %v757
      %v759 = vrot.slane %v684, 1
      %v760 = vrot.slane %v686, 1
      %v761 = vsel %vm728, %v759, %v760
      %v762 = vrot.slane %v685, 1
      %v763 = vrot.slane %v687, 1
      %v764 = vsel %vm728, %v762, %v763
      %v765 = vrot.slane %v688, 1
      %v766 = vrot.slane %v690, 1
      %v767 = vsel %vm728, %v765, %v766
      %v768 = vrot.slane %v689, 1
      %v769 = vrot.slane %v691, 1
      %v770 = vsel %vm728, %v768, %v769
      %v771 = vrot.slane %v692, 1
      %v772 = vrot.slane %v694, 1
      %v773 = vsel %vm728, %v771, %v772
      %v774 = vrot.slane %v693, 1
      %v775 = vrot.slane %v695, 1
      %v776 = vsel %vm728, %v774, %v775
      %v793 = vpack.c.bf16 %v737, %v731
      %v794 = vpack.c.bf16 %v740, %v734
      %v795 = vpack.c.bf16 %v749, %v743
      %v796 = vpack.c.bf16 %v752, %v746
      %v797 = vpack.c.bf16 %v761, %v755
      %v798 = vpack.c.bf16 %v764, %v758
      %v799 = vpack.c.bf16 %v773, %v767
      %v800 = vpack.c.bf16 %v776, %v770
      %s801 = scalar_lea.vmem %s3, 128
      %v802 = vld [vmem:[%s801] sm:$0xf]
      %v803 = vld [vmem:[%s801 + $0x4] sm:$0xf]
      %v804 = vld [vmem:[%s801 + $0x8] sm:$0xf]
      %v805 = vld [vmem:[%s801 + $0xc] sm:$0xf]
      %v806 = vld [vmem:[%s801 + $0x10] sm:$0xf]
      %v807 = vld [vmem:[%s801 + $0x14] sm:$0xf]
      %v808 = vld [vmem:[%s801 + $0x18] sm:$0xf]
      %v809 = vld [vmem:[%s801 + $0x1c] sm:$0xf]
      %v810 = vld [vmem:[%s801 + $0x20] sm:$0xf]
      %v811 = vld [vmem:[%s801 + $0x24] sm:$0xf]
      %v812 = vld [vmem:[%s801 + $0x28] sm:$0xf]
      %v813 = vld [vmem:[%s801 + $0x2c] sm:$0xf]
      %v814 = vld [vmem:[%s801 + $0x30] sm:$0xf]
      %v815 = vld [vmem:[%s801 + $0x34] sm:$0xf]
      %v816 = vld [vmem:[%s801 + $0x38] sm:$0xf]
      %v817 = vld [vmem:[%s801 + $0x3c] sm:$0xf]
      %v818 = vld [vmem:[%s801 + $0x40] sm:$0xf]
      %v819 = vld [vmem:[%s801 + $0x44] sm:$0xf]
      %v820 = vld [vmem:[%s801 + $0x48] sm:$0xf]
      %v821 = vld [vmem:[%s801 + $0x4c] sm:$0xf]
      %v822 = vld [vmem:[%s801 + $0x50] sm:$0xf]
      %v823 = vld [vmem:[%s801 + $0x54] sm:$0xf]
      %v824 = vld [vmem:[%s801 + $0x58] sm:$0xf]
      %v825 = vld [vmem:[%s801 + $0x5c] sm:$0xf]
      %v826 = vld [vmem:[%s801 + $0x60] sm:$0xf]
      %v827 = vld [vmem:[%s801 + $0x64] sm:$0xf]
      %v828 = vld [vmem:[%s801 + $0x68] sm:$0xf]
      %v829 = vld [vmem:[%s801 + $0x6c] sm:$0xf]
      %v830 = vld [vmem:[%s801 + $0x70] sm:$0xf]
      %v831 = vld [vmem:[%s801 + $0x74] sm:$0xf]
      %v832 = vld [vmem:[%s801 + $0x78] sm:$0xf]
      %v833 = vld [vmem:[%s801 + $0x7c] sm:$0xf]
      %v866 = vunpack.c.l.b16 %v802
      %v867 = vunpack.c.l.b16 %v803
      %v868 = vunpack.c.l.b16 %v804
      %v869 = vunpack.c.l.b16 %v805
      %v870 = vunpack.c.l.b16 %v806
      %v871 = vunpack.c.l.b16 %v807
      %v872 = vunpack.c.l.b16 %v808
      %v873 = vunpack.c.l.b16 %v809
      %v874 = vunpack.c.l.b16 %v810
      %v875 = vunpack.c.l.b16 %v811
      %v876 = vunpack.c.l.b16 %v812
      %v877 = vunpack.c.l.b16 %v813
      %v878 = vunpack.c.l.b16 %v814
      %v879 = vunpack.c.l.b16 %v815
      %v880 = vunpack.c.l.b16 %v816
      %v881 = vunpack.c.l.b16 %v817
      %v882 = vunpack.c.l.b16 %v818
      %v883 = vunpack.c.l.b16 %v819
      %v884 = vunpack.c.l.b16 %v820
      %v885 = vunpack.c.l.b16 %v821
      %v886 = vunpack.c.l.b16 %v822
      %v887 = vunpack.c.l.b16 %v823
      %v888 = vunpack.c.l.b16 %v824
      %v889 = vunpack.c.l.b16 %v825
      %v890 = vunpack.c.l.b16 %v826
      %v891 = vunpack.c.l.b16 %v827
      %v892 = vunpack.c.l.b16 %v828
      %v893 = vunpack.c.l.b16 %v829
      %v894 = vunpack.c.l.b16 %v830
      %v895 = vunpack.c.l.b16 %v831
      %v896 = vunpack.c.l.b16 %v832
      %v897 = vunpack.c.l.b16 %v833
      %v898 = vpack.c.b16 %v867, %v866
      %v899 = vpack.c.b16 %v869, %v868
      %v900 = vpack.c.b16 %v871, %v870
      %v901 = vpack.c.b16 %v873, %v872
      %v902 = vpack.c.b16 %v875, %v874
      %v903 = vpack.c.b16 %v877, %v876
      %v904 = vpack.c.b16 %v879, %v878
      %v905 = vpack.c.b16 %v881, %v880
      %v906 = vpack.c.b16 %v883, %v882
      %v907 = vpack.c.b16 %v885, %v884
      %v908 = vpack.c.b16 %v887, %v886
      %v909 = vpack.c.b16 %v889, %v888
      %v910 = vpack.c.b16 %v891, %v890
      %v911 = vpack.c.b16 %v893, %v892
      %v912 = vpack.c.b16 %v895, %v894
      %v913 = vpack.c.b16 %v897, %v896
      %930 = vmatprep.subr.bf16.mxu0 0
      %931 = vmatpush1.bf16.msra.mxu0 %v898
      %932 = vmatprep.subr.bf16.mxu0 0
      %933 = vmatpush1.bf16.msra.mxu0 %v899
      %934 = vmatprep.subr.bf16.mxu0 0
      %935 = vmatpush1.bf16.msra.mxu0 %v900
      %936 = vmatprep.subr.bf16.mxu0 0
      %937 = vmatpush1.bf16.msra.mxu0 %v901
      %938 = vmatprep.subr.bf16.mxu0 0
      %939 = vmatpush1.bf16.msra.mxu0 %v902
      %940 = vmatprep.subr.bf16.mxu0 0
      %941 = vmatpush1.bf16.msra.mxu0 %v903
      %942 = vmatprep.subr.bf16.mxu0 0
      %943 = vmatpush1.bf16.msra.mxu0 %v904
      %944 = vmatprep.subr.bf16.mxu0 0
      %945 = vmatpush1.bf16.msra.mxu0 %v905
      %946 = vmatprep.subr.bf16.mxu0 0
      %947 = vmatpush1.bf16.msra.mxu0 %v906
      %948 = vmatprep.subr.bf16.mxu0 0
      %949 = vmatpush1.bf16.msra.mxu0 %v907
      %950 = vmatprep.subr.bf16.mxu0 0
      %951 = vmatpush1.bf16.msra.mxu0 %v908
      %952 = vmatprep.subr.bf16.mxu0 0
      %953 = vmatpush1.bf16.msra.mxu0 %v909
      %954 = vmatprep.subr.bf16.mxu0 0
      %955 = vmatpush1.bf16.msra.mxu0 %v910
      %956 = vmatprep.subr.bf16.mxu0 0
      %957 = vmatpush1.bf16.msra.mxu0 %v911
      %958 = vmatprep.subr.bf16.mxu0 0
      %959 = vmatpush1.bf16.msra.mxu0 %v912
      %960 = vmatprep.subr.bf16.mxu0 0
      %961 = vmatpush1.bf16.msra.mxu0 %v913
      %962 = vmatprep.mubr.bf16.mxu0 %v794
      %963 = vmatmul.mubr.bf16.gmra.mrb[0].mxu0 %v793
      %v964 = vpop.f32.mrb[0].mxu0
      %v965 = vadd.f32 0.0, %v964
      %v966 = vpop.f32.mrb[0].mxu0
      %v967 = vpop.f32.mrb[0].mxu0
      %v968 = vadd.f32 0.0, %v967
      %v969 = vpop.f32.mrb[0].mxu0
      %970 = vmatprep.mubr.bf16.mxu0 %v796
      %971 = vmatmul.mubr.bf16.gmra.mrb[0].mxu0 %v795
      %v972 = vpop.f32.mrb[0].mxu0
      %v973 = vadd.f32 0.0, %v972
      %v974 = vpop.f32.mrb[0].mxu0
      %v975 = vpop.f32.mrb[0].mxu0
      %v976 = vadd.f32 0.0, %v975
      %v977 = vpop.f32.mrb[0].mxu0
      %978 = vmatprep.mubr.bf16.mxu0 %v798
      %979 = vmatmul.mubr.bf16.gmra.mrb[0].mxu0 %v797
      %v980 = vpop.f32.mrb[0].mxu0
      %v981 = vadd.f32 0.0, %v980
      %v982 = vpop.f32.mrb[0].mxu0
      %v983 = vpop.f32.mrb[0].mxu0
      %v984 = vadd.f32 0.0, %v983
      %v985 = vpop.f32.mrb[0].mxu0
      %986 = vmatprep.mubr.bf16.mxu0 %v800
      %987 = vmatmul.mubr.bf16.gmra.mrb[0].mxu0 %v799
      %v988 = vpop.f32.mrb[0].mxu0
      %v989 = vadd.f32 0.0, %v988
      %v990 = vpop.f32.mrb[0].mxu0
      %v991 = vpop.f32.mrb[0].mxu0
      %v992 = vadd.f32 0.0, %v991
      %v993 = vpop.f32.mrb[0].mxu0
      %994 = vdwg.mxu0
      %v1027 = vunpack.c.l.b16 %v632
      %v1028 = vunpack.c.l.b16 %v633
      %v1029 = vunpack.c.l.b16 %v634
      %v1030 = vunpack.c.l.b16 %v635
      %v1031 = vunpack.c.l.b16 %v636
      %v1032 = vunpack.c.l.b16 %v637
      %v1033 = vunpack.c.l.b16 %v638
      %v1034 = vunpack.c.l.b16 %v639
      %v1035 = vunpack.c.l.b16 %v640
      %v1036 = vunpack.c.l.b16 %v641
      %v1037 = vunpack.c.l.b16 %v642
      %v1038 = vunpack.c.l.b16 %v643
      %v1039 = vunpack.c.l.b16 %v644
      %v1040 = vunpack.c.l.b16 %v645
      %v1041 = vunpack.c.l.b16 %v646
      %v1042 = vunpack.c.l.b16 %v647
      %v1043 = vunpack.c.l.b16 %v648
      %v1044 = vunpack.c.l.b16 %v649
      %v1045 = vunpack.c.l.b16 %v650
      %v1046 = vunpack.c.l.b16 %v651
      %v1047 = vunpack.c.l.b16 %v652
      %v1048 = vunpack.c.l.b16 %v653
      %v1049 = vunpack.c.l.b16 %v654
      %v1050 = vunpack.c.l.b16 %v655
      %v1051 = vunpack.c.l.b16 %v656
      %v1052 = vunpack.c.l.b16 %v657
      %v1053 = vunpack.c.l.b16 %v658
      %v1054 = vunpack.c.l.b16 %v659
      %v1055 = vunpack.c.l.b16 %v660
      %v1056 = vunpack.c.l.b16 %v661
      %v1057 = vunpack.c.l.b16 %v662
      %v1058 = vunpack.c.l.b16 %v663
      %v1059 = vpack.c.b16 %v1028, %v1027
      %v1060 = vpack.c.b16 %v1030, %v1029
      %v1061 = vpack.c.b16 %v1032, %v1031
      %v1062 = vpack.c.b16 %v1034, %v1033
      %v1063 = vpack.c.b16 %v1036, %v1035
      %v1064 = vpack.c.b16 %v1038, %v1037
      %v1065 = vpack.c.b16 %v1040, %v1039
      %v1066 = vpack.c.b16 %v1042, %v1041
      %v1067 = vpack.c.b16 %v1044, %v1043
      %v1068 = vpack.c.b16 %v1046, %v1045
      %v1069 = vpack.c.b16 %v1048, %v1047
      %v1070 = vpack.c.b16 %v1050, %v1049
      %v1071 = vpack.c.b16 %v1052, %v1051
      %v1072 = vpack.c.b16 %v1054, %v1053
      %v1073 = vpack.c.b16 %v1056, %v1055
      %v1074 = vpack.c.b16 %v1058, %v1057
      %1091 = vmatprep.subr.bf16.mxu0 0
      %1092 = vmatpush1.bf16.msra.mxu0 %v1059
      %1093 = vmatprep.subr.bf16.mxu0 0
      %1094 = vmatpush1.bf16.msra.mxu0 %v1060
      %1095 = vmatprep.subr.bf16.mxu0 0
      %1096 = vmatpush1.bf16.msra.mxu0 %v1061
      %1097 = vmatprep.subr.bf16.mxu0 0
      %1098 = vmatpush1.bf16.msra.mxu0 %v1062
      %1099 = vmatprep.subr.bf16.mxu0 0
      %1100 = vmatpush1.bf16.msra.mxu0 %v1063
      %1101 = vmatprep.subr.bf16.mxu0 0
      %1102 = vmatpush1.bf16.msra.mxu0 %v1064
      %1103 = vmatprep.subr.bf16.mxu0 0
      %1104 = vmatpush1.bf16.msra.mxu0 %v1065
      %1105 = vmatprep.subr.bf16.mxu0 0
      %1106 = vmatpush1.bf16.msra.mxu0 %v1066
      %1107 = vmatprep.subr.bf16.mxu0 0
      %1108 = vmatpush1.bf16.msra.mxu0 %v1067
      %1109 = vmatprep.subr.bf16.mxu0 0
      %1110 = vmatpush1.bf16.msra.mxu0 %v1068
      %1111 = vmatprep.subr.bf16.mxu0 0
      %1112 = vmatpush1.bf16.msra.mxu0 %v1069
      %1113 = vmatprep.subr.bf16.mxu0 0
      %1114 = vmatpush1.bf16.msra.mxu0 %v1070
      %1115 = vmatprep.subr.bf16.mxu0 0
      %1116 = vmatpush1.bf16.msra.mxu0 %v1071
      %1117 = vmatprep.subr.bf16.mxu0 0
      %1118 = vmatpush1.bf16.msra.mxu0 %v1072
      %1119 = vmatprep.subr.bf16.mxu0 0
      %1120 = vmatpush1.bf16.msra.mxu0 %v1073
      %1121 = vmatprep.subr.bf16.mxu0 0
      %1122 = vmatpush1.bf16.msra.mxu0 %v1074
      %1123 = vmatprep.mubr.bf16.mxu0 %v625
      %1124 = vmatmul.mubr.bf16.gmra.mrb[0].mxu0 %v624
      %v1125 = vpop.f32.mrb[0].mxu0
      %v1126 = vadd.f32 %v965, %v1125
      %v1127 = vpop.f32.mrb[0].mxu0
      %v1128 = vpop.f32.mrb[0].mxu0
      %v1129 = vadd.f32 %v968, %v1128
      %v1130 = vpop.f32.mrb[0].mxu0
      %1131 = vmatprep.mubr.bf16.mxu0 %v627
      %1132 = vmatmul.mubr.bf16.gmra.mrb[0].mxu0 %v626
      %v1133 = vpop.f32.mrb[0].mxu0
      %v1134 = vadd.f32 %v973, %v1133
      %v1135 = vpop.f32.mrb[0].mxu0
      %v1136 = vpop.f32.mrb[0].mxu0
      %v1137 = vadd.f32 %v976, %v1136
      %v1138 = vpop.f32.mrb[0].mxu0
      %1139 = vmatprep.mubr.bf16.mxu0 %v629
      %1140 = vmatmul.mubr.bf16.gmra.mrb[0].mxu0 %v628
      %v1141 = vpop.f32.mrb[0].mxu0
      %v1142 = vadd.f32 %v981, %v1141
      %v1143 = vpop.f32.mrb[0].mxu0
      %v1144 = vpop.f32.mrb[0].mxu0
      %v1145 = vadd.f32 %v984, %v1144
      %v1146 = vpop.f32.mrb[0].mxu0
      %1147 = vmatprep.mubr.bf16.mxu0 %v631
      %1148 = vmatmul.mubr.bf16.gmra.mrb[0].mxu0 %v630
      %v1149 = vpop.f32.mrb[0].mxu0
      %v1150 = vadd.f32 %v989, %v1149
      %v1151 = vpop.f32.mrb[0].mxu0
      %v1152 = vpop.f32.mrb[0].mxu0
      %v1153 = vadd.f32 %v992, %v1152
      %v1154 = vpop.f32.mrb[0].mxu0
      %1155 = vdwg.mxu0
      %v1156 = vld [vmem:[#allocation2] sm:$0xfc]
      %v1157 = vld [vmem:[#allocation2 + $0x8] sm:$0xfc]
      %v1158 = vld [vmem:[#allocation2 + $0x10] sm:$0x3]
      %v1159 = vld [vmem:[#allocation2 + $0x18] sm:$0x3]
      %v1160 = vld [vmem:[#allocation2 + $0x20] sm:$0xfc]
      %v1161 = vld [vmem:[#allocation2 + $0x28] sm:$0xfc]
      %v1162 = vld [vmem:[#allocation2 + $0x30] sm:$0x3]
      %v1163 = vld [vmem:[#allocation2 + $0x38] sm:$0x3]
      %v1164 = vld [vmem:[#allocation2 + $0x40] sm:$0xfc]
      %v1165 = vld [vmem:[#allocation2 + $0x48] sm:$0xfc]
      %v1166 = vld [vmem:[#allocation2 + $0x50] sm:$0x3]
      %v1167 = vld [vmem:[#allocation2 + $0x58] sm:$0x3]
      %v1168 = vld [vmem:[#allocation2 + $0x60] sm:$0xfc]
      %v1169 = vld [vmem:[#allocation2 + $0x68] sm:$0xfc]
      %v1170 = vld [vmem:[#allocation2 + $0x70] sm:$0x3]
      %v1171 = vld [vmem:[#allocation2 + $0x78] sm:$0x3]
      %v1172 = vld [vmem:[#allocation2 + $0x80] sm:$0xfc]
      %v1173 = vld [vmem:[#allocation2 + $0x88] sm:$0xfc]
      %v1174 = vld [vmem:[#allocation2 + $0x90] sm:$0x3]
      %v1175 = vld [vmem:[#allocation2 + $0x98] sm:$0x3]
      %v1176 = vld [vmem:[#allocation2 + $0xa0] sm:$0xfc]
      %v1177 = vld [vmem:[#allocation2 + $0xa8] sm:$0xfc]
      %v1178 = vld [vmem:[#allocation2 + $0xb0] sm:$0x3]
      %v1179 = vld [vmem:[#allocation2 + $0xb8] sm:$0x3]
      %v1180 = vld [vmem:[#allocation2 + $0xc0] sm:$0xfc]
      %v1181 = vld [vmem:[#allocation2 + $0xc8] sm:$0xfc]
      %v1182 = vld [vmem:[#allocation2 + $0xd0] sm:$0x3]
      %v1183 = vld [vmem:[#allocation2 + $0xd8] sm:$0x3]
      %v1184 = vld [vmem:[#allocation2 + $0xe0] sm:$0xfc]
      %v1185 = vld [vmem:[#allocation2 + $0xe8] sm:$0xfc]
      %v1186 = vld [vmem:[#allocation2 + $0xf0] sm:$0x3]
      %v1187 = vld [vmem:[#allocation2 + $0xf8] sm:$0x3]
      %vm1220 = vcmask 1045504
      %v1221 = vrot.slane %v1156, 2
      %v1222 = vrot.slane %v1158, 2
      %v1223 = vsel %vm1220, %v1221, %v1222
      %v1224 = vrot.slane %v1157, 2
      %v1225 = vrot.slane %v1159, 2
      %v1226 = vsel %vm1220, %v1224, %v1225
      %v1227 = vrot.slane %v1160, 2
      %v1228 = vrot.slane %v1162, 2
      %v1229 = vsel %vm1220, %v1227, %v1228
      %v1230 = vrot.slane %v1161, 2
      %v1231 = vrot.slane %v1163, 2
      %v1232 = vsel %vm1220, %v1230, %v1231
      %v1233 = vrot.slane %v1164, 2
      %v1234 = vrot.slane %v1166, 2
      %v1235 = vsel %vm1220, %v1233, %v1234
      %v1236 = vrot.slane %v1165, 2
      %v1237 = vrot.slane %v1167, 2
      %v1238 = vsel %vm1220, %v1236, %v1237
      %v1239 = vrot.slane %v1168, 2
      %v1240 = vrot.slane %v1170, 2
      %v1241 = vsel %vm1220, %v1239, %v1240
      %v1242 = vrot.slane %v1169, 2
      %v1243 = vrot.slane %v1171, 2
      %v1244 = vsel %vm1220, %v1242, %v1243
      %v1245 = vrot.slane %v1172, 2
      %v1246 = vrot.slane %v1174, 2
      %v1247 = vsel %vm1220, %v1245, %v1246
      %v1248 = vrot.slane %v1173, 2
      %v1249 = vrot.slane %v1175, 2
      %v1250 = vsel %vm1220, %v1248, %v1249
      %v1251 = vrot.slane %v1176, 2
      %v1252 = vrot.slane %v1178, 2
      %v1253 = vsel %vm1220, %v1251, %v1252
      %v1254 = vrot.slane %v1177, 2
      %v1255 = vrot.slane %v1179, 2
      %v1256 = vsel %vm1220, %v1254, %v1255
      %v1257 = vrot.slane %v1180, 2
      %v1258 = vrot.slane %v1182, 2
      %v1259 = vsel %vm1220, %v1257, %v1258
      %v1260 = vrot.slane %v1181, 2
      %v1261 = vrot.slane %v1183, 2
      %v1262 = vsel %vm1220, %v1260, %v1261
      %v1263 = vrot.slane %v1184, 2
      %v1264 = vrot.slane %v1186, 2
      %v1265 = vsel %vm1220, %v1263, %v1264
      %v1266 = vrot.slane %v1185, 2
      %v1267 = vrot.slane %v1187, 2
      %v1268 = vsel %vm1220, %v1266, %v1267
      %v1285 = vpack.c.bf16 %v1229, %v1223
      %v1286 = vpack.c.bf16 %v1232, %v1226
      %v1287 = vpack.c.bf16 %v1241, %v1235
      %v1288 = vpack.c.bf16 %v1244, %v1238
      %v1289 = vpack.c.bf16 %v1253, %v1247
      %v1290 = vpack.c.bf16 %v1256, %v1250
      %v1291 = vpack.c.bf16 %v1265, %v1259
      %v1292 = vpack.c.bf16 %v1268, %v1262
      %s1293 = scalar_lea.vmem %s3, 256
      %v1294 = vld [vmem:[%s1293] sm:$0xf]
      %v1295 = vld [vmem:[%s1293 + $0x4] sm:$0xf]
      %v1296 = vld [vmem:[%s1293 + $0x8] sm:$0xf]
      %v1297 = vld [vmem:[%s1293 + $0xc] sm:$0xf]
      %v1298 = vld [vmem:[%s1293 + $0x10] sm:$0xf]
      %v1299 = vld [vmem:[%s1293 + $0x14] sm:$0xf]
      %v1300 = vld [vmem:[%s1293 + $0x18] sm:$0xf]
      %v1301 = vld [vmem:[%s1293 + $0x1c] sm:$0xf]
      %v1302 = vld [vmem:[%s1293 + $0x20] sm:$0xf]
      %v1303 = vld [vmem:[%s1293 + $0x24] sm:$0xf]
      %v1304 = vld [vmem:[%s1293 + $0x28] sm:$0xf]
      %v1305 = vld [vmem:[%s1293 + $0x2c] sm:$0xf]
      %v1306 = vld [vmem:[%s1293 + $0x30] sm:$0xf]
      %v1307 = vld [vmem:[%s1293 + $0x34] sm:$0xf]
      %v1308 = vld [vmem:[%s1293 + $0x38] sm:$0xf]
      %v1309 = vld [vmem:[%s1293 + $0x3c] sm:$0xf]
      %v1310 = vld [vmem:[%s1293 + $0x40] sm:$0xf]
      %v1311 = vld [vmem:[%s1293 + $0x44] sm:$0xf]
      %v1312 = vld [vmem:[%s1293 + $0x48] sm:$0xf]
      %v1313 = vld [vmem:[%s1293 + $0x4c] sm:$0xf]
      %v1314 = vld [vmem:[%s1293 + $0x50] sm:$0xf]
      %v1315 = vld [vmem:[%s1293 + $0x54] sm:$0xf]
      %v1316 = vld [vmem:[%s1293 + $0x58] sm:$0xf]
      %v1317 = vld [vmem:[%s1293 + $0x5c] sm:$0xf]
      %v1318 = vld [vmem:[%s1293 + $0x60] sm:$0xf]
      %v1319 = vld [vmem:[%s1293 + $0x64] sm:$0xf]
      %v1320 = vld [vmem:[%s1293 + $0x68] sm:$0xf]
      %v1321 = vld [vmem:[%s1293 + $0x6c] sm:$0xf]
      %v1322 = vld [vmem:[%s1293 + $0x70] sm:$0xf]
      %v1323 = vld [vmem:[%s1293 + $0x74] sm:$0xf]
      %v1324 = vld [vmem:[%s1293 + $0x78] sm:$0xf]
      %v1325 = vld [vmem:[%s1293 + $0x7c] sm:$0xf]
      %v1358 = vunpack.c.l.b16 %v1294
      %v1359 = vunpack.c.l.b16 %v1295
      %v1360 = vunpack.c.l.b16 %v1296
      %v1361 = vunpack.c.l.b16 %v1297
      %v1362 = vunpack.c.l.b16 %v1298
      %v1363 = vunpack.c.l.b16 %v1299
      %v1364 = vunpack.c.l.b16 %v1300
      %v1365 = vunpack.c.l.b16 %v1301
      %v1366 = vunpack.c.l.b16 %v1302
      %v1367 = vunpack.c.l.b16 %v1303
      %v1368 = vunpack.c.l.b16 %v1304
      %v1369 = vunpack.c.l.b16 %v1305
      %v1370 = vunpack.c.l.b16 %v1306
      %v1371 = vunpack.c.l.b16 %v1307
      %v1372 = vunpack.c.l.b16 %v1308
      %v1373 = vunpack.c.l.b16 %v1309
      %v1374 = vunpack.c.l.b16 %v1310
      %v1375 = vunpack.c.l.b16 %v1311
      %v1376 = vunpack.c.l.b16 %v1312
      %v1377 = vunpack.c.l.b16 %v1313
      %v1378 = vunpack.c.l.b16 %v1314
      %v1379 = vunpack.c.l.b16 %v1315
      %v1380 = vunpack.c.l.b16 %v1316
      %v1381 = vunpack.c.l.b16 %v1317
      %v1382 = vunpack.c.l.b16 %v1318
      %v1383 = vunpack.c.l.b16 %v1319
      %v1384 = vunpack.c.l.b16 %v1320
      %v1385 = vunpack.c.l.b16 %v1321
      %v1386 = vunpack.c.l.b16 %v1322
      %v1387 = vunpack.c.l.b16 %v1323
      %v1388 = vunpack.c.l.b16 %v1324
      %v1389 = vunpack.c.l.b16 %v1325
      %v1390 = vpack.c.b16 %v1359, %v1358
      %v1391 = vpack.c.b16 %v1361, %v1360
      %v1392 = vpack.c.b16 %v1363, %v1362
      %v1393 = vpack.c.b16 %v1365, %v1364
      %v1394 = vpack.c.b16 %v1367, %v1366
      %v1395 = vpack.c.b16 %v1369, %v1368
      %v1396 = vpack.c.b16 %v1371, %v1370
      %v1397 = vpack.c.b16 %v1373, %v1372
      %v1398 = vpack.c.b16 %v1375, %v1374
      %v1399 = vpack.c.b16 %v1377, %v1376
      %v1400 = vpack.c.b16 %v1379, %v1378
      %v1401 = vpack.c.b16 %v1381, %v1380
      %v1402 = vpack.c.b16 %v1383, %v1382
      %v1403 = vpack.c.b16 %v1385, %v1384
      %v1404 = vpack.c.b16 %v1387, %v1386
      %v1405 = vpack.c.b16 %v1389, %v1388
      %1422 = vmatprep.subr.bf16.mxu0 0
      %1423 = vmatpush1.bf16.msra.mxu0 %v1390
      %1424 = vmatprep.subr.bf16.mxu0 0
      %1425 = vmatpush1.bf16.msra.mxu0 %v1391
      %1426 = vmatprep.subr.bf16.mxu0 0
      %1427 = vmatpush1.bf16.msra.mxu0 %v1392
      %1428 = vmatprep.subr.bf16.mxu0 0
      %1429 = vmatpush1.bf16.msra.mxu0 %v1393
      %1430 = vmatprep.subr.bf16.mxu0 0
      %1431 = vmatpush1.bf16.msra.mxu0 %v1394
      %1432 = vmatprep.subr.bf16.mxu0 0
      %1433 = vmatpush1.bf16.msra.mxu0 %v1395
      %1434 = vmatprep.subr.bf16.mxu0 0
      %1435 = vmatpush1.bf16.msra.mxu0 %v1396
      %1436 = vmatprep.subr.bf16.mxu0 0
      %1437 = vmatpush1.bf16.msra.mxu0 %v1397
      %1438 = vmatprep.subr.bf16.mxu0 0
      %1439 = vmatpush1.bf16.msra.mxu0 %v1398
      %1440 = vmatprep.subr.bf16.mxu0 0
      %1441 = vmatpush1.bf16.msra.mxu0 %v1399
      %1442 = vmatprep.subr.bf16.mxu0 0
      %1443 = vmatpush1.bf16.msra.mxu0 %v1400
      %1444 = vmatprep.subr.bf16.mxu0 0
      %1445 = vmatpush1.bf16.msra.mxu0 %v1401
      %1446 = vmatprep.subr.bf16.mxu0 0
      %1447 = vmatpush1.bf16.msra.mxu0 %v1402
      %1448 = vmatprep.subr.bf16.mxu0 0
      %1449 = vmatpush1.bf16.msra.mxu0 %v1403
      %1450 = vmatprep.subr.bf16.mxu0 0
      %1451 = vmatpush1.bf16.msra.mxu0 %v1404
      %1452 = vmatprep.subr.bf16.mxu0 0
      %1453 = vmatpush1.bf16.msra.mxu0 %v1405
      %1454 = vmatprep.mubr.bf16.mxu0 %v1286
      %1455 = vmatmul.mubr.bf16.gmra.mrb[0].mxu0 %v1285
      %v1456 = vpop.f32.mrb[0].mxu0
      %v1457 = vadd.f32 0.0, %v1456
      %v1458 = vpop.f32.mrb[0].mxu0
      %v1459 = vpop.f32.mrb[0].mxu0
      %v1460 = vadd.f32 0.0, %v1459
      %v1461 = vpop.f32.mrb[0].mxu0
      %1462 = vmatprep.mubr.bf16.mxu0 %v1288
      %1463 = vmatmul.mubr.bf16.gmra.mrb[0].mxu0 %v1287
      %v1464 = vpop.f32.mrb[0].mxu0
      %v1465 = vadd.f32 0.0, %v1464
      %v1466 = vpop.f32.mrb[0].mxu0
      %v1467 = vpop.f32.mrb[0].mxu0
      %v1468 = vadd.f32 0.0, %v1467
      %v1469 = vpop.f32.mrb[0].mxu0
      %1470 = vmatprep.mubr.bf16.mxu0 %v1290
      %1471 = vmatmul.mubr.bf16.gmra.mrb[0].mxu0 %v1289
      %v1472 = vpop.f32.mrb[0].mxu0
      %v1473 = vadd.f32 0.0, %v1472
      %v1474 = vpop.f32.mrb[0].mxu0
      %v1475 = vpop.f32.mrb[0].mxu0
      %v1476 = vadd.f32 0.0, %v1475
      %v1477 = vpop.f32.mrb[0].mxu0
      %1478 = vmatprep.mubr.bf16.mxu0 %v1292
      %1479 = vmatmul.mubr.bf16.gmra.mrb[0].mxu0 %v1291
      %v1480 = vpop.f32.mrb[0].mxu0
      %v1481 = vadd.f32 0.0, %v1480
      %v1482 = vpop.f32.mrb[0].mxu0
      %v1483 = vpop.f32.mrb[0].mxu0
      %v1484 = vadd.f32 0.0, %v1483
      %v1485 = vpop.f32.mrb[0].mxu0
      %1486 = vdwg.mxu0
      %v1487 = vadd.f32 %v1126, %v1457
      %v1488 = vadd.f32 %v1129, %v1460
      %v1489 = vadd.f32 %v1134, %v1465
      %v1490 = vadd.f32 %v1137, %v1468
      %v1491 = vadd.f32 %v1142, %v1473
      %v1492 = vadd.f32 %v1145, %v1476
      %v1493 = vadd.f32 %v1150, %v1481
      %v1494 = vadd.f32 %v1153, %v1484
      %v1495 = vld [vmem:[%s575] sm:$0xff]
      %v1496 = vld [vmem:[%s575 + $0x8] sm:$0xff]
      %v1497 = vld [vmem:[%s575 + $0x20] sm:$0xff]
      %v1498 = vld [vmem:[%s575 + $0x28] sm:$0xff]
      %v1499 = vld [vmem:[%s575 + $0x40] sm:$0xff]
      %v1500 = vld [vmem:[%s575 + $0x48] sm:$0xff]
      %v1501 = vld [vmem:[%s575 + $0x60] sm:$0xff]
      %v1502 = vld [vmem:[%s575 + $0x68] sm:$0xff]
      %v1503 = vld [vmem:[%s575 + $0x80] sm:$0xff]
      %v1504 = vld [vmem:[%s575 + $0x88] sm:$0xff]
      %v1505 = vld [vmem:[%s575 + $0xa0] sm:$0xff]
      %v1506 = vld [vmem:[%s575 + $0xa8] sm:$0xff]
      %v1507 = vld [vmem:[%s575 + $0xc0] sm:$0xff]
      %v1508 = vld [vmem:[%s575 + $0xc8] sm:$0xff]
      %v1509 = vld [vmem:[%s575 + $0xe0] sm:$0xff]
      %v1510 = vld [vmem:[%s575 + $0xe8] sm:$0xff]
      %v1511 = vpack.c.bf16 %v1497, %v1495
      %v1512 = vpack.c.bf16 %v1498, %v1496
      %v1513 = vpack.c.bf16 %v1501, %v1499
      %v1514 = vpack.c.bf16 %v1502, %v1500
      %v1515 = vpack.c.bf16 %v1505, %v1503
      %v1516 = vpack.c.bf16 %v1506, %v1504
      %v1517 = vpack.c.bf16 %v1509, %v1507
      %v1518 = vpack.c.bf16 %v1510, %v1508
      %s1519 = scalar_lea.vmem %s3, 384
      %v1520 = vld [vmem:[%s1519] sm:$0xf]
      %v1521 = vld [vmem:[%s1519 + $0x4] sm:$0xf]
      %v1522 = vld [vmem:[%s1519 + $0x8] sm:$0xf]
      %v1523 = vld [vmem:[%s1519 + $0xc] sm:$0xf]
      %v1524 = vld [vmem:[%s1519 + $0x10] sm:$0xf]
      %v1525 = vld [vmem:[%s1519 + $0x14] sm:$0xf]
      %v1526 = vld [vmem:[%s1519 + $0x18] sm:$0xf]
      %v1527 = vld [vmem:[%s1519 + $0x1c] sm:$0xf]
      %v1528 = vld [vmem:[%s1519 + $0x20] sm:$0xf]
      %v1529 = vld [vmem:[%s1519 + $0x24] sm:$0xf]
      %v1530 = vld [vmem:[%s1519 + $0x28] sm:$0xf]
      %v1531 = vld [vmem:[%s1519 + $0x2c] sm:$0xf]
      %v1532 = vld [vmem:[%s1519 + $0x30] sm:$0xf]
      %v1533 = vld [vmem:[%s1519 + $0x34] sm:$0xf]
      %v1534 = vld [vmem:[%s1519 + $0x38] sm:$0xf]
      %v1535 = vld [vmem:[%s1519 + $0x3c] sm:$0xf]
      %v1536 = vld [vmem:[%s1519 + $0x40] sm:$0xf]
      %v1537 = vld [vmem:[%s1519 + $0x44] sm:$0xf]
      %v1538 = vld [vmem:[%s1519 + $0x48] sm:$0xf]
      %v1539 = vld [vmem:[%s1519 + $0x4c] sm:$0xf]
      %v1540 = vld [vmem:[%s1519 + $0x50] sm:$0xf]
      %v1541 = vld [vmem:[%s1519 + $0x54] sm:$0xf]
      %v1542 = vld [vmem:[%s1519 + $0x58] sm:$0xf]
      %v1543 = vld [vmem:[%s1519 + $0x5c] sm:$0xf]
      %v1544 = vld [vmem:[%s1519 + $0x60] sm:$0xf]
      %v1545 = vld [vmem:[%s1519 + $0x64] sm:$0xf]
      %v1546 = vld [vmem:[%s1519 + $0x68] sm:$0xf]
      %v1547 = vld [vmem:[%s1519 + $0x6c] sm:$0xf]
      %v1548 = vld [vmem:[%s1519 + $0x70] sm:$0xf]
      %v1549 = vld [vmem:[%s1519 + $0x74] sm:$0xf]
      %v1550 = vld [vmem:[%s1519 + $0x78] sm:$0xf]
      %v1551 = vld [vmem:[%s1519 + $0x7c] sm:$0xf]
      %v1584 = vunpack.c.l.b16 %v1520
      %v1585 = vunpack.c.l.b16 %v1521
      %v1586 = vunpack.c.l.b16 %v1522
      %v1587 = vunpack.c.l.b16 %v1523
      %v1588 = vunpack.c.l.b16 %v1524
      %v1589 = vunpack.c.l.b16 %v1525
      %v1590 = vunpack.c.l.b16 %v1526
      %v1591 = vunpack.c.l.b16 %v1527
      %v1592 = vunpack.c.l.b16 %v1528
      %v1593 = vunpack.c.l.b16 %v1529
      %v1594 = vunpack.c.l.b16 %v1530
      %v1595 = vunpack.c.l.b16 %v1531
      %v1596 = vunpack.c.l.b16 %v1532
      %v1597 = vunpack.c.l.b16 %v1533
      %v1598 = vunpack.c.l.b16 %v1534
      %v1599 = vunpack.c.l.b16 %v1535
      %v1600 = vunpack.c.l.b16 %v1536
      %v1601 = vunpack.c.l.b16 %v1537
      %v1602 = vunpack.c.l.b16 %v1538
      %v1603 = vunpack.c.l.b16 %v1539
      %v1604 = vunpack.c.l.b16 %v1540
      %v1605 = vunpack.c.l.b16 %v1541
      %v1606 = vunpack.c.l.b16 %v1542
      %v1607 = vunpack.c.l.b16 %v1543
      %v1608 = vunpack.c.l.b16 %v1544
      %v1609 = vunpack.c.l.b16 %v1545
      %v1610 = vunpack.c.l.b16 %v1546
      %v1611 = vunpack.c.l.b16 %v1547
      %v1612 = vunpack.c.l.b16 %v1548
      %v1613 = vunpack.c.l.b16 %v1549
      %v1614 = vunpack.c.l.b16 %v1550
      %v1615 = vunpack.c.l.b16 %v1551
      %v1616 = vpack.c.b16 %v1585, %v1584
      %v1617 = vpack.c.b16 %v1587, %v1586
      %v1618 = vpack.c.b16 %v1589, %v1588
      %v1619 = vpack.c.b16 %v1591, %v1590
      %v1620 = vpack.c.b16 %v1593, %v1592
      %v1621 = vpack.c.b16 %v1595, %v1594
      %v1622 = vpack.c.b16 %v1597, %v1596
      %v1623 = vpack.c.b16 %v1599, %v1598
      %v1624 = vpack.c.b16 %v1601, %v1600
      %v1625 = vpack.c.b16 %v1603, %v1602
      %v1626 = vpack.c.b16 %v1605, %v1604
      %v1627 = vpack.c.b16 %v1607, %v1606
      %v1628 = vpack.c.b16 %v1609, %v1608
      %v1629 = vpack.c.b16 %v1611, %v1610
      %v1630 = vpack.c.b16 %v1613, %v1612
      %v1631 = vpack.c.b16 %v1615, %v1614
      %1648 = vmatprep.subr.bf16.mxu0 0
      %1649 = vmatpush1.bf16.msra.mxu0 %v1616
      %1650 = vmatprep.subr.bf16.mxu0 0
      %1651 = vmatpush1.bf16.msra.mxu0 %v1617
      %1652 = vmatprep.subr.bf16.mxu0 0
      %1653 = vmatpush1.bf16.msra.mxu0 %v1618
      %1654 = vmatprep.subr.bf16.mxu0 0
      %1655 = vmatpush1.bf16.msra.mxu0 %v1619
      %1656 = vmatprep.subr.bf16.mxu0 0
      %1657 = vmatpush1.bf16.msra.mxu0 %v1620
      %1658 = vmatprep.subr.bf16.mxu0 0
      %1659 = vmatpush1.bf16.msra.mxu0 %v1621
      %1660 = vmatprep.subr.bf16.mxu0 0
      %1661 = vmatpush1.bf16.msra.mxu0 %v1622
      %1662 = vmatprep.subr.bf16.mxu0 0
      %1663 = vmatpush1.bf16.msra.mxu0 %v1623
      %1664 = vmatprep.subr.bf16.mxu0 0
      %1665 = vmatpush1.bf16.msra.mxu0 %v1624
      %1666 = vmatprep.subr.bf16.mxu0 0
      %1667 = vmatpush1.bf16.msra.mxu0 %v1625
      %1668 = vmatprep.subr.bf16.mxu0 0
      %1669 = vmatpush1.bf16.msra.mxu0 %v1626
      %1670 = vmatprep.subr.bf16.mxu0 0
      %1671 = vmatpush1.bf16.msra.mxu0 %v1627
      %1672 = vmatprep.subr.bf16.mxu0 0
      %1673 = vmatpush1.bf16.msra.mxu0 %v1628
      %1674 = vmatprep.subr.bf16.mxu0 0
      %1675 = vmatpush1.bf16.msra.mxu0 %v1629
      %1676 = vmatprep.subr.bf16.mxu0 0
      %1677 = vmatpush1.bf16.msra.mxu0 %v1630
      %1678 = vmatprep.subr.bf16.mxu0 0
      %1679 = vmatpush1.bf16.msra.mxu0 %v1631
      %1680 = vmatprep.mubr.bf16.mxu0 %v1512
      %1681 = vmatmul.mubr.bf16.gmra.mrb[0].mxu0 %v1511
      %v1682 = vpop.f32.mrb[0].mxu0
      %v1683 = vadd.f32 0.0, %v1682
      %v1684 = vpop.f32.mrb[0].mxu0
      %v1685 = vpop.f32.mrb[0].mxu0
      %v1686 = vadd.f32 0.0, %v1685
      %v1687 = vpop.f32.mrb[0].mxu0
      %1688 = vmatprep.mubr.bf16.mxu0 %v1514
      %1689 = vmatmul.mubr.bf16.gmra.mrb[0].mxu0 %v1513
      %v1690 = vpop.f32.mrb[0].mxu0
      %v1691 = vadd.f32 0.0, %v1690
      %v1692 = vpop.f32.mrb[0].mxu0
      %v1693 = vpop.f32.mrb[0].mxu0
      %v1694 = vadd.f32 0.0, %v1693
      %v1695 = vpop.f32.mrb[0].mxu0
      %1696 = vmatprep.mubr.bf16.mxu0 %v1516
      %1697 = vmatmul.mubr.bf16.gmra.mrb[0].mxu0 %v1515
      %v1698 = vpop.f32.mrb[0].mxu0
      %v1699 = vadd.f32 0.0, %v1698
      %v1700 = vpop.f32.mrb[0].mxu0
      %v1701 = vpop.f32.mrb[0].mxu0
      %v1702 = vadd.f32 0.0, %v1701
      %v1703 = vpop.f32.mrb[0].mxu0
      %1704 = vmatprep.mubr.bf16.mxu0 %v1518
      %1705 = vmatmul.mubr.bf16.gmra.mrb[0].mxu0 %v1517
      %v1706 = vpop.f32.mrb[0].mxu0
      %v1707 = vadd.f32 0.0, %v1706
      %v1708 = vpop.f32.mrb[0].mxu0
      %v1709 = vpop.f32.mrb[0].mxu0
      %v1710 = vadd.f32 0.0, %v1709
      %v1711 = vpop.f32.mrb[0].mxu0
      %1712 = vdwg.mxu0
      %v1713 = vadd.f32 %v1487, %v1683
      %v1714 = vadd.f32 %v1488, %v1686
      %v1715 = vadd.f32 %v1489, %v1691
      %v1716 = vadd.f32 %v1490, %v1694
      %v1717 = vadd.f32 %v1491, %v1699
      %v1718 = vadd.f32 %v1492, %v1702
      %v1719 = vadd.f32 %v1493, %v1707
      %v1720 = vadd.f32 %v1494, %v1710
      %v1721 = vld [vmem:[%s575] sm:$0xfe]
      %v1722 = vld [vmem:[%s575 + $0x8] sm:$0xfe]
      %v1723 = vld [vmem:[%s575 + $0x10] sm:$0x1]
      %v1724 = vld [vmem:[%s575 + $0x18] sm:$0x1]
      %v1725 = vld [vmem:[%s575 + $0x20] sm:$0xfe]
      %v1726 = vld [vmem:[%s575 + $0x28] sm:$0xfe]
      %v1727 = vld [vmem:[%s575 + $0x30] sm:$0x1]
      %v1728 = vld [vmem:[%s575 + $0x38] sm:$0x1]
      %v1729 = vld [vmem:[%s575 + $0x40] sm:$0xfe]
      %v1730 = vld [vmem:[%s575 + $0x48] sm:$0xfe]
      %v1731 = vld [vmem:[%s575 + $0x50] sm:$0x1]
      %v1732 = vld [vmem:[%s575 + $0x58] sm:$0x1]
      %v1733 = vld [vmem:[%s575 + $0x60] sm:$0xfe]
      %v1734 = vld [vmem:[%s575 + $0x68] sm:$0xfe]
      %v1735 = vld [vmem:[%s575 + $0x70] sm:$0x1]
      %v1736 = vld [vmem:[%s575 + $0x78] sm:$0x1]
      %v1737 = vld [vmem:[%s575 + $0x80] sm:$0xfe]
      %v1738 = vld [vmem:[%s575 + $0x88] sm:$0xfe]
      %v1739 = vld [vmem:[%s575 + $0x90] sm:$0x1]
      %v1740 = vld [vmem:[%s575 + $0x98] sm:$0x1]
      %v1741 = vld [vmem:[%s575 + $0xa0] sm:$0xfe]
      %v1742 = vld [vmem:[%s575 + $0xa8] sm:$0xfe]
      %v1743 = vld [vmem:[%s575 + $0xb0] sm:$0x1]
      %v1744 = vld [vmem:[%s575 + $0xb8] sm:$0x1]
      %v1745 = vld [vmem:[%s575 + $0xc0] sm:$0xfe]
      %v1746 = vld [vmem:[%s575 + $0xc8] sm:$0xfe]
      %v1747 = vld [vmem:[%s575 + $0xd0] sm:$0x1]
      %v1748 = vld [vmem:[%s575 + $0xd8] sm:$0x1]
      %v1749 = vld [vmem:[%s575 + $0xe0] sm:$0xfe]
      %v1750 = vld [vmem:[%s575 + $0xe8] sm:$0xfe]
      %v1751 = vld [vmem:[%s575 + $0xf0] sm:$0x1]
      %v1752 = vld [vmem:[%s575 + $0xf8] sm:$0x1]
      %v1785 = vrot.slane %v1721, 1
      %v1786 = vrot.slane %v1723, 1
      %v1787 = vsel %vm728, %v1785, %v1786
      %v1788 = vrot.slane %v1722, 1
      %v1789 = vrot.slane %v1724, 1
      %v1790 = vsel %vm728, %v1788, %v1789
      %v1791 = vrot.slane %v1725, 1
      %v1792 = vrot.slane %v1727, 1
      %v1793 = vsel %vm728, %v1791, %v1792
      %v1794 = vrot.slane %v1726, 1
      %v1795 = vrot.slane %v1728, 1
      %v1796 = vsel %vm728, %v1794, %v1795
      %v1797 = vrot.slane %v1729, 1
      %v1798 = vrot.slane %v1731, 1
      %v1799 = vsel %vm728, %v1797, %v1798
      %v1800 = vrot.slane %v1730, 1
      %v1801 = vrot.slane %v1732, 1
      %v1802 = vsel %vm728, %v1800, %v1801
      %v1803 = vrot.slane %v1733, 1
      %v1804 = vrot.slane %v1735, 1
      %v1805 = vsel %vm728, %v1803, %v1804
      %v1806 = vrot.slane %v1734, 1
      %v1807 = vrot.slane %v1736, 1
      %v1808 = vsel %vm728, %v1806, %v1807
      %v1809 = vrot.slane %v1737, 1
      %v1810 = vrot.slane %v1739, 1
      %v1811 = vsel %vm728, %v1809, %v1810
      %v1812 = vrot.slane %v1738, 1
      %v1813 = vrot.slane %v1740, 1
      %v1814 = vsel %vm728, %v1812, %v1813
      %v1815 = vrot.slane %v1741, 1
      %v1816 = vrot.slane %v1743, 1
      %v1817 = vsel %vm728, %v1815, %v1816
      %v1818 = vrot.slane %v1742, 1
      %v1819 = vrot.slane %v1744, 1
      %v1820 = vsel %vm728, %v1818, %v1819
      %v1821 = vrot.slane %v1745, 1
      %v1822 = vrot.slane %v1747, 1
      %v1823 = vsel %vm728, %v1821, %v1822
      %v1824 = vrot.slane %v1746, 1
      %v1825 = vrot.slane %v1748, 1
      %v1826 = vsel %vm728, %v1824, %v1825
      %v1827 = vrot.slane %v1749, 1
      %v1828 = vrot.slane %v1751, 1
      %v1829 = vsel %vm728, %v1827, %v1828
      %v1830 = vrot.slane %v1750, 1
      %v1831 = vrot.slane %v1752, 1
      %v1832 = vsel %vm728, %v1830, %v1831
      %v1849 = vpack.c.bf16 %v1793, %v1787
      %v1850 = vpack.c.bf16 %v1796, %v1790
      %v1851 = vpack.c.bf16 %v1805, %v1799
      %v1852 = vpack.c.bf16 %v1808, %v1802
      %v1853 = vpack.c.bf16 %v1817, %v1811
      %v1854 = vpack.c.bf16 %v1820, %v1814
      %v1855 = vpack.c.bf16 %v1829, %v1823
      %v1856 = vpack.c.bf16 %v1832, %v1826
      %s1857 = scalar_lea.vmem %s3, 512
      %v1858 = vld [vmem:[%s1857] sm:$0xf]
      %v1859 = vld [vmem:[%s1857 + $0x4] sm:$0xf]
      %v1860 = vld [vmem:[%s1857 + $0x8] sm:$0xf]
      %v1861 = vld [vmem:[%s1857 + $0xc] sm:$0xf]
      %v1862 = vld [vmem:[%s1857 + $0x10] sm:$0xf]
      %v1863 = vld [vmem:[%s1857 + $0x14] sm:$0xf]
      %v1864 = vld [vmem:[%s1857 + $0x18] sm:$0xf]
      %v1865 = vld [vmem:[%s1857 + $0x1c] sm:$0xf]
      %v1866 = vld [vmem:[%s1857 + $0x20] sm:$0xf]
      %v1867 = vld [vmem:[%s1857 + $0x24] sm:$0xf]
      %v1868 = vld [vmem:[%s1857 + $0x28] sm:$0xf]
      %v1869 = vld [vmem:[%s1857 + $0x2c] sm:$0xf]
      %v1870 = vld [vmem:[%s1857 + $0x30] sm:$0xf]
      %v1871 = vld [vmem:[%s1857 + $0x34] sm:$0xf]
      %v1872 = vld [vmem:[%s1857 + $0x38] sm:$0xf]
      %v1873 = vld [vmem:[%s1857 + $0x3c] sm:$0xf]
      %v1874 = vld [vmem:[%s1857 + $0x40] sm:$0xf]
      %v1875 = vld [vmem:[%s1857 + $0x44] sm:$0xf]
      %v1876 = vld [vmem:[%s1857 + $0x48] sm:$0xf]
      %v1877 = vld [vmem:[%s1857 + $0x4c] sm:$0xf]
      %v1878 = vld [vmem:[%s1857 + $0x50] sm:$0xf]
      %v1879 = vld [vmem:[%s1857 + $0x54] sm:$0xf]
      %v1880 = vld [vmem:[%s1857 + $0x58] sm:$0xf]
      %v1881 = vld [vmem:[%s1857 + $0x5c] sm:$0xf]
      %v1882 = vld [vmem:[%s1857 + $0x60] sm:$0xf]
      %v1883 = vld [vmem:[%s1857 + $0x64] sm:$0xf]
      %v1884 = vld [vmem:[%s1857 + $0x68] sm:$0xf]
      %v1885 = vld [vmem:[%s1857 + $0x6c] sm:$0xf]
      %v1886 = vld [vmem:[%s1857 + $0x70] sm:$0xf]
      %v1887 = vld [vmem:[%s1857 + $0x74] sm:$0xf]
      %v1888 = vld [vmem:[%s1857 + $0x78] sm:$0xf]
      %v1889 = vld [vmem:[%s1857 + $0x7c] sm:$0xf]
      %v1922 = vunpack.c.l.b16 %v1858
      %v1923 = vunpack.c.l.b16 %v1859
      %v1924 = vunpack.c.l.b16 %v1860
      %v1925 = vunpack.c.l.b16 %v1861
      %v1926 = vunpack.c.l.b16 %v1862
      %v1927 = vunpack.c.l.b16 %v1863
      %v1928 = vunpack.c.l.b16 %v1864
      %v1929 = vunpack.c.l.b16 %v1865
      %v1930 = vunpack.c.l.b16 %v1866
      %v1931 = vunpack.c.l.b16 %v1867
      %v1932 = vunpack.c.l.b16 %v1868
      %v1933 = vunpack.c.l.b16 %v1869
      %v1934 = vunpack.c.l.b16 %v1870
      %v1935 = vunpack.c.l.b16 %v1871
      %v1936 = vunpack.c.l.b16 %v1872
      %v1937 = vunpack.c.l.b16 %v1873
      %v1938 = vunpack.c.l.b16 %v1874
      %v1939 = vunpack.c.l.b16 %v1875
      %v1940 = vunpack.c.l.b16 %v1876
      %v1941 = vunpack.c.l.b16 %v1877
      %v1942 = vunpack.c.l.b16 %v1878
      %v1943 = vunpack.c.l.b16 %v1879
      %v1944 = vunpack.c.l.b16 %v1880
      %v1945 = vunpack.c.l.b16 %v1881
      %v1946 = vunpack.c.l.b16 %v1882
      %v1947 = vunpack.c.l.b16 %v1883
      %v1948 = vunpack.c.l.b16 %v1884
      %v1949 = vunpack.c.l.b16 %v1885
      %v1950 = vunpack.c.l.b16 %v1886
      %v1951 = vunpack.c.l.b16 %v1887
      %v1952 = vunpack.c.l.b16 %v1888
      %v1953 = vunpack.c.l.b16 %v1889
      %v1954 = vpack.c.b16 %v1923, %v1922
      %v1955 = vpack.c.b16 %v1925, %v1924
      %v1956 = vpack.c.b16 %v1927, %v1926
      %v1957 = vpack.c.b16 %v1929, %v1928
      %v1958 = vpack.c.b16 %v1931, %v1930
      %v1959 = vpack.c.b16 %v1933, %v1932
      %v1960 = vpack.c.b16 %v1935, %v1934
      %v1961 = vpack.c.b16 %v1937, %v1936
      %v1962 = vpack.c.b16 %v1939, %v1938
      %v1963 = vpack.c.b16 %v1941, %v1940
      %v1964 = vpack.c.b16 %v1943, %v1942
      %v1965 = vpack.c.b16 %v1945, %v1944
      %v1966 = vpack.c.b16 %v1947, %v1946
      %v1967 = vpack.c.b16 %v1949, %v1948
      %v1968 = vpack.c.b16 %v1951, %v1950
      %v1969 = vpack.c.b16 %v1953, %v1952
      %1986 = vmatprep.subr.bf16.mxu0 0
      %1987 = vmatpush1.bf16.msra.mxu0 %v1954
      %1988 = vmatprep.subr.bf16.mxu0 0
      %1989 = vmatpush1.bf16.msra.mxu0 %v1955
      %1990 = vmatprep.subr.bf16.mxu0 0
      %1991 = vmatpush1.bf16.msra.mxu0 %v1956
      %1992 = vmatprep.subr.bf16.mxu0 0
      %1993 = vmatpush1.bf16.msra.mxu0 %v1957
      %1994 = vmatprep.subr.bf16.mxu0 0
      %1995 = vmatpush1.bf16.msra.mxu0 %v1958
      %1996 = vmatprep.subr.bf16.mxu0 0
      %1997 = vmatpush1.bf16.msra.mxu0 %v1959
      %1998 = vmatprep.subr.bf16.mxu0 0
      %1999 = vmatpush1.bf16.msra.mxu0 %v1960
      %2000 = vmatprep.subr.bf16.mxu0 0
      %2001 = vmatpush1.bf16.msra.mxu0 %v1961
      %2002 = vmatprep.subr.bf16.mxu0 0
      %2003 = vmatpush1.bf16.msra.mxu0 %v1962
      %2004 = vmatprep.subr.bf16.mxu0 0
      %2005 = vmatpush1.bf16.msra.mxu0 %v1963
      %2006 = vmatprep.subr.bf16.mxu0 0
      %2007 = vmatpush1.bf16.msra.mxu0 %v1964
      %2008 = vmatprep.subr.bf16.mxu0 0
      %2009 = vmatpush1.bf16.msra.mxu0 %v1965
      %2010 = vmatprep.subr.bf16.mxu0 0
      %2011 = vmatpush1.bf16.msra.mxu0 %v1966
      %2012 = vmatprep.subr.bf16.mxu0 0
      %2013 = vmatpush1.bf16.msra.mxu0 %v1967
      %2014 = vmatprep.subr.bf16.mxu0 0
      %2015 = vmatpush1.bf16.msra.mxu0 %v1968
      %2016 = vmatprep.subr.bf16.mxu0 0
      %2017 = vmatpush1.bf16.msra.mxu0 %v1969
      %2018 = vmatprep.mubr.bf16.mxu0 %v1850
      %2019 = vmatmul.mubr.bf16.gmra.mrb[0].mxu0 %v1849
      %v2020 = vpop.f32.mrb[0].mxu0
      %v2021 = vadd.f32 0.0, %v2020
      %v2022 = vpop.f32.mrb[0].mxu0
      %v2023 = vpop.f32.mrb[0].mxu0
      %v2024 = vadd.f32 0.0, %v2023
      %v2025 = vpop.f32.mrb[0].mxu0
      %2026 = vmatprep.mubr.bf16.mxu0 %v1852
      %2027 = vmatmul.mubr.bf16.gmra.mrb[0].mxu0 %v1851
      %v2028 = vpop.f32.mrb[0].mxu0
      %v2029 = vadd.f32 0.0, %v2028
      %v2030 = vpop.f32.mrb[0].mxu0
      %v2031 = vpop.f32.mrb[0].mxu0
      %v2032 = vadd.f32 0.0, %v2031
      %v2033 = vpop.f32.mrb[0].mxu0
      %2034 = vmatprep.mubr.bf16.mxu0 %v1854
      %2035 = vmatmul.mubr.bf16.gmra.mrb[0].mxu0 %v1853
      %v2036 = vpop.f32.mrb[0].mxu0
      %v2037 = vadd.f32 0.0, %v2036
      %v2038 = vpop.f32.mrb[0].mxu0
      %v2039 = vpop.f32.mrb[0].mxu0
      %v2040 = vadd.f32 0.0, %v2039
      %v2041 = vpop.f32.mrb[0].mxu0
      %2042 = vmatprep.mubr.bf16.mxu0 %v1856
      %2043 = vmatmul.mubr.bf16.gmra.mrb[0].mxu0 %v1855
      %v2044 = vpop.f32.mrb[0].mxu0
      %v2045 = vadd.f32 0.0, %v2044
      %v2046 = vpop.f32.mrb[0].mxu0
      %v2047 = vpop.f32.mrb[0].mxu0
      %v2048 = vadd.f32 0.0, %v2047
      %v2049 = vpop.f32.mrb[0].mxu0
      %2050 = vdwg.mxu0
      %v2051 = vadd.f32 %v1713, %v2021
      %v2052 = vadd.f32 %v1714, %v2024
      %v2053 = vadd.f32 %v1715, %v2029
      %v2054 = vadd.f32 %v1716, %v2032
      %v2055 = vadd.f32 %v1717, %v2037
      %v2056 = vadd.f32 %v1718, %v2040
      %v2057 = vadd.f32 %v1719, %v2045
      %v2058 = vadd.f32 %v1720, %v2048
      %v2059 = vld [vmem:[%s575] sm:$0xfc]
      %v2060 = vld [vmem:[%s575 + $0x8] sm:$0xfc]
      %v2061 = vld [vmem:[%s575 + $0x10] sm:$0x3]
      %v2062 = vld [vmem:[%s575 + $0x18] sm:$0x3]
      %v2063 = vld [vmem:[%s575 + $0x20] sm:$0xfc]
      %v2064 = vld [vmem:[%s575 + $0x28] sm:$0xfc]
      %v2065 = vld [vmem:[%s575 + $0x30] sm:$0x3]
      %v2066 = vld [vmem:[%s575 + $0x38] sm:$0x3]
      %v2067 = vld [vmem:[%s575 + $0x40] sm:$0xfc]
      %v2068 = vld [vmem:[%s575 + $0x48] sm:$0xfc]
      %v2069 = vld [vmem:[%s575 + $0x50] sm:$0x3]
      %v2070 = vld [vmem:[%s575 + $0x58] sm:$0x3]
      %v2071 = vld [vmem:[%s575 + $0x60] sm:$0xfc]
      %v2072 = vld [vmem:[%s575 + $0x68] sm:$0xfc]
      %v2073 = vld [vmem:[%s575 + $0x70] sm:$0x3]
      %v2074 = vld [vmem:[%s575 + $0x78] sm:$0x3]
      %v2075 = vld [vmem:[%s575 + $0x80] sm:$0xfc]
      %v2076 = vld [vmem:[%s575 + $0x88] sm:$0xfc]
      %v2077 = vld [vmem:[%s575 + $0x90] sm:$0x3]
      %v2078 = vld [vmem:[%s575 + $0x98] sm:$0x3]
      %v2079 = vld [vmem:[%s575 + $0xa0] sm:$0xfc]
      %v2080 = vld [vmem:[%s575 + $0xa8] sm:$0xfc]
      %v2081 = vld [vmem:[%s575 + $0xb0] sm:$0x3]
      %v2082 = vld [vmem:[%s575 + $0xb8] sm:$0x3]
      %v2083 = vld [vmem:[%s575 + $0xc0] sm:$0xfc]
      %v2084 = vld [vmem:[%s575 + $0xc8] sm:$0xfc]
      %v2085 = vld [vmem:[%s575 + $0xd0] sm:$0x3]
      %v2086 = vld [vmem:[%s575 + $0xd8] sm:$0x3]
      %v2087 = vld [vmem:[%s575 + $0xe0] sm:$0xfc]
      %v2088 = vld [vmem:[%s575 + $0xe8] sm:$0xfc]
      %v2089 = vld [vmem:[%s575 + $0xf0] sm:$0x3]
      %v2090 = vld [vmem:[%s575 + $0xf8] sm:$0x3]
      %v2123 = vrot.slane %v2059, 2
      %v2124 = vrot.slane %v2061, 2
      %v2125 = vsel %vm1220, %v2123, %v2124
      %v2126 = vrot.slane %v2060, 2
      %v2127 = vrot.slane %v2062, 2
      %v2128 = vsel %vm1220, %v2126, %v2127
      %v2129 = vrot.slane %v2063, 2
      %v2130 = vrot.slane %v2065, 2
      %v2131 = vsel %vm1220, %v2129, %v2130
      %v2132 = vrot.slane %v2064, 2
      %v2133 = vrot.slane %v2066, 2
      %v2134 = vsel %vm1220, %v2132, %v2133
      %v2135 = vrot.slane %v2067, 2
      %v2136 = vrot.slane %v2069, 2
      %v2137 = vsel %vm1220, %v2135, %v2136
      %v2138 = vrot.slane %v2068, 2
      %v2139 = vrot.slane %v2070, 2
      %v2140 = vsel %vm1220, %v2138, %v2139
      %v2141 = vrot.slane %v2071, 2
      %v2142 = vrot.slane %v2073, 2
      %v2143 = vsel %vm1220, %v2141, %v2142
      %v2144 = vrot.slane %v2072, 2
      %v2145 = vrot.slane %v2074, 2
      %v2146 = vsel %vm1220, %v2144, %v2145
      %v2147 = vrot.slane %v2075, 2
      %v2148 = vrot.slane %v2077, 2
      %v2149 = vsel %vm1220, %v2147, %v2148
      %v2150 = vrot.slane %v2076, 2
      %v2151 = vrot.slane %v2078, 2
      %v2152 = vsel %vm1220, %v2150, %v2151
      %v2153 = vrot.slane %v2079, 2
      %v2154 = vrot.slane %v2081, 2
      %v2155 = vsel %vm1220, %v2153, %v2154
      %v2156 = vrot.slane %v2080, 2
      %v2157 = vrot.slane %v2082, 2
      %v2158 = vsel %vm1220, %v2156, %v2157
      %v2159 = vrot.slane %v2083, 2
      %v2160 = vrot.slane %v2085, 2
      %v2161 = vsel %vm1220, %v2159, %v2160
      %v2162 = vrot.slane %v2084, 2
      %v2163 = vrot.slane %v2086, 2
      %v2164 = vsel %vm1220, %v2162, %v2163
      %v2165 = vrot.slane %v2087, 2
      %v2166 = vrot.slane %v2089, 2
      %v2167 = vsel %vm1220, %v2165, %v2166
      %v2168 = vrot.slane %v2088, 2
      %v2169 = vrot.slane %v2090, 2
      %v2170 = vsel %vm1220, %v2168, %v2169
      %v2187 = vpack.c.bf16 %v2131, %v2125
      %v2188 = vpack.c.bf16 %v2134, %v2128
      %v2189 = vpack.c.bf16 %v2143, %v2137
      %v2190 = vpack.c.bf16 %v2146, %v2140
      %v2191 = vpack.c.bf16 %v2155, %v2149
      %v2192 = vpack.c.bf16 %v2158, %v2152
      %v2193 = vpack.c.bf16 %v2167, %v2161
      %v2194 = vpack.c.bf16 %v2170, %v2164
      %s2195 = scalar_lea.vmem %s3, 640
      %v2196 = vld [vmem:[%s2195] sm:$0xf]
      %v2197 = vld [vmem:[%s2195 + $0x4] sm:$0xf]
      %v2198 = vld [vmem:[%s2195 + $0x8] sm:$0xf]
      %v2199 = vld [vmem:[%s2195 + $0xc] sm:$0xf]
      %v2200 = vld [vmem:[%s2195 + $0x10] sm:$0xf]
      %v2201 = vld [vmem:[%s2195 + $0x14] sm:$0xf]
      %v2202 = vld [vmem:[%s2195 + $0x18] sm:$0xf]
      %v2203 = vld [vmem:[%s2195 + $0x1c] sm:$0xf]
      %v2204 = vld [vmem:[%s2195 + $0x20] sm:$0xf]
      %v2205 = vld [vmem:[%s2195 + $0x24] sm:$0xf]
      %v2206 = vld [vmem:[%s2195 + $0x28] sm:$0xf]
      %v2207 = vld [vmem:[%s2195 + $0x2c] sm:$0xf]
      %v2208 = vld [vmem:[%s2195 + $0x30] sm:$0xf]
      %v2209 = vld [vmem:[%s2195 + $0x34] sm:$0xf]
      %v2210 = vld [vmem:[%s2195 + $0x38] sm:$0xf]
      %v2211 = vld [vmem:[%s2195 + $0x3c] sm:$0xf]
      %v2212 = vld [vmem:[%s2195 + $0x40] sm:$0xf]
      %v2213 = vld [vmem:[%s2195 + $0x44] sm:$0xf]
      %v2214 = vld [vmem:[%s2195 + $0x48] sm:$0xf]
      %v2215 = vld [vmem:[%s2195 + $0x4c] sm:$0xf]
      %v2216 = vld [vmem:[%s2195 + $0x50] sm:$0xf]
      %v2217 = vld [vmem:[%s2195 + $0x54] sm:$0xf]
      %v2218 = vld [vmem:[%s2195 + $0x58] sm:$0xf]
      %v2219 = vld [vmem:[%s2195 + $0x5c] sm:$0xf]
      %v2220 = vld [vmem:[%s2195 + $0x60] sm:$0xf]
      %v2221 = vld [vmem:[%s2195 + $0x64] sm:$0xf]
      %v2222 = vld [vmem:[%s2195 + $0x68] sm:$0xf]
      %v2223 = vld [vmem:[%s2195 + $0x6c] sm:$0xf]
      %v2224 = vld [vmem:[%s2195 + $0x70] sm:$0xf]
      %v2225 = vld [vmem:[%s2195 + $0x74] sm:$0xf]
      %v2226 = vld [vmem:[%s2195 + $0x78] sm:$0xf]
      %v2227 = vld [vmem:[%s2195 + $0x7c] sm:$0xf]
      %v2260 = vunpack.c.l.b16 %v2196
      %v2261 = vunpack.c.l.b16 %v2197
      %v2262 = vunpack.c.l.b16 %v2198
      %v2263 = vunpack.c.l.b16 %v2199
      %v2264 = vunpack.c.l.b16 %v2200
      %v2265 = vunpack.c.l.b16 %v2201
      %v2266 = vunpack.c.l.b16 %v2202
      %v2267 = vunpack.c.l.b16 %v2203
      %v2268 = vunpack.c.l.b16 %v2204
      %v2269 = vunpack.c.l.b16 %v2205
      %v2270 = vunpack.c.l.b16 %v2206
      %v2271 = vunpack.c.l.b16 %v2207
      %v2272 = vunpack.c.l.b16 %v2208
      %v2273 = vunpack.c.l.b16 %v2209
      %v2274 = vunpack.c.l.b16 %v2210
      %v2275 = vunpack.c.l.b16 %v2211
      %v2276 = vunpack.c.l.b16 %v2212
      %v2277 = vunpack.c.l.b16 %v2213
      %v2278 = vunpack.c.l.b16 %v2214
      %v2279 = vunpack.c.l.b16 %v2215
      %v2280 = vunpack.c.l.b16 %v2216
      %v2281 = vunpack.c.l.b16 %v2217
      %v2282 = vunpack.c.l.b16 %v2218
      %v2283 = vunpack.c.l.b16 %v2219
      %v2284 = vunpack.c.l.b16 %v2220
      %v2285 = vunpack.c.l.b16 %v2221
      %v2286 = vunpack.c.l.b16 %v2222
      %v2287 = vunpack.c.l.b16 %v2223
      %v2288 = vunpack.c.l.b16 %v2224
      %v2289 = vunpack.c.l.b16 %v2225
      %v2290 = vunpack.c.l.b16 %v2226
      %v2291 = vunpack.c.l.b16 %v2227
      %v2292 = vpack.c.b16 %v2261, %v2260
      %v2293 = vpack.c.b16 %v2263, %v2262
      %v2294 = vpack.c.b16 %v2265, %v2264
      %v2295 = vpack.c.b16 %v2267, %v2266
      %v2296 = vpack.c.b16 %v2269, %v2268
      %v2297 = vpack.c.b16 %v2271, %v2270
      %v2298 = vpack.c.b16 %v2273, %v2272
      %v2299 = vpack.c.b16 %v2275, %v2274
      %v2300 = vpack.c.b16 %v2277, %v2276
      %v2301 = vpack.c.b16 %v2279, %v2278
      %v2302 = vpack.c.b16 %v2281, %v2280
      %v2303 = vpack.c.b16 %v2283, %v2282
      %v2304 = vpack.c.b16 %v2285, %v2284
      %v2305 = vpack.c.b16 %v2287, %v2286
      %v2306 = vpack.c.b16 %v2289, %v2288
      %v2307 = vpack.c.b16 %v2291, %v2290
      %2324 = vmatprep.subr.bf16.mxu0 0
      %2325 = vmatpush1.bf16.msra.mxu0 %v2292
      %2326 = vmatprep.subr.bf16.mxu0 0
      %2327 = vmatpush1.bf16.msra.mxu0 %v2293
      %2328 = vmatprep.subr.bf16.mxu0 0
      %2329 = vmatpush1.bf16.msra.mxu0 %v2294
      %2330 = vmatprep.subr.bf16.mxu0 0
      %2331 = vmatpush1.bf16.msra.mxu0 %v2295
      %2332 = vmatprep.subr.bf16.mxu0 0
      %2333 = vmatpush1.bf16.msra.mxu0 %v2296
      %2334 = vmatprep.subr.bf16.mxu0 0
      %2335 = vmatpush1.bf16.msra.mxu0 %v2297
      %2336 = vmatprep.subr.bf16.mxu0 0
      %2337 = vmatpush1.bf16.msra.mxu0 %v2298
      %2338 = vmatprep.subr.bf16.mxu0 0
      %2339 = vmatpush1.bf16.msra.mxu0 %v2299
      %2340 = vmatprep.subr.bf16.mxu0 0
      %2341 = vmatpush1.bf16.msra.mxu0 %v2300
      %2342 = vmatprep.subr.bf16.mxu0 0
      %2343 = vmatpush1.bf16.msra.mxu0 %v2301
      %2344 = vmatprep.subr.bf16.mxu0 0
      %2345 = vmatpush1.bf16.msra.mxu0 %v2302
      %2346 = vmatprep.subr.bf16.mxu0 0
      %2347 = vmatpush1.bf16.msra.mxu0 %v2303
      %2348 = vmatprep.subr.bf16.mxu0 0
      %2349 = vmatpush1.bf16.msra.mxu0 %v2304
      %2350 = vmatprep.subr.bf16.mxu0 0
      %2351 = vmatpush1.bf16.msra.mxu0 %v2305
      %2352 = vmatprep.subr.bf16.mxu0 0
      %2353 = vmatpush1.bf16.msra.mxu0 %v2306
      %2354 = vmatprep.subr.bf16.mxu0 0
      %2355 = vmatpush1.bf16.msra.mxu0 %v2307
      %2356 = vmatprep.mubr.bf16.mxu0 %v2188
      %2357 = vmatmul.mubr.bf16.gmra.mrb[0].mxu0 %v2187
      %v2358 = vpop.f32.mrb[0].mxu0
      %v2359 = vadd.f32 0.0, %v2358
      %v2360 = vpop.f32.mrb[0].mxu0
      %v2361 = vpop.f32.mrb[0].mxu0
      %v2362 = vadd.f32 0.0, %v2361
      %v2363 = vpop.f32.mrb[0].mxu0
      %2364 = vmatprep.mubr.bf16.mxu0 %v2190
      %2365 = vmatmul.mubr.bf16.gmra.mrb[0].mxu0 %v2189
      %v2366 = vpop.f32.mrb[0].mxu0
      %v2367 = vadd.f32 0.0, %v2366
      %v2368 = vpop.f32.mrb[0].mxu0
      %v2369 = vpop.f32.mrb[0].mxu0
      %v2370 = vadd.f32 0.0, %v2369
      %v2371 = vpop.f32.mrb[0].mxu0
      %2372 = vmatprep.mubr.bf16.mxu0 %v2192
      %2373 = vmatmul.mubr.bf16.gmra.mrb[0].mxu0 %v2191
      %v2374 = vpop.f32.mrb[0].mxu0
      %v2375 = vadd.f32 0.0, %v2374
      %v2376 = vpop.f32.mrb[0].mxu0
      %v2377 = vpop.f32.mrb[0].mxu0
      %v2378 = vadd.f32 0.0, %v2377
      %v2379 = vpop.f32.mrb[0].mxu0
      %2380 = vmatprep.mubr.bf16.mxu0 %v2194
      %2381 = vmatmul.mubr.bf16.gmra.mrb[0].mxu0 %v2193
      %v2382 = vpop.f32.mrb[0].mxu0
      %v2383 = vadd.f32 0.0, %v2382
      %v2384 = vpop.f32.mrb[0].mxu0
      %v2385 = vpop.f32.mrb[0].mxu0
      %v2386 = vadd.f32 0.0, %v2385
      %v2387 = vpop.f32.mrb[0].mxu0
      %2388 = vdwg.mxu0
      %v2389 = vadd.f32 %v2051, %v2359
      %v2390 = vadd.f32 %v2052, %v2362
      %v2391 = vadd.f32 %v2053, %v2367
      %v2392 = vadd.f32 %v2054, %v2370
      %v2393 = vadd.f32 %v2055, %v2375
      %v2394 = vadd.f32 %v2056, %v2378
      %v2395 = vadd.f32 %v2057, %v2383
      %v2396 = vadd.f32 %v2058, %v2386
      %s2397 = scalar_lea.vmem [#allocation2], 64
      %v2398 = vld [vmem:[%s2397] sm:$0xff]
      %v2399 = vld [vmem:[%s2397 + $0x8] sm:$0xff]
      %v2400 = vld [vmem:[%s2397 + $0x20] sm:$0xff]
      %v2401 = vld [vmem:[%s2397 + $0x28] sm:$0xff]
      %v2402 = vld [vmem:[%s2397 + $0x40] sm:$0xff]
      %v2403 = vld [vmem:[%s2397 + $0x48] sm:$0xff]
      %v2404 = vld [vmem:[%s2397 + $0x60] sm:$0xff]
      %v2405 = vld [vmem:[%s2397 + $0x68] sm:$0xff]
      %v2406 = vld [vmem:[%s2397 + $0x80] sm:$0xff]
      %v2407 = vld [vmem:[%s2397 + $0x88] sm:$0xff]
      %v2408 = vld [vmem:[%s2397 + $0xa0] sm:$0xff]
      %v2409 = vld [vmem:[%s2397 + $0xa8] sm:$0xff]
      %v2410 = vld [vmem:[%s2397 + $0xc0] sm:$0xff]
      %v2411 = vld [vmem:[%s2397 + $0xc8] sm:$0xff]
      %v2412 = vld [vmem:[%s2397 + $0xe0] sm:$0xff]
      %v2413 = vld [vmem:[%s2397 + $0xe8] sm:$0xff]
      %v2414 = vpack.c.bf16 %v2400, %v2398
      %v2415 = vpack.c.bf16 %v2401, %v2399
      %v2416 = vpack.c.bf16 %v2404, %v2402
      %v2417 = vpack.c.bf16 %v2405, %v2403
      %v2418 = vpack.c.bf16 %v2408, %v2406
      %v2419 = vpack.c.bf16 %v2409, %v2407
      %v2420 = vpack.c.bf16 %v2412, %v2410
      %v2421 = vpack.c.bf16 %v2413, %v2411
      %s2422 = scalar_lea.vmem %s3, 768
      %v2423 = vld [vmem:[%s2422] sm:$0xf]
      %v2424 = vld [vmem:[%s2422 + $0x4] sm:$0xf]
      %v2425 = vld [vmem:[%s2422 + $0x8] sm:$0xf]
      %v2426 = vld [vmem:[%s2422 + $0xc] sm:$0xf]
      %v2427 = vld [vmem:[%s2422 + $0x10] sm:$0xf]
      %v2428 = vld [vmem:[%s2422 + $0x14] sm:$0xf]
      %v2429 = vld [vmem:[%s2422 + $0x18] sm:$0xf]
      %v2430 = vld [vmem:[%s2422 + $0x1c] sm:$0xf]
      %v2431 = vld [vmem:[%s2422 + $0x20] sm:$0xf]
      %v2432 = vld [vmem:[%s2422 + $0x24] sm:$0xf]
      %v2433 = vld [vmem:[%s2422 + $0x28] sm:$0xf]
      %v2434 = vld [vmem:[%s2422 + $0x2c] sm:$0xf]
      %v2435 = vld [vmem:[%s2422 + $0x30] sm:$0xf]
      %v2436 = vld [vmem:[%s2422 + $0x34] sm:$0xf]
      %v2437 = vld [vmem:[%s2422 + $0x38] sm:$0xf]
      %v2438 = vld [vmem:[%s2422 + $0x3c] sm:$0xf]
      %v2439 = vld [vmem:[%s2422 + $0x40] sm:$0xf]
      %v2440 = vld [vmem:[%s2422 + $0x44] sm:$0xf]
      %v2441 = vld [vmem:[%s2422 + $0x48] sm:$0xf]
      %v2442 = vld [vmem:[%s2422 + $0x4c] sm:$0xf]
      %v2443 = vld [vmem:[%s2422 + $0x50] sm:$0xf]
      %v2444 = vld [vmem:[%s2422 + $0x54] sm:$0xf]
      %v2445 = vld [vmem:[%s2422 + $0x58] sm:$0xf]
      %v2446 = vld [vmem:[%s2422 + $0x5c] sm:$0xf]
      %v2447 = vld [vmem:[%s2422 + $0x60] sm:$0xf]
      %v2448 = vld [vmem:[%s2422 + $0x64] sm:$0xf]
      %v2449 = vld [vmem:[%s2422 + $0x68] sm:$0xf]
      %v2450 = vld [vmem:[%s2422 + $0x6c] sm:$0xf]
      %v2451 = vld [vmem:[%s2422 + $0x70] sm:$0xf]
      %v2452 = vld [vmem:[%s2422 + $0x74] sm:$0xf]
      %v2453 = vld [vmem:[%s2422 + $0x78] sm:$0xf]
      %v2454 = vld [vmem:[%s2422 + $0x7c] sm:$0xf]
      %v2487 = vunpack.c.l.b16 %v2423
      %v2488 = vunpack.c.l.b16 %v2424
      %v2489 = vunpack.c.l.b16 %v2425
      %v2490 = vunpack.c.l.b16 %v2426
      %v2491 = vunpack.c.l.b16 %v2427
      %v2492 = vunpack.c.l.b16 %v2428
      %v2493 = vunpack.c.l.b16 %v2429
      %v2494 = vunpack.c.l.b16 %v2430
      %v2495 = vunpack.c.l.b16 %v2431
      %v2496 = vunpack.c.l.b16 %v2432
      %v2497 = vunpack.c.l.b16 %v2433
      %v2498 = vunpack.c.l.b16 %v2434
      %v2499 = vunpack.c.l.b16 %v2435
      %v2500 = vunpack.c.l.b16 %v2436
      %v2501 = vunpack.c.l.b16 %v2437
      %v2502 = vunpack.c.l.b16 %v2438
      %v2503 = vunpack.c.l.b16 %v2439
      %v2504 = vunpack.c.l.b16 %v2440
      %v2505 = vunpack.c.l.b16 %v2441
      %v2506 = vunpack.c.l.b16 %v2442
      %v2507 = vunpack.c.l.b16 %v2443
      %v2508 = vunpack.c.l.b16 %v2444
      %v2509 = vunpack.c.l.b16 %v2445
      %v2510 = vunpack.c.l.b16 %v2446
      %v2511 = vunpack.c.l.b16 %v2447
      %v2512 = vunpack.c.l.b16 %v2448
      %v2513 = vunpack.c.l.b16 %v2449
      %v2514 = vunpack.c.l.b16 %v2450
      %v2515 = vunpack.c.l.b16 %v2451
      %v2516 = vunpack.c.l.b16 %v2452
      %v2517 = vunpack.c.l.b16 %v2453
      %v2518 = vunpack.c.l.b16 %v2454
      %v2519 = vpack.c.b16 %v2488, %v2487
      %v2520 = vpack.c.b16 %v2490, %v2489
      %v2521 = vpack.c.b16 %v2492, %v2491
      %v2522 = vpack.c.b16 %v2494, %v2493
      %v2523 = vpack.c.b16 %v2496, %v2495
      %v2524 = vpack.c.b16 %v2498, %v2497
      %v2525 = vpack.c.b16 %v2500, %v2499
      %v2526 = vpack.c.b16 %v2502, %v2501
      %v2527 = vpack.c.b16 %v2504, %v2503
      %v2528 = vpack.c.b16 %v2506, %v2505
      %v2529 = vpack.c.b16 %v2508, %v2507
      %v2530 = vpack.c.b16 %v2510, %v2509
      %v2531 = vpack.c.b16 %v2512, %v2511
      %v2532 = vpack.c.b16 %v2514, %v2513
      %v2533 = vpack.c.b16 %v2516, %v2515
      %v2534 = vpack.c.b16 %v2518, %v2517
      %2551 = vmatprep.subr.bf16.mxu0 0
      %2552 = vmatpush1.bf16.msra.mxu0 %v2519
      %2553 = vmatprep.subr.bf16.mxu0 0
      %2554 = vmatpush1.bf16.msra.mxu0 %v2520
      %2555 = vmatprep.subr.bf16.mxu0 0
      %2556 = vmatpush1.bf16.msra.mxu0 %v2521
      %2557 = vmatprep.subr.bf16.mxu0 0
      %2558 = vmatpush1.bf16.msra.mxu0 %v2522
      %2559 = vmatprep.subr.bf16.mxu0 0
      %2560 = vmatpush1.bf16.msra.mxu0 %v2523
      %2561 = vmatprep.subr.bf16.mxu0 0
      %2562 = vmatpush1.bf16.msra.mxu0 %v2524
      %2563 = vmatprep.subr.bf16.mxu0 0
      %2564 = vmatpush1.bf16.msra.mxu0 %v2525
      %2565 = vmatprep.subr.bf16.mxu0 0
      %2566 = vmatpush1.bf16.msra.mxu0 %v2526
      %2567 = vmatprep.subr.bf16.mxu0 0
      %2568 = vmatpush1.bf16.msra.mxu0 %v2527
      %2569 = vmatprep.subr.bf16.mxu0 0
      %2570 = vmatpush1.bf16.msra.mxu0 %v2528
      %2571 = vmatprep.subr.bf16.mxu0 0
      %2572 = vmatpush1.bf16.msra.mxu0 %v2529
      %2573 = vmatprep.subr.bf16.mxu0 0
      %2574 = vmatpush1.bf16.msra.mxu0 %v2530
      %2575 = vmatprep.subr.bf16.mxu0 0
      %2576 = vmatpush1.bf16.msra.mxu0 %v2531
      %2577 = vmatprep.subr.bf16.mxu0 0
      %2578 = vmatpush1.bf16.msra.mxu0 %v2532
      %2579 = vmatprep.subr.bf16.mxu0 0
      %2580 = vmatpush1.bf16.msra.mxu0 %v2533
      %2581 = vmatprep.subr.bf16.mxu0 0
      %2582 = vmatpush1.bf16.msra.mxu0 %v2534
      %2583 = vmatprep.mubr.bf16.mxu0 %v2415
      %2584 = vmatmul.mubr.bf16.gmra.mrb[0].mxu0 %v2414
      %v2585 = vpop.f32.mrb[0].mxu0
      %v2586 = vadd.f32 0.0, %v2585
      %v2587 = vpop.f32.mrb[0].mxu0
      %v2588 = vpop.f32.mrb[0].mxu0
      %v2589 = vadd.f32 0.0, %v2588
      %v2590 = vpop.f32.mrb[0].mxu0
      %2591 = vmatprep.mubr.bf16.mxu0 %v2417
      %2592 = vmatmul.mubr.bf16.gmra.mrb[0].mxu0 %v2416
      %v2593 = vpop.f32.mrb[0].mxu0
      %v2594 = vadd.f32 0.0, %v2593
      %v2595 = vpop.f32.mrb[0].mxu0
      %v2596 = vpop.f32.mrb[0].mxu0
      %v2597 = vadd.f32 0.0, %v2596
      %v2598 = vpop.f32.mrb[0].mxu0
      %2599 = vmatprep.mubr.bf16.mxu0 %v2419
      %2600 = vmatmul.mubr.bf16.gmra.mrb[0].mxu0 %v2418
      %v2601 = vpop.f32.mrb[0].mxu0
      %v2602 = vadd.f32 0.0, %v2601
      %v2603 = vpop.f32.mrb[0].mxu0
      %v2604 = vpop.f32.mrb[0].mxu0
      %v2605 = vadd.f32 0.0, %v2604
      %v2606 = vpop.f32.mrb[0].mxu0
      %2607 = vmatprep.mubr.bf16.mxu0 %v2421
      %2608 = vmatmul.mubr.bf16.gmra.mrb[0].mxu0 %v2420
      %v2609 = vpop.f32.mrb[0].mxu0
      %v2610 = vadd.f32 0.0, %v2609
      %v2611 = vpop.f32.mrb[0].mxu0
      %v2612 = vpop.f32.mrb[0].mxu0
      %v2613 = vadd.f32 0.0, %v2612
      %v2614 = vpop.f32.mrb[0].mxu0
      %2615 = vdwg.mxu0
      %v2616 = vadd.f32 %v2389, %v2586
      %v2617 = vadd.f32 %v2390, %v2589
      %v2618 = vadd.f32 %v2391, %v2594
      %v2619 = vadd.f32 %v2392, %v2597
      %v2620 = vadd.f32 %v2393, %v2602
      %v2621 = vadd.f32 %v2394, %v2605
      %v2622 = vadd.f32 %v2395, %v2610
      %v2623 = vadd.f32 %v2396, %v2613
      %v2624 = vld [vmem:[%s2397] sm:$0xfe]
      %v2625 = vld [vmem:[%s2397 + $0x8] sm:$0xfe]
      %v2626 = vld [vmem:[%s2397 + $0x10] sm:$0x1]
      %v2627 = vld [vmem:[%s2397 + $0x18] sm:$0x1]
      %v2628 = vld [vmem:[%s2397 + $0x20] sm:$0xfe]
      %v2629 = vld [vmem:[%s2397 + $0x28] sm:$0xfe]
      %v2630 = vld [vmem:[%s2397 + $0x30] sm:$0x1]
      %v2631 = vld [vmem:[%s2397 + $0x38] sm:$0x1]
      %v2632 = vld [vmem:[%s2397 + $0x40] sm:$0xfe]
      %v2633 = vld [vmem:[%s2397 + $0x48] sm:$0xfe]
      %v2634 = vld [vmem:[%s2397 + $0x50] sm:$0x1]
      %v2635 = vld [vmem:[%s2397 + $0x58] sm:$0x1]
      %v2636 = vld [vmem:[%s2397 + $0x60] sm:$0xfe]
      %v2637 = vld [vmem:[%s2397 + $0x68] sm:$0xfe]
      %v2638 = vld [vmem:[%s2397 + $0x70] sm:$0x1]
      %v2639 = vld [vmem:[%s2397 + $0x78] sm:$0x1]
      %v2640 = vld [vmem:[%s2397 + $0x80] sm:$0xfe]
      %v2641 = vld [vmem:[%s2397 + $0x88] sm:$0xfe]
      %v2642 = vld [vmem:[%s2397 + $0x90] sm:$0x1]
      %v2643 = vld [vmem:[%s2397 + $0x98] sm:$0x1]
      %v2644 = vld [vmem:[%s2397 + $0xa0] sm:$0xfe]
      %v2645 = vld [vmem:[%s2397 + $0xa8] sm:$0xfe]
      %v2646 = vld [vmem:[%s2397 + $0xb0] sm:$0x1]
      %v2647 = vld [vmem:[%s2397 + $0xb8] sm:$0x1]
      %v2648 = vld [vmem:[%s2397 + $0xc0] sm:$0xfe]
      %v2649 = vld [vmem:[%s2397 + $0xc8] sm:$0xfe]
      %v2650 = vld [vmem:[%s2397 + $0xd0] sm:$0x1]
      %v2651 = vld [vmem:[%s2397 + $0xd8] sm:$0x1]
      %v2652 = vld [vmem:[%s2397 + $0xe0] sm:$0xfe]
      %v2653 = vld [vmem:[%s2397 + $0xe8] sm:$0xfe]
      %v2654 = vld [vmem:[%s2397 + $0xf0] sm:$0x1]
      %v2655 = vld [vmem:[%s2397 + $0xf8] sm:$0x1]
      %v2688 = vrot.slane %v2624, 1
      %v2689 = vrot.slane %v2626, 1
      %v2690 = vsel %vm728, %v2688, %v2689
      %v2691 = vrot.slane %v2625, 1
      %v2692 = vrot.slane %v2627, 1
      %v2693 = vsel %vm728, %v2691, %v2692
      %v2694 = vrot.slane %v2628, 1
      %v2695 = vrot.slane %v2630, 1
      %v2696 = vsel %vm728, %v2694, %v2695
      %v2697 = vrot.slane %v2629, 1
      %v2698 = vrot.slane %v2631, 1
      %v2699 = vsel %vm728, %v2697, %v2698
      %v2700 = vrot.slane %v2632, 1
      %v2701 = vrot.slane %v2634, 1
      %v2702 = vsel %vm728, %v2700, %v2701
      %v2703 = vrot.slane %v2633, 1
      %v2704 = vrot.slane %v2635, 1
      %v2705 = vsel %vm728, %v2703, %v2704
      %v2706 = vrot.slane %v2636, 1
      %v2707 = vrot.slane %v2638, 1
      %v2708 = vsel %vm728, %v2706, %v2707
      %v2709 = vrot.slane %v2637, 1
      %v2710 = vrot.slane %v2639, 1
      %v2711 = vsel %vm728, %v2709, %v2710
      %v2712 = vrot.slane %v2640, 1
      %v2713 = vrot.slane %v2642, 1
      %v2714 = vsel %vm728, %v2712, %v2713
      %v2715 = vrot.slane %v2641, 1
      %v2716 = vrot.slane %v2643, 1
      %v2717 = vsel %vm728, %v2715, %v2716
      %v2718 = vrot.slane %v2644, 1
      %v2719 = vrot.slane %v2646, 1
      %v2720 = vsel %vm728, %v2718, %v2719
      %v2721 = vrot.slane %v2645, 1
      %v2722 = vrot.slane %v2647, 1
      %v2723 = vsel %vm728, %v2721, %v2722
      %v2724 = vrot.slane %v2648, 1
      %v2725 = vrot.slane %v2650, 1
      %v2726 = vsel %vm728, %v2724, %v2725
      %v2727 = vrot.slane %v2649, 1
      %v2728 = vrot.slane %v2651, 1
      %v2729 = vsel %vm728, %v2727, %v2728
      %v2730 = vrot.slane %v2652, 1
      %v2731 = vrot.slane %v2654, 1
      %v2732 = vsel %vm728, %v2730, %v2731
      %v2733 = vrot.slane %v2653, 1
      %v2734 = vrot.slane %v2655, 1
      %v2735 = vsel %vm728, %v2733, %v2734
      %v2752 = vpack.c.bf16 %v2696, %v2690
      %v2753 = vpack.c.bf16 %v2699, %v2693
      %v2754 = vpack.c.bf16 %v2708, %v2702
      %v2755 = vpack.c.bf16 %v2711, %v2705
      %v2756 = vpack.c.bf16 %v2720, %v2714
      %v2757 = vpack.c.bf16 %v2723, %v2717
      %v2758 = vpack.c.bf16 %v2732, %v2726
      %v2759 = vpack.c.bf16 %v2735, %v2729
      %s2760 = scalar_lea.vmem %s3, 896
      %v2761 = vld [vmem:[%s2760] sm:$0xf]
      %v2762 = vld [vmem:[%s2760 + $0x4] sm:$0xf]
      %v2763 = vld [vmem:[%s2760 + $0x8] sm:$0xf]
      %v2764 = vld [vmem:[%s2760 + $0xc] sm:$0xf]
      %v2765 = vld [vmem:[%s2760 + $0x10] sm:$0xf]
      %v2766 = vld [vmem:[%s2760 + $0x14] sm:$0xf]
      %v2767 = vld [vmem:[%s2760 + $0x18] sm:$0xf]
      %v2768 = vld [vmem:[%s2760 + $0x1c] sm:$0xf]
      %v2769 = vld [vmem:[%s2760 + $0x20] sm:$0xf]
      %v2770 = vld [vmem:[%s2760 + $0x24] sm:$0xf]
      %v2771 = vld [vmem:[%s2760 + $0x28] sm:$0xf]
      %v2772 = vld [vmem:[%s2760 + $0x2c] sm:$0xf]
      %v2773 = vld [vmem:[%s2760 + $0x30] sm:$0xf]
      %v2774 = vld [vmem:[%s2760 + $0x34] sm:$0xf]
      %v2775 = vld [vmem:[%s2760 + $0x38] sm:$0xf]
      %v2776 = vld [vmem:[%s2760 + $0x3c] sm:$0xf]
      %v2777 = vld [vmem:[%s2760 + $0x40] sm:$0xf]
      %v2778 = vld [vmem:[%s2760 + $0x44] sm:$0xf]
      %v2779 = vld [vmem:[%s2760 + $0x48] sm:$0xf]
      %v2780 = vld [vmem:[%s2760 + $0x4c] sm:$0xf]
      %v2781 = vld [vmem:[%s2760 + $0x50] sm:$0xf]
      %v2782 = vld [vmem:[%s2760 + $0x54] sm:$0xf]
      %v2783 = vld [vmem:[%s2760 + $0x58] sm:$0xf]
      %v2784 = vld [vmem:[%s2760 + $0x5c] sm:$0xf]
      %v2785 = vld [vmem:[%s2760 + $0x60] sm:$0xf]
      %v2786 = vld [vmem:[%s2760 + $0x64] sm:$0xf]
      %v2787 = vld [vmem:[%s2760 + $0x68] sm:$0xf]
      %v2788 = vld [vmem:[%s2760 + $0x6c] sm:$0xf]
      %v2789 = vld [vmem:[%s2760 + $0x70] sm:$0xf]
      %v2790 = vld [vmem:[%s2760 + $0x74] sm:$0xf]
      %v2791 = vld [vmem:[%s2760 + $0x78] sm:$0xf]
      %v2792 = vld [vmem:[%s2760 + $0x7c] sm:$0xf]
      %v2825 = vunpack.c.l.b16 %v2761
      %v2826 = vunpack.c.l.b16 %v2762
      %v2827 = vunpack.c.l.b16 %v2763
      %v2828 = vunpack.c.l.b16 %v2764
      %v2829 = vunpack.c.l.b16 %v2765
      %v2830 = vunpack.c.l.b16 %v2766
      %v2831 = vunpack.c.l.b16 %v2767
      %v2832 = vunpack.c.l.b16 %v2768
      %v2833 = vunpack.c.l.b16 %v2769
      %v2834 = vunpack.c.l.b16 %v2770
      %v2835 = vunpack.c.l.b16 %v2771
      %v2836 = vunpack.c.l.b16 %v2772
      %v2837 = vunpack.c.l.b16 %v2773
      %v2838 = vunpack.c.l.b16 %v2774
      %v2839 = vunpack.c.l.b16 %v2775
      %v2840 = vunpack.c.l.b16 %v2776
      %v2841 = vunpack.c.l.b16 %v2777
      %v2842 = vunpack.c.l.b16 %v2778
      %v2843 = vunpack.c.l.b16 %v2779
      %v2844 = vunpack.c.l.b16 %v2780
      %v2845 = vunpack.c.l.b16 %v2781
      %v2846 = vunpack.c.l.b16 %v2782
      %v2847 = vunpack.c.l.b16 %v2783
      %v2848 = vunpack.c.l.b16 %v2784
      %v2849 = vunpack.c.l.b16 %v2785
      %v2850 = vunpack.c.l.b16 %v2786
      %v2851 = vunpack.c.l.b16 %v2787
      %v2852 = vunpack.c.l.b16 %v2788
      %v2853 = vunpack.c.l.b16 %v2789
      %v2854 = vunpack.c.l.b16 %v2790
      %v2855 = vunpack.c.l.b16 %v2791
      %v2856 = vunpack.c.l.b16 %v2792
      %v2857 = vpack.c.b16 %v2826, %v2825
      %v2858 = vpack.c.b16 %v2828, %v2827
      %v2859 = vpack.c.b16 %v2830, %v2829
      %v2860 = vpack.c.b16 %v2832, %v2831
      %v2861 = vpack.c.b16 %v2834, %v2833
      %v2862 = vpack.c.b16 %v2836, %v2835
      %v2863 = vpack.c.b16 %v2838, %v2837
      %v2864 = vpack.c.b16 %v2840, %v2839
      %v2865 = vpack.c.b16 %v2842, %v2841
      %v2866 = vpack.c.b16 %v2844, %v2843
      %v2867 = vpack.c.b16 %v2846, %v2845
      %v2868 = vpack.c.b16 %v2848, %v2847
      %v2869 = vpack.c.b16 %v2850, %v2849
      %v2870 = vpack.c.b16 %v2852, %v2851
      %v2871 = vpack.c.b16 %v2854, %v2853
      %v2872 = vpack.c.b16 %v2856, %v2855
      %2889 = vmatprep.subr.bf16.mxu0 0
      %2890 = vmatpush1.bf16.msra.mxu0 %v2857
      %2891 = vmatprep.subr.bf16.mxu0 0
      %2892 = vmatpush1.bf16.msra.mxu0 %v2858
      %2893 = vmatprep.subr.bf16.mxu0 0
      %2894 = vmatpush1.bf16.msra.mxu0 %v2859
      %2895 = vmatprep.subr.bf16.mxu0 0
      %2896 = vmatpush1.bf16.msra.mxu0 %v2860
      %2897 = vmatprep.subr.bf16.mxu0 0
      %2898 = vmatpush1.bf16.msra.mxu0 %v2861
      %2899 = vmatprep.subr.bf16.mxu0 0
      %2900 = vmatpush1.bf16.msra.mxu0 %v2862
      %2901 = vmatprep.subr.bf16.mxu0 0
      %2902 = vmatpush1.bf16.msra.mxu0 %v2863
      %2903 = vmatprep.subr.bf16.mxu0 0
      %2904 = vmatpush1.bf16.msra.mxu0 %v2864
      %2905 = vmatprep.subr.bf16.mxu0 0
      %2906 = vmatpush1.bf16.msra.mxu0 %v2865
      %2907 = vmatprep.subr.bf16.mxu0 0
      %2908 = vmatpush1.bf16.msra.mxu0 %v2866
      %2909 = vmatprep.subr.bf16.mxu0 0
      %2910 = vmatpush1.bf16.msra.mxu0 %v2867
      %2911 = vmatprep.subr.bf16.mxu0 0
      %2912 = vmatpush1.bf16.msra.mxu0 %v2868
      %2913 = vmatprep.subr.bf16.mxu0 0
      %2914 = vmatpush1.bf16.msra.mxu0 %v2869
      %2915 = vmatprep.subr.bf16.mxu0 0
      %2916 = vmatpush1.bf16.msra.mxu0 %v2870
      %2917 = vmatprep.subr.bf16.mxu0 0
      %2918 = vmatpush1.bf16.msra.mxu0 %v2871
      %2919 = vmatprep.subr.bf16.mxu0 0
      %2920 = vmatpush1.bf16.msra.mxu0 %v2872
      %2921 = vmatprep.mubr.bf16.mxu0 %v2753
      %2922 = vmatmul.mubr.bf16.gmra.mrb[0].mxu0 %v2752
      %v2923 = vpop.f32.mrb[0].mxu0
      %v2924 = vadd.f32 0.0, %v2923
      %v2925 = vpop.f32.mrb[0].mxu0
      %v2926 = vpop.f32.mrb[0].mxu0
      %v2927 = vadd.f32 0.0, %v2926
      %v2928 = vpop.f32.mrb[0].mxu0
      %2929 = vmatprep.mubr.bf16.mxu0 %v2755
      %2930 = vmatmul.mubr.bf16.gmra.mrb[0].mxu0 %v2754
      %v2931 = vpop.f32.mrb[0].mxu0
      %v2932 = vadd.f32 0.0, %v2931
      %v2933 = vpop.f32.mrb[0].mxu0
      %v2934 = vpop.f32.mrb[0].mxu0
      %v2935 = vadd.f32 0.0, %v2934
      %v2936 = vpop.f32.mrb[0].mxu0
      %2937 = vmatprep.mubr.bf16.mxu0 %v2757
      %2938 = vmatmul.mubr.bf16.gmra.mrb[0].mxu0 %v2756
      %v2939 = vpop.f32.mrb[0].mxu0
      %v2940 = vadd.f32 0.0, %v2939
      %v2941 = vpop.f32.mrb[0].mxu0
      %v2942 = vpop.f32.mrb[0].mxu0
      %v2943 = vadd.f32 0.0, %v2942
      %v2944 = vpop.f32.mrb[0].mxu0
      %2945 = vmatprep.mubr.bf16.mxu0 %v2759
      %2946 = vmatmul.mubr.bf16.gmra.mrb[0].mxu0 %v2758
      %v2947 = vpop.f32.mrb[0].mxu0
      %v2948 = vadd.f32 0.0, %v2947
      %v2949 = vpop.f32.mrb[0].mxu0
      %v2950 = vpop.f32.mrb[0].mxu0
      %v2951 = vadd.f32 0.0, %v2950
      %v2952 = vpop.f32.mrb[0].mxu0
      %2953 = vdwg.mxu0
      %v2954 = vadd.f32 %v2616, %v2924
      %v2955 = vadd.f32 %v2617, %v2927
      %v2956 = vadd.f32 %v2618, %v2932
      %v2957 = vadd.f32 %v2619, %v2935
      %v2958 = vadd.f32 %v2620, %v2940
      %v2959 = vadd.f32 %v2621, %v2943
      %v2960 = vadd.f32 %v2622, %v2948
      %v2961 = vadd.f32 %v2623, %v2951
      %v2962 = vld [vmem:[%s2397] sm:$0xfc]
      %v2963 = vld [vmem:[%s2397 + $0x8] sm:$0xfc]
      %v2964 = vld [vmem:[%s2397 + $0x10] sm:$0x3]
      %v2965 = vld [vmem:[%s2397 + $0x18] sm:$0x3]
      %v2966 = vld [vmem:[%s2397 + $0x20] sm:$0xfc]
      %v2967 = vld [vmem:[%s2397 + $0x28] sm:$0xfc]
      %v2968 = vld [vmem:[%s2397 + $0x30] sm:$0x3]
      %v2969 = vld [vmem:[%s2397 + $0x38] sm:$0x3]
      %v2970 = vld [vmem:[%s2397 + $0x40] sm:$0xfc]
      %v2971 = vld [vmem:[%s2397 + $0x48] sm:$0xfc]
      %v2972 = vld [vmem:[%s2397 + $0x50] sm:$0x3]
      %v2973 = vld [vmem:[%s2397 + $0x58] sm:$0x3]
      %v2974 = vld [vmem:[%s2397 + $0x60] sm:$0xfc]
      %v2975 = vld [vmem:[%s2397 + $0x68] sm:$0xfc]
      %v2976 = vld [vmem:[%s2397 + $0x70] sm:$0x3]
      %v2977 = vld [vmem:[%s2397 + $0x78] sm:$0x3]
      %v2978 = vld [vmem:[%s2397 + $0x80] sm:$0xfc]
      %v2979 = vld [vmem:[%s2397 + $0x88] sm:$0xfc]
      %v2980 = vld [vmem:[%s2397 + $0x90] sm:$0x3]
      %v2981 = vld [vmem:[%s2397 + $0x98] sm:$0x3]
      %v2982 = vld [vmem:[%s2397 + $0xa0] sm:$0xfc]
      %v2983 = vld [vmem:[%s2397 + $0xa8] sm:$0xfc]
      %v2984 = vld [vmem:[%s2397 + $0xb0] sm:$0x3]
      %v2985 = vld [vmem:[%s2397 + $0xb8] sm:$0x3]
      %v2986 = vld [vmem:[%s2397 + $0xc0] sm:$0xfc]
      %v2987 = vld [vmem:[%s2397 + $0xc8] sm:$0xfc]
      %v2988 = vld [vmem:[%s2397 + $0xd0] sm:$0x3]
      %v2989 = vld [vmem:[%s2397 + $0xd8] sm:$0x3]
      %v2990 = vld [vmem:[%s2397 + $0xe0] sm:$0xfc]
      %v2991 = vld [vmem:[%s2397 + $0xe8] sm:$0xfc]
      %v2992 = vld [vmem:[%s2397 + $0xf0] sm:$0x3]
      %v2993 = vld [vmem:[%s2397 + $0xf8] sm:$0x3]
      %v3026 = vrot.slane %v2962, 2
      %v3027 = vrot.slane %v2964, 2
      %v3028 = vsel %vm1220, %v3026, %v3027
      %v3029 = vrot.slane %v2963, 2
      %v3030 = vrot.slane %v2965, 2
      %v3031 = vsel %vm1220, %v3029, %v3030
      %v3032 = vrot.slane %v2966, 2
      %v3033 = vrot.slane %v2968, 2
      %v3034 = vsel %vm1220, %v3032, %v3033
      %v3035 = vrot.slane %v2967, 2
      %v3036 = vrot.slane %v2969, 2
      %v3037 = vsel %vm1220, %v3035, %v3036
      %v3038 = vrot.slane %v2970, 2
      %v3039 = vrot.slane %v2972, 2
      %v3040 = vsel %vm1220, %v3038, %v3039
      %v3041 = vrot.slane %v2971, 2
      %v3042 = vrot.slane %v2973, 2
      %v3043 = vsel %vm1220, %v3041, %v3042
      %v3044 = vrot.slane %v2974, 2
      %v3045 = vrot.slane %v2976, 2
      %v3046 = vsel %vm1220, %v3044, %v3045
      %v3047 = vrot.slane %v2975, 2
      %v3048 = vrot.slane %v2977, 2
      %v3049 = vsel %vm1220, %v3047, %v3048
      %v3050 = vrot.slane %v2978, 2
      %v3051 = vrot.slane %v2980, 2
      %v3052 = vsel %vm1220, %v3050, %v3051
      %v3053 = vrot.slane %v2979, 2
      %v3054 = vrot.slane %v2981, 2
      %v3055 = vsel %vm1220, %v3053, %v3054
      %v3056 = vrot.slane %v2982, 2
      %v3057 = vrot.slane %v2984, 2
      %v3058 = vsel %vm1220, %v3056, %v3057
      %v3059 = vrot.slane %v2983, 2
      %v3060 = vrot.slane %v2985, 2
      %v3061 = vsel %vm1220, %v3059, %v3060
      %v3062 = vrot.slane %v2986, 2
      %v3063 = vrot.slane %v2988, 2
      %v3064 = vsel %vm1220, %v3062, %v3063
      %v3065 = vrot.slane %v2987, 2
      %v3066 = vrot.slane %v2989, 2
      %v3067 = vsel %vm1220, %v3065, %v3066
      %v3068 = vrot.slane %v2990, 2
      %v3069 = vrot.slane %v2992, 2
      %v3070 = vsel %vm1220, %v3068, %v3069
      %v3071 = vrot.slane %v2991, 2
      %v3072 = vrot.slane %v2993, 2
      %v3073 = vsel %vm1220, %v3071, %v3072
      %v3090 = vpack.c.bf16 %v3034, %v3028
      %v3091 = vpack.c.bf16 %v3037, %v3031
      %v3092 = vpack.c.bf16 %v3046, %v3040
      %v3093 = vpack.c.bf16 %v3049, %v3043
      %v3094 = vpack.c.bf16 %v3058, %v3052
      %v3095 = vpack.c.bf16 %v3061, %v3055
      %v3096 = vpack.c.bf16 %v3070, %v3064
      %v3097 = vpack.c.bf16 %v3073, %v3067
      %s3098 = scalar_lea.vmem %s3, 1024
      %v3099 = vld [vmem:[%s3098] sm:$0xf]
      %v3100 = vld [vmem:[%s3098 + $0x4] sm:$0xf]
      %v3101 = vld [vmem:[%s3098 + $0x8] sm:$0xf]
      %v3102 = vld [vmem:[%s3098 + $0xc] sm:$0xf]
      %v3103 = vld [vmem:[%s3098 + $0x10] sm:$0xf]
      %v3104 = vld [vmem:[%s3098 + $0x14] sm:$0xf]
      %v3105 = vld [vmem:[%s3098 + $0x18] sm:$0xf]
      %v3106 = vld [vmem:[%s3098 + $0x1c] sm:$0xf]
      %v3107 = vld [vmem:[%s3098 + $0x20] sm:$0xf]
      %v3108 = vld [vmem:[%s3098 + $0x24] sm:$0xf]
      %v3109 = vld [vmem:[%s3098 + $0x28] sm:$0xf]
      %v3110 = vld [vmem:[%s3098 + $0x2c] sm:$0xf]
      %v3111 = vld [vmem:[%s3098 + $0x30] sm:$0xf]
      %v3112 = vld [vmem:[%s3098 + $0x34] sm:$0xf]
      %v3113 = vld [vmem:[%s3098 + $0x38] sm:$0xf]
      %v3114 = vld [vmem:[%s3098 + $0x3c] sm:$0xf]
      %v3115 = vld [vmem:[%s3098 + $0x40] sm:$0xf]
      %v3116 = vld [vmem:[%s3098 + $0x44] sm:$0xf]
      %v3117 = vld [vmem:[%s3098 + $0x48] sm:$0xf]
      %v3118 = vld [vmem:[%s3098 + $0x4c] sm:$0xf]
      %v3119 = vld [vmem:[%s3098 + $0x50] sm:$0xf]
      %v3120 = vld [vmem:[%s3098 + $0x54] sm:$0xf]
      %v3121 = vld [vmem:[%s3098 + $0x58] sm:$0xf]
      %v3122 = vld [vmem:[%s3098 + $0x5c] sm:$0xf]
      %v3123 = vld [vmem:[%s3098 + $0x60] sm:$0xf]
      %v3124 = vld [vmem:[%s3098 + $0x64] sm:$0xf]
      %v3125 = vld [vmem:[%s3098 + $0x68] sm:$0xf]
      %v3126 = vld [vmem:[%s3098 + $0x6c] sm:$0xf]
      %v3127 = vld [vmem:[%s3098 + $0x70] sm:$0xf]
      %v3128 = vld [vmem:[%s3098 + $0x74] sm:$0xf]
      %v3129 = vld [vmem:[%s3098 + $0x78] sm:$0xf]
      %v3130 = vld [vmem:[%s3098 + $0x7c] sm:$0xf]
      %v3163 = vunpack.c.l.b16 %v3099
      %v3164 = vunpack.c.l.b16 %v3100
      %v3165 = vunpack.c.l.b16 %v3101
      %v3166 = vunpack.c.l.b16 %v3102
      %v3167 = vunpack.c.l.b16 %v3103
      %v3168 = vunpack.c.l.b16 %v3104
      %v3169 = vunpack.c.l.b16 %v3105
      %v3170 = vunpack.c.l.b16 %v3106
      %v3171 = vunpack.c.l.b16 %v3107
      %v3172 = vunpack.c.l.b16 %v3108
      %v3173 = vunpack.c.l.b16 %v3109
      %v3174 = vunpack.c.l.b16 %v3110
      %v3175 = vunpack.c.l.b16 %v3111
      %v3176 = vunpack.c.l.b16 %v3112
      %v3177 = vunpack.c.l.b16 %v3113
      %v3178 = vunpack.c.l.b16 %v3114
      %v3179 = vunpack.c.l.b16 %v3115
      %v3180 = vunpack.c.l.b16 %v3116
      %v3181 = vunpack.c.l.b16 %v3117
      %v3182 = vunpack.c.l.b16 %v3118
      %v3183 = vunpack.c.l.b16 %v3119
      %v3184 = vunpack.c.l.b16 %v3120
      %v3185 = vunpack.c.l.b16 %v3121
      %v3186 = vunpack.c.l.b16 %v3122
      %v3187 = vunpack.c.l.b16 %v3123
      %v3188 = vunpack.c.l.b16 %v3124
      %v3189 = vunpack.c.l.b16 %v3125
      %v3190 = vunpack.c.l.b16 %v3126
      %v3191 = vunpack.c.l.b16 %v3127
      %v3192 = vunpack.c.l.b16 %v3128
      %v3193 = vunpack.c.l.b16 %v3129
      %v3194 = vunpack.c.l.b16 %v3130
      %v3195 = vpack.c.b16 %v3164, %v3163
      %v3196 = vpack.c.b16 %v3166, %v3165
      %v3197 = vpack.c.b16 %v3168, %v3167
      %v3198 = vpack.c.b16 %v3170, %v3169
      %v3199 = vpack.c.b16 %v3172, %v3171
      %v3200 = vpack.c.b16 %v3174, %v3173
      %v3201 = vpack.c.b16 %v3176, %v3175
      %v3202 = vpack.c.b16 %v3178, %v3177
      %v3203 = vpack.c.b16 %v3180, %v3179
      %v3204 = vpack.c.b16 %v3182, %v3181
      %v3205 = vpack.c.b16 %v3184, %v3183
      %v3206 = vpack.c.b16 %v3186, %v3185
      %v3207 = vpack.c.b16 %v3188, %v3187
      %v3208 = vpack.c.b16 %v3190, %v3189
      %v3209 = vpack.c.b16 %v3192, %v3191
      %v3210 = vpack.c.b16 %v3194, %v3193
      %3227 = vmatprep.subr.bf16.mxu0 0
      %3228 = vmatpush1.bf16.msra.mxu0 %v3195
      %3229 = vmatprep.subr.bf16.mxu0 0
      %3230 = vmatpush1.bf16.msra.mxu0 %v3196
      %3231 = vmatprep.subr.bf16.mxu0 0
      %3232 = vmatpush1.bf16.msra.mxu0 %v3197
      %3233 = vmatprep.subr.bf16.mxu0 0
      %3234 = vmatpush1.bf16.msra.mxu0 %v3198
      %3235 = vmatprep.subr.bf16.mxu0 0
      %3236 = vmatpush1.bf16.msra.mxu0 %v3199
      %3237 = vmatprep.subr.bf16.mxu0 0
      %3238 = vmatpush1.bf16.msra.mxu0 %v3200
      %3239 = vmatprep.subr.bf16.mxu0 0
      %3240 = vmatpush1.bf16.msra.mxu0 %v3201
      %3241 = vmatprep.subr.bf16.mxu0 0
      %3242 = vmatpush1.bf16.msra.mxu0 %v3202
      %3243 = vmatprep.subr.bf16.mxu0 0
      %3244 = vmatpush1.bf16.msra.mxu0 %v3203
      %3245 = vmatprep.subr.bf16.mxu0 0
      %3246 = vmatpush1.bf16.msra.mxu0 %v3204
      %3247 = vmatprep.subr.bf16.mxu0 0
      %3248 = vmatpush1.bf16.msra.mxu0 %v3205
      %3249 = vmatprep.subr.bf16.mxu0 0
      %3250 = vmatpush1.bf16.msra.mxu0 %v3206
      %3251 = vmatprep.subr.bf16.mxu0 0
      %3252 = vmatpush1.bf16.msra.mxu0 %v3207
      %3253 = vmatprep.subr.bf16.mxu0 0
      %3254 = vmatpush1.bf16.msra.mxu0 %v3208
      %3255 = vmatprep.subr.bf16.mxu0 0
      %3256 = vmatpush1.bf16.msra.mxu0 %v3209
      %3257 = vmatprep.subr.bf16.mxu0 0
      %3258 = vmatpush1.bf16.msra.mxu0 %v3210
      %3259 = vmatprep.mubr.bf16.mxu0 %v3091
      %3260 = vmatmul.mubr.bf16.gmra.mrb[0].mxu0 %v3090
      %v3261 = vpop.f32.mrb[0].mxu0
      %v3262 = vadd.f32 0.0, %v3261
      %v3263 = vpop.f32.mrb[0].mxu0
      %v3264 = vpop.f32.mrb[0].mxu0
      %v3265 = vadd.f32 0.0, %v3264
      %v3266 = vpop.f32.mrb[0].mxu0
      %3267 = vmatprep.mubr.bf16.mxu0 %v3093
      %3268 = vmatmul.mubr.bf16.gmra.mrb[0].mxu0 %v3092
      %v3269 = vpop.f32.mrb[0].mxu0
      %v3270 = vadd.f32 0.0, %v3269
      %v3271 = vpop.f32.mrb[0].mxu0
      %v3272 = vpop.f32.mrb[0].mxu0
      %v3273 = vadd.f32 0.0, %v3272
      %v3274 = vpop.f32.mrb[0].mxu0
      %3275 = vmatprep.mubr.bf16.mxu0 %v3095
      %3276 = vmatmul.mubr.bf16.gmra.mrb[0].mxu0 %v3094
      %v3277 = vpop.f32.mrb[0].mxu0
      %v3278 = vadd.f32 0.0, %v3277
      %v3279 = vpop.f32.mrb[0].mxu0
      %v3280 = vpop.f32.mrb[0].mxu0
      %v3281 = vadd.f32 0.0, %v3280
      %v3282 = vpop.f32.mrb[0].mxu0
      %3283 = vmatprep.mubr.bf16.mxu0 %v3097
      %3284 = vmatmul.mubr.bf16.gmra.mrb[0].mxu0 %v3096
      %v3285 = vpop.f32.mrb[0].mxu0
      %v3286 = vadd.f32 0.0, %v3285
      %v3287 = vpop.f32.mrb[0].mxu0
      %v3288 = vpop.f32.mrb[0].mxu0
      %v3289 = vadd.f32 0.0, %v3288
      %v3290 = vpop.f32.mrb[0].mxu0
      %3291 = vdwg.mxu0
      %v3292 = vadd.f32 %v2954, %v3262
      %v3293 = vadd.f32 %v2955, %v3265
      %v3294 = vadd.f32 %v2956, %v3270
      %v3295 = vadd.f32 %v2957, %v3273
      %v3296 = vadd.f32 %v2958, %v3278
      %v3297 = vadd.f32 %v2959, %v3281
      %v3298 = vadd.f32 %v2960, %v3286
      %v3299 = vadd.f32 %v2961, %v3289
      %v3300 = vld [vmem:[%s4] sm:$0x1]
      %v3302 = vlaneseq
      %v3303 = vshrl.u32 %v3302, 7
      %v3304 = vsub.s32 0, %v3303
      %v3305 = vrot.slane %v3300, %v3304
      %v3307 = vadd.f32 %v3292, %v3305
      %v3308 = vadd.f32 %v3293, %v3305
      %v3309 = vadd.f32 %v3294, %v3305
      %v3310 = vadd.f32 %v3295, %v3305
      %v3311 = vadd.f32 %v3296, %v3305
      %v3312 = vadd.f32 %v3297, %v3305
      %v3313 = vadd.f32 %v3298, %v3305
      %v3314 = vadd.f32 %v3299, %v3305
      %v3315 = vpack.c.bf16 %v3308, %v3307
      %v3316 = vpack.c.bf16 %v3310, %v3309
      %v3317 = vpack.c.bf16 %v3312, %v3311
      %v3318 = vpack.c.bf16 %v3314, %v3313
      %v3323 = vunpack.c.l.b16 %v3315
      %v3324 = vunpack.c.h.b16 %v3315
      %v3325 = vunpack.c.l.b16 %v3316
      %v3326 = vunpack.c.h.b16 %v3316
      %v3327 = vunpack.c.l.b16 %v3317
      %v3328 = vunpack.c.h.b16 %v3317
      %v3329 = vunpack.c.l.b16 %v3318
      %v3330 = vunpack.c.h.b16 %v3318
      %v3331 = vpack.c.b16 %v3323, %v3323
      %v3332 = vpack.c.b16 %v3324, %v3324
      %v3333 = vpack.c.b16 %v3325, %v3325
      %v3334 = vpack.c.b16 %v3326, %v3326
      %v3335 = vpack.c.b16 %v3327, %v3327
      %v3336 = vpack.c.b16 %v3328, %v3328
      %v3337 = vpack.c.b16 %v3329, %v3329
      %v3338 = vpack.c.b16 %v3330, %v3330
      %vm3347 = vcmask 519168
      %3348 = vst.msk [vmem:[%s224] sm:$0xf] %vm3347, %v3331
      %3349 = vst.msk [vmem:[%s224 + $0x4] sm:$0xf] %vm3347, %v3332
      %3350 = vst.msk [vmem:[%s224 + $0x8] sm:$0xf] %vm3347, %v3333
      %3351 = vst.msk [vmem:[%s224 + $0xc] sm:$0xf] %vm3347, %v3334
      %3352 = vst.msk [vmem:[%s224 + $0x10] sm:$0xf] %vm3347, %v3335
      %3353 = vst.msk [vmem:[%s224 + $0x14] sm:$0xf] %vm3347, %v3336
      %3354 = vst.msk [vmem:[%s224 + $0x18] sm:$0xf] %vm3347, %v3337
      %3355 = vst.msk [vmem:[%s224 + $0x1c] sm:$0xf] %vm3347, %v3338
      %p3356 = scmp.lt.s32.totalorder %s16, 13
      %s3357 = scalar_select %p3356, %s16, 13
      %s3358 = smul.addr %s3357, 8
      %s3359 = smul.addr %s3358, 4
      %s3360 = scalar_lea.vmem %s5, %s3359
      // Predicated region
      $region41: #{_lambda_.2} parent=39 // pred_check
        %p3361 = pneg %p144
      $region42: #{_lambda_.2} parent=39 // pred_check_branch
        %3363 = sbr.rel (%p3361) target = $region44
      $region43: #{_lambda_.2} parent=39 // pred_region
        _
      $region44: #{_lambda_.2} parent=39 // pred_fallthru
        _
    $region40: #{_lambda_.2} parent=5 // pred_fallthru
      _
    %p3364 = scmp.le.s32.totalorder 2, %s11
    // Predicated region
    $region45: #{_lambda_.2} parent=5 // pred_check
      %p3365 = pneg %p3364
    $region46: #{_lambda_.2} parent=5 // pred_check_branch
      %3367 = sbr.rel (%p3365) target = $region48
    $region47: #{_lambda_.2} parent=5 // pred_region
      %s3368 = ssub.s32 %s11, 2
      // Predicated region
      $region49: #{_lambda_.2} parent=47 // pred_check
        %p3369 = pneg %p150
      $region50: #{_lambda_.2} parent=47 // pred_check_branch
        %3371 = sbr.rel (%p3369) target = $region52
      $region51: #{_lambda_.2} parent=47 // pred_region
        %p3372 = scmp.lt.s32.totalorder %s17, 13
        %s3373 = scalar_select %p3372, %s17, 13
        %s3374 = smul.addr %s3373, 8
        %s3375 = smul.addr %s3374, 4
        %s3376 = scalar_lea.vmem %s5, %s3375
      $region52: #{_lambda_.2} parent=47 // pred_fallthru
        _
    $region48: #{_lambda_.2} parent=5 // pred_fallthru
      _
  $region6: #{_lambda_.2} parent=0 // loop_footer
    %s15 = sadd.s32 1, %s11
  $region7: #{_lambda_.2} parent=0 // loop_footer_branch
    %10 = sbr.rel target = $region3
  $region8: #{_lambda_.2} parent=0 // loop_exit
    _

// kernel: tile.9
$region0: #{tile.9}
  %s0 = inlined_call_operand.vmem [shape: s32[6,64], index: 0, kind: input, shape index: {}]
  %s1 = inlined_call_operand.vmem [shape: s32[1,384], index: 1, kind: output, shape index: {}]
  $region1: #{tile.9} parent=0
    #allocation0 [shape = 'u8[12288]{0}', space=vmem, size = 0x3000, scoped, tag = 'scoped mem for output reshape']
    %v2 = vld [vmem:[%s0] ss:$2 sm:$0x7]
    %vm3 = vcmask 523264
    %4 = vst.msk [vmem:[#allocation0] ss:$8 sm:$0x7] %vm3, %v2
    %s5 = scalar_lea.vmem %s0, 1
    %v6 = vld [vmem:[%s5] ss:$2 sm:$0x7]
    %7 = vrot.lane.b32.xlu0 %v6, 64
    %v8 = vpop.permute.xlu0 %7
    %vm9 = vcmask 1048064
    %10 = vst.msk [vmem:[#allocation0] ss:$8 sm:$0x7] %vm9, %v8
    %s12 = sshllo.u32 0, 1
    %v14 = vld [vmem:[#allocation0] sm:%s12]
    %s15 = sshllo.u32 0, 1
    %16 = vst [vmem:[%s1] sm:%s15] %v14
    %s17 = scalar_lea.vmem [#allocation0], 8
    %v18 = vld [vmem:[%s17] sm:%s12]
    %s19 = sshllo.u32 0, 1
    %s20 = scalar_lea.vmem %s1, 1
    %21 = vst [vmem:[%s20] sm:%s19] %v18
    %s22 = scalar_lea.vmem [#allocation0], 16
    %v23 = vld [vmem:[%s22] sm:%s12]
    %s24 = sshllo.u32 0, 1
    %s25 = smul.addr 1, 2
    %s26 = scalar_lea.vmem %s1, %s25
    %27 = vst [vmem:[%s26] sm:%s24] %v23

// kernel: _lambda_.3
$region0: #{_lambda_.3}
  #allocation0 [shape = 'u32[]', space=smem, size = 0x4, offset = 0x4, fixed_abs, tag = 'smem constant byte address 0x4 - core index']
  #allocation1 [shape = 'u32[144,128]{1,0:T(1,128)}', space=vmem, size = 0x12000, scoped, tag = 'internal scratch']
  %s0 = inlined_call_operand.vmem [shape: s32[1,384], index: 0, kind: input, shape index: {}]
  %s1 = inlined_call_operand.vmem [shape: bf16[2,64,64], index: 1, kind: input, shape index: {}]
  %s2 = inlined_call_operand.vmem [shape: bf16[2,384,64], index: 2, kind: input, shape index: {}]
  %s3 = inlined_call_operand.vmem [shape: bf16[2,8,384], index: 3, kind: input, shape index: {}]
  %s4 = inlined_call_operand.vmem [shape: f32[2,7,64], index: 4, kind: output, shape index: {0}]
  %s5 = inlined_call_operand.vmem [shape: f32[2,1,1], index: 5, kind: output, shape index: {1}]
  %6 = xla_tuple %s4, %s5
  %s7 = sld [smem:[#allocation0]]
  $region57: #{_lambda_.3} parent=0
    _
  %s9 = ssub.s32 1, %s7
  %s10 = scalar_select 0, %s9, %s7
  loop: start=0, step=1, limit=4
  $region2: #{_lambda_.3} parent=0 // loop_pre_header
    _
  $region3: #{_lambda_.3} parent=0 // loop_header
    %s12 = sphi 0, %s16
    %p13 = scmp.ge.s32.totalorder %s12, 4
    %s20 = sphi 0, %s20
    %s22 = sphi 0, %s20
    %s23 = sphi 0, %s22
    %s37 = sphi 0, %s23
    %s43 = sphi 0, %s45
    %s46 = sphi 0, %s43
    %s47 = sphi 0, %s46
    %s63 = sphi 0, %s47
    %s69 = sphi 0, %s71
    %s72 = sphi 0, %s69
    %s73 = sphi 0, %s72
    %s89 = sphi 0, %s73
    %s95 = sphi 0, %s97
    %s98 = sphi 0, %s95
    %s99 = sphi 0, %s98
    %s115 = sphi 0, %s99
    %s121 = sphi 0, %s123
    %s124 = sphi 0, %s121
    %s125 = sphi 0, %s124
    %s141 = sphi 0, %s125
    %s147 = sphi 0, %s149
    %s150 = sphi 0, %s147
    %s151 = sphi 0, %s150
    %s167 = sphi 0, %s151
  $region4: #{_lambda_.3} parent=0 // loop_header_branch
    %15 = sbr.rel (%p13) target = $region8
  $region5: #{_lambda_.3} parent=0 // loop_body
    %s17 = ssub.s32 %s12, 1
    %s18 = ssub.s32 %s12, 2
    %s19 = sadd.s32 %s12, 1
    %s21 = sadd.s32 %s20, 1
    %p24 = scmp.eq.s32.totalorder %s12, 1
    %p25 = scmp.ne.s32.totalorder %s20, %s22
    %p26 = scmp.eq.s32.totalorder %s12, 0
    %p27 = por %p25, %p26
    %p28 = scmp.ne.s32.totalorder %s20, %s22
    %p29 = scmp.eq.s32.totalorder %s17, 1
    %p30 = por %p28, %p29
    %p31 = scmp.ne.s32.totalorder %s22, %s23
    %p32 = scmp.eq.s32.totalorder %s17, 0
    %p33 = por %p31, %p32
    %p34 = scmp.ne.s32.totalorder %s22, %s23
    %p35 = scmp.eq.s32.totalorder %s18, 1
    %p36 = por %p34, %p35
    %p38 = scmp.ne.s32.totalorder %s23, %s37
    %p39 = scmp.eq.s32.totalorder %s18, 0
    %p40 = por %p38, %p39
    %s41 = ssub.s32 %s12, %s19
    %p42 = scmp.eq.s32.totalorder %s41, 0
    %s44 = sadd.s32 %s43, 1
    %s45 = scalar_select %p42, %s43, %s44
    %p48 = pneg %p42
    %p49 = scmp.eq.s32.totalorder %s12, 1
    %p50 = por %p48, %p49
    %p51 = scmp.ne.s32.totalorder %s43, %s46
    %p52 = scmp.eq.s32.totalorder %s12, 0
    %p53 = por %p51, %p52
    %p54 = scmp.ne.s32.totalorder %s43, %s46
    %p55 = scmp.eq.s32.totalorder %s17, 1
    %p56 = por %p54, %p55
    %p57 = scmp.ne.s32.totalorder %s46, %s47
    %p58 = scmp.eq.s32.totalorder %s17, 0
    %p59 = por %p57, %p58
    %p60 = scmp.ne.s32.totalorder %s46, %s47
    %p61 = scmp.eq.s32.totalorder %s18, 1
    %p62 = por %p60, %p61
    %p64 = scmp.ne.s32.totalorder %s47, %s63
    %p65 = scmp.eq.s32.totalorder %s18, 0
    %p66 = por %p64, %p65
    %s67 = ssub.s32 %s12, %s19
    %p68 = scmp.eq.s32.totalorder %s67, 0
    %s70 = sadd.s32 %s69, 1
    %s71 = scalar_select %p68, %s69, %s70
    %p74 = pneg %p68
    %p75 = scmp.eq.s32.totalorder %s12, 1
    %p76 = por %p74, %p75
    %p77 = scmp.ne.s32.totalorder %s69, %s72
    %p78 = scmp.eq.s32.totalorder %s12, 0
    %p79 = por %p77, %p78
    %p80 = scmp.ne.s32.totalorder %s69, %s72
    %p81 = scmp.eq.s32.totalorder %s17, 1
    %p82 = por %p80, %p81
    %p83 = scmp.ne.s32.totalorder %s72, %s73
    %p84 = scmp.eq.s32.totalorder %s17, 0
    %p85 = por %p83, %p84
    %p86 = scmp.ne.s32.totalorder %s72, %s73
    %p87 = scmp.eq.s32.totalorder %s18, 1
    %p88 = por %p86, %p87
    %p90 = scmp.ne.s32.totalorder %s73, %s89
    %p91 = scmp.eq.s32.totalorder %s18, 0
    %p92 = por %p90, %p91
    %s93 = ssub.s32 %s12, %s19
    %p94 = scmp.eq.s32.totalorder %s93, 0
    %s96 = sadd.s32 %s95, 1
    %s97 = scalar_select %p94, %s95, %s96
    %p100 = pneg %p94
    %p101 = scmp.eq.s32.totalorder %s12, 1
    %p102 = por %p100, %p101
    %p103 = scmp.ne.s32.totalorder %s95, %s98
    %p104 = scmp.eq.s32.totalorder %s12, 0
    %p105 = por %p103, %p104
    %p106 = scmp.ne.s32.totalorder %s95, %s98
    %p107 = scmp.eq.s32.totalorder %s17, 1
    %p108 = por %p106, %p107
    %p109 = scmp.ne.s32.totalorder %s98, %s99
    %p110 = scmp.eq.s32.totalorder %s17, 0
    %p111 = por %p109, %p110
    %p112 = scmp.ne.s32.totalorder %s98, %s99
    %p113 = scmp.eq.s32.totalorder %s18, 1
    %p114 = por %p112, %p113
    %p116 = scmp.ne.s32.totalorder %s99, %s115
    %p117 = scmp.eq.s32.totalorder %s18, 0
    %p118 = por %p116, %p117
    %s119 = ssub.s32 %s12, %s19
    %p120 = scmp.eq.s32.totalorder %s119, 0
    %s122 = sadd.s32 %s121, 1
    %s123 = scalar_select %p120, %s121, %s122
    %p126 = pneg %p120
    %p127 = scmp.eq.s32.totalorder %s12, 1
    %p128 = por %p126, %p127
    %p129 = scmp.ne.s32.totalorder %s121, %s124
    %p130 = scmp.eq.s32.totalorder %s12, 0
    %p131 = por %p129, %p130
    %p132 = scmp.ne.s32.totalorder %s121, %s124
    %p133 = scmp.eq.s32.totalorder %s17, 1
    %p134 = por %p132, %p133
    %p135 = scmp.ne.s32.totalorder %s124, %s125
    %p136 = scmp.eq.s32.totalorder %s17, 0
    %p137 = por %p135, %p136
    %p138 = scmp.ne.s32.totalorder %s124, %s125
    %p139 = scmp.eq.s32.totalorder %s18, 1
    %p140 = por %p138, %p139
    %p142 = scmp.ne.s32.totalorder %s125, %s141
    %p143 = scmp.eq.s32.totalorder %s18, 0
    %p144 = por %p142, %p143
    %s145 = ssub.s32 %s12, %s19
    %p146 = scmp.eq.s32.totalorder %s145, 0
    %s148 = sadd.s32 %s147, 1
    %s149 = scalar_select %p146, %s147, %s148
    %p152 = pneg %p146
    %p153 = scmp.eq.s32.totalorder %s12, 1
    %p154 = por %p152, %p153
    %p155 = scmp.ne.s32.totalorder %s147, %s150
    %p156 = scmp.eq.s32.totalorder %s12, 0
    %p157 = por %p155, %p156
    %p158 = scmp.ne.s32.totalorder %s147, %s150
    %p159 = scmp.eq.s32.totalorder %s17, 1
    %p160 = por %p158, %p159
    %p161 = scmp.ne.s32.totalorder %s150, %s151
    %p162 = scmp.eq.s32.totalorder %s17, 0
    %p163 = por %p161, %p162
    %p164 = scmp.ne.s32.totalorder %s150, %s151
    %p165 = scmp.eq.s32.totalorder %s18, 1
    %p166 = por %p164, %p165
    %p168 = scmp.ne.s32.totalorder %s151, %s167
    %p169 = scmp.eq.s32.totalorder %s18, 0
    %p170 = por %p168, %p169
    %p171 = scmp.le.s32.totalorder 1, %s12
    %p172 = scmp.lt.s32.totalorder %s12, 3
    %p173 = pnand %p171, %p172
    %p174 = pneg %p173
    // Predicated region
    $region9: #{_lambda_.3} parent=5 // pred_check
      _
    $region10: #{_lambda_.3} parent=5 // pred_check_branch
      %176 = sbr.rel (%p173) target = $region12
    $region11: #{_lambda_.3} parent=5 // pred_region
      %s177 = ssub.s32 %s12, 1
      // Predicated region
      $region13: #{_lambda_.3} parent=11 // pred_check
        %p178 = pneg %p33
      $region14: #{_lambda_.3} parent=11 // pred_check_branch
        %180 = sbr.rel (%p178) target = $region16
      $region15: #{_lambda_.3} parent=11 // pred_region
        _
      $region16: #{_lambda_.3} parent=11 // pred_fallthru
        _
    $region12: #{_lambda_.3} parent=5 // pred_fallthru
      _
    %p181 = scmp.lt.s32.totalorder %s12, 2
    // Predicated region
    $region17: #{_lambda_.3} parent=5 // pred_check
      %p182 = pneg %p181
    $region18: #{_lambda_.3} parent=5 // pred_check_branch
      %184 = sbr.rel (%p182) target = $region20
    $region19: #{_lambda_.3} parent=5 // pred_region
      // Predicated region
      $region21: #{_lambda_.3} parent=19 // pred_check
        %p185 = pneg %p53
      $region22: #{_lambda_.3} parent=19 // pred_check_branch
        %187 = sbr.rel (%p185) target = $region24
      $region23: #{_lambda_.3} parent=19 // pred_region
        %p188 = scmp.lt.s32.totalorder %s12, 1
        %s189 = scalar_select %p188, %s12, 1
        %s190 = smul.addr %s189, 8
        %s191 = smul.addr %s190, 4
        %s192 = scalar_lea.vmem %s1, %s191
      $region24: #{_lambda_.3} parent=19 // pred_fallthru
        _
      // Predicated region
      $region25: #{_lambda_.3} parent=19 // pred_check
        %p193 = pneg %p79
      $region26: #{_lambda_.3} parent=19 // pred_check_branch
        %195 = sbr.rel (%p193) target = $region28
      $region27: #{_lambda_.3} parent=19 // pred_region
        %p196 = scmp.lt.s32.totalorder %s12, 1
        %s197 = scalar_select %p196, %s12, 1
        %s198 = smul.addr %s197, 48
        %s199 = smul.addr %s198, 4
        %s200 = scalar_lea.vmem %s2, %s199
      $region28: #{_lambda_.3} parent=19 // pred_fallthru
        _
      // Predicated region
      $region29: #{_lambda_.3} parent=19 // pred_check
        %p201 = pneg %p105
      $region30: #{_lambda_.3} parent=19 // pred_check_branch
        %203 = sbr.rel (%p201) target = $region32
      $region31: #{_lambda_.3} parent=19 // pred_region
        %p204 = scmp.lt.s32.totalorder %s12, 1
        %s205 = scalar_select %p204, %s12, 1
        %s206 = smul.addr %s205, 3
        %s207 = smul.addr %s206, 4
        %s208 = scalar_lea.vmem %s3, %s207
      $region32: #{_lambda_.3} parent=19 // pred_fallthru
        _
    $region20: #{_lambda_.3} parent=5 // pred_fallthru
      _
    %p209 = scmp.le.s32.totalorder 1, %s12
    %p210 = scmp.lt.s32.totalorder %s12, 3
    %p211 = pnand %p209, %p210
    %p212 = pneg %p211
    // Predicated region
    $region33: #{_lambda_.3} parent=5 // pred_check
      _
    $region34: #{_lambda_.3} parent=5 // pred_check_branch
      %214 = sbr.rel (%p211) target = $region36
    $region35: #{_lambda_.3} parent=5 // pred_region
      %s215 = ssub.s32 %s12, 1
      %p216 = pneg %p33
      %p217 = pneg %p30
      %p218 = scmp.lt.s32.totalorder %s17, 1
      %s219 = scalar_select %p218, %s17, 1
      %s220 = smul.addr %s219, 8
      %s221 = smul.addr %s220, 4
      %s222 = scalar_lea.vmem %s1, %s221
      %p223 = pneg %p59
      %p224 = pneg %p56
      %p225 = scmp.lt.s32.totalorder %s17, 1
      %s226 = scalar_select %p225, %s17, 1
      %s227 = smul.addr %s226, 48
      %s228 = smul.addr %s227, 4
      %s229 = scalar_lea.vmem %s2, %s228
      %p230 = pneg %p85
      %p231 = pneg %p82
      %p232 = scmp.lt.s32.totalorder %s17, 1
      %s233 = scalar_select %p232, %s17, 1
      %s234 = smul.addr %s233, 3
      %s235 = smul.addr %s234, 4
      %s236 = scalar_lea.vmem %s3, %s235
      %p237 = pneg %p111
      %p238 = pneg %p108
      %p239 = pneg %p137
      %p240 = pneg %p134
      %p241 = scmp.lt.s32.totalorder %s17, 1
      %s242 = scalar_select %p241, %s17, 1
      %s243 = smul.addr %s242, 8
      %s244 = scalar_lea.vmem %s4, %s243
      %p245 = pneg %p163
      %p246 = pneg %p160
      %p247 = scmp.lt.s32.totalorder %s17, 1
      %s248 = scalar_select %p247, %s17, 1
      %s249 = scalar_lea.vmem %s5, %s248
      %p250 = scmp.lt.s32.totalorder %s17, 1
      %s251 = scalar_select %p250, %s17, 1
      %s252 = smul.addr %s251, 8
      %s253 = smul.addr %s252, 4
      %s254 = scalar_lea.vmem %s1, %s253
      %p255 = scmp.lt.s32.totalorder %s17, 1
      %s256 = scalar_select %p255, %s17, 1
      %s257 = smul.addr %s256, 48
      %s258 = smul.addr %s257, 4
      %s259 = scalar_lea.vmem %s2, %s258
      %p260 = scmp.lt.s32.totalorder %s17, 1
      %s261 = scalar_select %p260, %s17, 1
      %s262 = smul.addr %s261, 3
      %s263 = smul.addr %s262, 4
      %s264 = scalar_lea.vmem %s3, %s263
      %p265 = scmp.lt.s32.totalorder %s17, 1
      %s266 = scalar_select %p265, %s17, 1
      %s267 = smul.addr %s266, 8
      %s268 = scalar_lea.vmem %s4, %s267
      %p269 = scmp.lt.s32.totalorder %s17, 1
      %s270 = scalar_select %p269, %s17, 1
      %s271 = scalar_lea.vmem %s5, %s270
      %v273 = vld [vmem:[%s254] sm:$0xf]
      %v274 = vld [vmem:[%s254 + $0x4] sm:$0xf]
      %v275 = vld [vmem:[%s254 + $0x8] sm:$0xf]
      %v276 = vld [vmem:[%s254 + $0xc] sm:$0xf]
      %v277 = vld [vmem:[%s254 + $0x10] sm:$0xf]
      %v278 = vld [vmem:[%s254 + $0x14] sm:$0xf]
      %v279 = vld [vmem:[%s254 + $0x18] sm:$0xf]
      %v280 = vld [vmem:[%s254 + $0x1c] sm:$0xf]
      %v281 = vunpack.c.l.bf16 %v273
      %v282 = vunpack.c.l.bf16 %v274
      %v283 = vunpack.c.l.bf16 %v275
      %v284 = vunpack.c.l.bf16 %v276
      %v285 = vunpack.c.l.bf16 %v277
      %v286 = vunpack.c.l.bf16 %v278
      %v287 = vunpack.c.l.bf16 %v279
      %v288 = vunpack.c.l.bf16 %v280
      %v289 = vmul.f32 %v281, 0.125
      %v290 = vmul.f32 %v282, 0.125
      %v291 = vmul.f32 %v283, 0.125
      %v292 = vmul.f32 %v284, 0.125
      %v293 = vmul.f32 %v285, 0.125
      %v294 = vmul.f32 %v286, 0.125
      %v295 = vmul.f32 %v287, 0.125
      %v296 = vmul.f32 %v288, 0.125
      %v297 = vpack.c.bf16 %v290, %v289
      %v298 = vpack.c.bf16 %v292, %v291
      %v299 = vpack.c.bf16 %v294, %v293
      %v300 = vpack.c.bf16 %v296, %v295
      %v301 = vld [vmem:[%s259] sm:$0xf]
      %v302 = vld [vmem:[%s259 + $0x4] sm:$0xf]
      %v303 = vld [vmem:[%s259 + $0x8] sm:$0xf]
      %v304 = vld [vmem:[%s259 + $0xc] sm:$0xf]
      %v305 = vld [vmem:[%s259 + $0x10] sm:$0xf]
      %v306 = vld [vmem:[%s259 + $0x14] sm:$0xf]
      %v307 = vld [vmem:[%s259 + $0x18] sm:$0xf]
      %v308 = vld [vmem:[%s259 + $0x1c] sm:$0xf]
      %v309 = vld [vmem:[%s259 + $0x20] sm:$0xf]
      %v310 = vld [vmem:[%s259 + $0x24] sm:$0xf]
      %v311 = vld [vmem:[%s259 + $0x28] sm:$0xf]
      %v312 = vld [vmem:[%s259 + $0x2c] sm:$0xf]
      %v313 = vld [vmem:[%s259 + $0x30] sm:$0xf]
      %v314 = vld [vmem:[%s259 + $0x34] sm:$0xf]
      %v315 = vld [vmem:[%s259 + $0x38] sm:$0xf]
      %v316 = vld [vmem:[%s259 + $0x3c] sm:$0xf]
      %v317 = vld [vmem:[%s259 + $0x40] sm:$0xf]
      %v318 = vld [vmem:[%s259 + $0x44] sm:$0xf]
      %v319 = vld [vmem:[%s259 + $0x48] sm:$0xf]
      %v320 = vld [vmem:[%s259 + $0x4c] sm:$0xf]
      %v321 = vld [vmem:[%s259 + $0x50] sm:$0xf]
      %v322 = vld [vmem:[%s259 + $0x54] sm:$0xf]
      %v323 = vld [vmem:[%s259 + $0x58] sm:$0xf]
      %v324 = vld [vmem:[%s259 + $0x5c] sm:$0xf]
      %v325 = vld [vmem:[%s259 + $0x60] sm:$0xf]
      %v326 = vld [vmem:[%s259 + $0x64] sm:$0xf]
      %v327 = vld [vmem:[%s259 + $0x68] sm:$0xf]
      %v328 = vld [vmem:[%s259 + $0x6c] sm:$0xf]
      %v329 = vld [vmem:[%s259 + $0x70] sm:$0xf]
      %v330 = vld [vmem:[%s259 + $0x74] sm:$0xf]
      %v331 = vld [vmem:[%s259 + $0x78] sm:$0xf]
      %v332 = vld [vmem:[%s259 + $0x7c] sm:$0xf]
      %v333 = vld [vmem:[%s259 + $0x80] sm:$0xf]
      %v334 = vld [vmem:[%s259 + $0x84] sm:$0xf]
      %v335 = vld [vmem:[%s259 + $0x88] sm:$0xf]
      %v336 = vld [vmem:[%s259 + $0x8c] sm:$0xf]
      %v337 = vld [vmem:[%s259 + $0x90] sm:$0xf]
      %v338 = vld [vmem:[%s259 + $0x94] sm:$0xf]
      %v339 = vld [vmem:[%s259 + $0x98] sm:$0xf]
      %v340 = vld [vmem:[%s259 + $0x9c] sm:$0xf]
      %v341 = vld [vmem:[%s259 + $0xa0] sm:$0xf]
      %v342 = vld [vmem:[%s259 + $0xa4] sm:$0xf]
      %v343 = vld [vmem:[%s259 + $0xa8] sm:$0xf]
      %v344 = vld [vmem:[%s259 + $0xac] sm:$0xf]
      %v345 = vld [vmem:[%s259 + $0xb0] sm:$0xf]
      %v346 = vld [vmem:[%s259 + $0xb4] sm:$0xf]
      %v347 = vld [vmem:[%s259 + $0xb8] sm:$0xf]
      %v348 = vld [vmem:[%s259 + $0xbc] sm:$0xf]
      %v397 = vunpack.c.l.b16 %v301
      %v398 = vunpack.c.l.b16 %v302
      %v399 = vunpack.c.l.b16 %v303
      %v400 = vunpack.c.l.b16 %v304
      %v401 = vunpack.c.l.b16 %v305
      %v402 = vunpack.c.l.b16 %v306
      %v403 = vunpack.c.l.b16 %v307
      %v404 = vunpack.c.l.b16 %v308
      %v405 = vunpack.c.l.b16 %v309
      %v406 = vunpack.c.l.b16 %v310
      %v407 = vunpack.c.l.b16 %v311
      %v408 = vunpack.c.l.b16 %v312
      %v409 = vunpack.c.l.b16 %v313
      %v410 = vunpack.c.l.b16 %v314
      %v411 = vunpack.c.l.b16 %v315
      %v412 = vunpack.c.l.b16 %v316
      %v413 = vunpack.c.l.b16 %v317
      %v414 = vunpack.c.l.b16 %v318
      %v415 = vunpack.c.l.b16 %v319
      %v416 = vunpack.c.l.b16 %v320
      %v417 = vunpack.c.l.b16 %v321
      %v418 = vunpack.c.l.b16 %v322
      %v419 = vunpack.c.l.b16 %v323
      %v420 = vunpack.c.l.b16 %v324
      %v421 = vunpack.c.l.b16 %v325
      %v422 = vunpack.c.l.b16 %v326
      %v423 = vunpack.c.l.b16 %v327
      %v424 = vunpack.c.l.b16 %v328
      %v425 = vunpack.c.l.b16 %v329
      %v426 = vunpack.c.l.b16 %v330
      %v427 = vunpack.c.l.b16 %v331
      %v428 = vunpack.c.l.b16 %v332
      %v429 = vunpack.c.l.b16 %v333
      %v430 = vunpack.c.l.b16 %v334
      %v431 = vunpack.c.l.b16 %v335
      %v432 = vunpack.c.l.b16 %v336
      %v433 = vunpack.c.l.b16 %v337
      %v434 = vunpack.c.l.b16 %v338
      %v435 = vunpack.c.l.b16 %v339
      %v436 = vunpack.c.l.b16 %v340
      %v437 = vunpack.c.l.b16 %v341
      %v438 = vunpack.c.l.b16 %v342
      %v439 = vunpack.c.l.b16 %v343
      %v440 = vunpack.c.l.b16 %v344
      %v441 = vunpack.c.l.b16 %v345
      %v442 = vunpack.c.l.b16 %v346
      %v443 = vunpack.c.l.b16 %v347
      %v444 = vunpack.c.l.b16 %v348
      %v445 = vpack.c.b16 %v398, %v397
      %v446 = vpack.c.b16 %v400, %v399
      %v447 = vpack.c.b16 %v402, %v401
      %v448 = vpack.c.b16 %v404, %v403
      %v449 = vpack.c.b16 %v406, %v405
      %v450 = vpack.c.b16 %v408, %v407
      %v451 = vpack.c.b16 %v410, %v409
      %v452 = vpack.c.b16 %v412, %v411
      %v453 = vpack.c.b16 %v414, %v413
      %v454 = vpack.c.b16 %v416, %v415
      %v455 = vpack.c.b16 %v418, %v417
      %v456 = vpack.c.b16 %v420, %v419
      %v457 = vpack.c.b16 %v422, %v421
      %v458 = vpack.c.b16 %v424, %v423
      %v459 = vpack.c.b16 %v426, %v425
      %v460 = vpack.c.b16 %v428, %v427
      %v461 = vpack.c.b16 %v430, %v429
      %v462 = vpack.c.b16 %v432, %v431
      %v463 = vpack.c.b16 %v434, %v433
      %v464 = vpack.c.b16 %v436, %v435
      %v465 = vpack.c.b16 %v438, %v437
      %v466 = vpack.c.b16 %v440, %v439
      %v467 = vpack.c.b16 %v442, %v441
      %v468 = vpack.c.b16 %v444, %v443
      %vm469 = vcmask 523264
      %v471 = vsel %vm469, %v297, 0
      %v474 = vsel %vm469, %v298, 0
      %v477 = vsel %vm469, %v299, 0
      %v480 = vsel %vm469, %v300, 0
      %v483 = vsel %vm469, %v445, 0
      %v486 = vsel %vm469, %v446, 0
      %v489 = vsel %vm469, %v447, 0
      %v492 = vsel %vm469, %v448, 0
      %v495 = vsel %vm469, %v449, 0
      %v498 = vsel %vm469, %v450, 0
      %v501 = vsel %vm469, %v451, 0
      %v504 = vsel %vm469, %v452, 0
      %v507 = vsel %vm469, %v453, 0
      %v510 = vsel %vm469, %v454, 0
      %v513 = vsel %vm469, %v455, 0
      %v516 = vsel %vm469, %v456, 0
      %v519 = vsel %vm469, %v457, 0
      %v522 = vsel %vm469, %v458, 0
      %v525 = vsel %vm469, %v459, 0
      %v528 = vsel %vm469, %v460, 0
      %v531 = vsel %vm469, %v461, 0
      %v534 = vsel %vm469, %v462, 0
      %v537 = vsel %vm469, %v463, 0
      %v540 = vsel %vm469, %v464, 0
      %v543 = vsel %vm469, %v465, 0
      %v546 = vsel %vm469, %v466, 0
      %v549 = vsel %vm469, %v467, 0
      %v552 = vsel %vm469, %v468, 0
      %554 = vmatprep.subr.bf16.mxu0 0
      %555 = vmatpush1.bf16.xpose.msra.mxu0 %v483
      %556 = vmatprep.subr.bf16.mxu0 0
      %557 = vmatpush1.bf16.xpose.msra.mxu0 %v486
      %558 = vmatprep.subr.bf16.mxu0 0
      %559 = vmatpush1.bf16.xpose.msra.mxu0 %v489
      %560 = vmatprep.subr.bf16.mxu0 0
      %561 = vmatpush1.bf16.xpose.msra.mxu0 %v492
      %562 = vmatprep.subr.bf16.mxu0 0
      %563 = vmatpush1.bf16.xpose.msra.mxu0 %v495
      %564 = vmatprep.subr.bf16.mxu0 0
      %565 = vmatpush1.bf16.xpose.msra.mxu0 %v498
      %566 = vmatprep.subr.bf16.mxu0 0
      %567 = vmatpush1.bf16.xpose.msra.mxu0 %v501
      %568 = vmatprep.subr.bf16.mxu0 0
      %569 = vmatpush1.bf16.xpose.msra.mxu0 %v504
      %570 = vmatprep.subr.bf16.mxu0 0
      %571 = vmatpush1.bf16.xpose.msra.mxu0 %v507
      %572 = vmatprep.subr.bf16.mxu0 0
      %573 = vmatpush1.bf16.xpose.msra.mxu0 %v510
      %574 = vmatprep.subr.bf16.mxu0 0
      %575 = vmatpush1.bf16.xpose.msra.mxu0 %v513
      %576 = vmatprep.subr.bf16.mxu0 0
      %577 = vmatpush1.bf16.xpose.msra.mxu0 %v516
      %578 = vmatprep.subr.bf16.mxu0 0
      %579 = vmatpush1.bf16.xpose.msra.mxu0 %v519
      %580 = vmatprep.subr.bf16.mxu0 0
      %581 = vmatpush1.bf16.xpose.msra.mxu0 %v522
      %582 = vmatprep.subr.bf16.mxu0 0
      %583 = vmatpush1.bf16.xpose.msra.mxu0 %v525
      %584 = vmatprep.subr.bf16.mxu0 0
      %585 = vmatpush1.bf16.xpose.msra.mxu0 %v528
      %586 = vmatprep.mubr.bf16.mxu0 0
      %587 = vmatmul.mubr.bf16.gmra.mrb[0].mxu0 %v471
      %v588 = vpop.f32.mrb[0].mxu0
      %v589 = vadd.f32 0.0, %v588
      %v590 = vpop.f32.mrb[0].mxu0
      %v591 = vadd.f32 0.0, %v590
      %v592 = vpop.f32.mrb[0].mxu0
      %v593 = vadd.f32 0.0, %v592
      %v594 = vpop.f32.mrb[0].mxu0
      %v595 = vadd.f32 0.0, %v594
      %596 = vmatprep.mubr.bf16.mxu0 0
      %597 = vmatmul.mubr.bf16.gmra.mrb[0].mxu0 %v474
      %v598 = vpop.f32.mrb[0].mxu0
      %v599 = vadd.f32 0.0, %v598
      %v600 = vpop.f32.mrb[0].mxu0
      %v601 = vadd.f32 0.0, %v600
      %v602 = vpop.f32.mrb[0].mxu0
      %v603 = vadd.f32 0.0, %v602
      %v604 = vpop.f32.mrb[0].mxu0
      %v605 = vadd.f32 0.0, %v604
      %606 = vmatprep.mubr.bf16.mxu0 0
      %607 = vmatmul.mubr.bf16.gmra.mrb[0].mxu0 %v477
      %v608 = vpop.f32.mrb[0].mxu0
      %v609 = vadd.f32 0.0, %v608
      %v610 = vpop.f32.mrb[0].mxu0
      %v611 = vadd.f32 0.0, %v610
      %v612 = vpop.f32.mrb[0].mxu0
      %v613 = vadd.f32 0.0, %v612
      %v614 = vpop.f32.mrb[0].mxu0
      %v615 = vadd.f32 0.0, %v614
      %616 = vmatprep.mubr.bf16.mxu0 0
      %617 = vmatmul.mubr.bf16.gmra.mrb[0].mxu0 %v480
      %v618 = vpop.f32.mrb[0].mxu0
      %v619 = vadd.f32 0.0, %v618
      %v620 = vpop.f32.mrb[0].mxu0
      %v621 = vadd.f32 0.0, %v620
      %v622 = vpop.f32.mrb[0].mxu0
      %v623 = vadd.f32 0.0, %v622
      %v624 = vpop.f32.mrb[0].mxu0
      %v625 = vadd.f32 0.0, %v624
      %626 = vdwg.mxu0
      %627 = vmatprep.subr.bf16.mxu0 0
      %628 = vmatpush1.bf16.xpose.msra.mxu0 %v531
      %629 = vmatprep.subr.bf16.mxu0 0
      %630 = vmatpush1.bf16.xpose.msra.mxu0 %v534
      %631 = vmatprep.subr.bf16.mxu0 0
      %632 = vmatpush1.bf16.xpose.msra.mxu0 %v537
      %633 = vmatprep.subr.bf16.mxu0 0
      %634 = vmatpush1.bf16.xpose.msra.mxu0 %v540
      %635 = vmatprep.subr.bf16.mxu0 0
      %636 = vmatpush1.bf16.xpose.msra.mxu0 %v543
      %637 = vmatprep.subr.bf16.mxu0 0
      %638 = vmatpush1.bf16.xpose.msra.mxu0 %v546
      %639 = vmatprep.subr.bf16.mxu0 0
      %640 = vmatpush1.bf16.xpose.msra.mxu0 %v549
      %641 = vmatprep.subr.bf16.mxu0 0
      %642 = vmatpush1.bf16.xpose.msra.mxu0 %v552
      %643 = vmatprep.subr.bf16.mxu0 0
      %644 = vmatpush1.bf16.xpose.msra.mxu0 0
      %645 = vmatprep.subr.bf16.mxu0 0
      %646 = vmatpush1.bf16.xpose.msra.mxu0 0
      %647 = vmatprep.subr.bf16.mxu0 0
      %648 = vmatpush1.bf16.xpose.msra.mxu0 0
      %649 = vmatprep.subr.bf16.mxu0 0
      %650 = vmatpush1.bf16.xpose.msra.mxu0 0
      %651 = vmatprep.subr.bf16.mxu0 0
      %652 = vmatpush1.bf16.xpose.msra.mxu0 0
      %653 = vmatprep.subr.bf16.mxu0 0
      %654 = vmatpush1.bf16.xpose.msra.mxu0 0
      %655 = vmatprep.subr.bf16.mxu0 0
      %656 = vmatpush1.bf16.xpose.msra.mxu0 0
      %657 = vmatprep.subr.bf16.mxu0 0
      %658 = vmatpush1.bf16.xpose.msra.mxu0 0
      %659 = vmatprep.mubr.bf16.mxu0 0
      %660 = vmatmul.mubr.bf16.gmra.mrb[0].mxu0 %v471
      %v661 = vpop.f32.mrb[0].mxu0
      %v662 = vadd.f32 0.0, %v661
      %v663 = vpop.f32.mrb[0].mxu0
      %v664 = vpop.f32.mrb[0].mxu0
      %v665 = vadd.f32 0.0, %v664
      %v666 = vpop.f32.mrb[0].mxu0
      %667 = vmatprep.mubr.bf16.mxu0 0
      %668 = vmatmul.mubr.bf16.gmra.mrb[0].mxu0 %v474
      %v669 = vpop.f32.mrb[0].mxu0
      %v670 = vadd.f32 0.0, %v669
      %v671 = vpop.f32.mrb[0].mxu0
      %v672 = vpop.f32.mrb[0].mxu0
      %v673 = vadd.f32 0.0, %v672
      %v674 = vpop.f32.mrb[0].mxu0
      %675 = vmatprep.mubr.bf16.mxu0 0
      %676 = vmatmul.mubr.bf16.gmra.mrb[0].mxu0 %v477
      %v677 = vpop.f32.mrb[0].mxu0
      %v678 = vadd.f32 0.0, %v677
      %v679 = vpop.f32.mrb[0].mxu0
      %v680 = vpop.f32.mrb[0].mxu0
      %v681 = vadd.f32 0.0, %v680
      %v682 = vpop.f32.mrb[0].mxu0
      %683 = vmatprep.mubr.bf16.mxu0 0
      %684 = vmatmul.mubr.bf16.gmra.mrb[0].mxu0 %v480
      %v685 = vpop.f32.mrb[0].mxu0
      %v686 = vadd.f32 0.0, %v685
      %v687 = vpop.f32.mrb[0].mxu0
      %v688 = vpop.f32.mrb[0].mxu0
      %v689 = vadd.f32 0.0, %v688
      %v690 = vpop.f32.mrb[0].mxu0
      %691 = vdwg.mxu0
      %v692 = vmax.f32 %v589, %v591
      %v693 = vmax.f32 %v692, %v662
      %694 = vmax.xlane.f32.xlu0 %v693
      %v695 = vpop.xlane.xlu0 %694
      %v696 = vmax.f32 %v593, %v595
      %v697 = vmax.f32 %v696, %v665
      %698 = vmax.xlane.f32.xlu0 %v697
      %v699 = vpop.xlane.xlu0 %698
      %v700 = vmax.f32 %v599, %v601
      %v701 = vmax.f32 %v700, %v670
      %702 = vmax.xlane.f32.xlu0 %v701
      %v703 = vpop.xlane.xlu0 %702
      %v704 = vmax.f32 %v603, %v605
      %v705 = vmax.f32 %v704, %v673
      %706 = vmax.xlane.f32.xlu0 %v705
      %v707 = vpop.xlane.xlu0 %706
      %v708 = vmax.f32 %v609, %v611
      %v709 = vmax.f32 %v708, %v678
      %710 = vmax.xlane.f32.xlu0 %v709
      %v711 = vpop.xlane.xlu0 %710
      %v712 = vmax.f32 %v613, %v615
      %v713 = vmax.f32 %v712, %v681
      %714 = vmax.xlane.f32.xlu0 %v713
      %v715 = vpop.xlane.xlu0 %714
      %v716 = vmax.f32 %v619, %v621
      %v717 = vmax.f32 %v716, %v686
      %718 = vmax.xlane.f32.xlu0 %v717
      %v719 = vpop.xlane.xlu0 %718
      %v720 = vmax.f32 %v623, %v625
      %v721 = vmax.f32 %v720, %v689
      %722 = vmax.xlane.f32.xlu0 %v721
      %v723 = vpop.xlane.xlu0 %722
      %v724 = vsub.f32 %v589, %v695
      %v725 = vsub.f32 %v591, %v695
      %v726 = vsub.f32 %v662, %v695
      %v727 = vsub.f32 %v593, %v699
      %v728 = vsub.f32 %v595, %v699
      %v729 = vsub.f32 %v665, %v699
      %v730 = vsub.f32 %v599, %v703
      %v731 = vsub.f32 %v601, %v703
      %v732 = vsub.f32 %v670, %v703
      %v733 = vsub.f32 %v603, %v707
      %v734 = vsub.f32 %v605, %v707
      %v735 = vsub.f32 %v673, %v707
      %v736 = vsub.f32 %v609, %v711
      %v737 = vsub.f32 %v611, %v711
      %v738 = vsub.f32 %v678, %v711
      %v739 = vsub.f32 %v613, %v715
      %v740 = vsub.f32 %v615, %v715
      %v741 = vsub.f32 %v681, %v715
      %v742 = vsub.f32 %v619, %v719
      %v743 = vsub.f32 %v621, %v719
      %v744 = vsub.f32 %v686, %v719
      %v745 = vsub.f32 %v623, %v723
      %v746 = vsub.f32 %v625, %v723
      %v747 = vsub.f32 %v689, %v723
      %v748 = vmul.f32 %v724, 1.442695
      %v749 = vpow.pop %v748
      %v750 = vmul.f32 %v725, 1.442695
      %v751 = vpow.pop %v750
      %v752 = vmul.f32 %v726, 1.442695
      %v753 = vpow.pop %v752
      %v754 = vmul.f32 %v727, 1.442695
      %v755 = vpow.pop %v754
      %v756 = vmul.f32 %v728, 1.442695
      %v757 = vpow.pop %v756
      %v758 = vmul.f32 %v729, 1.442695
      %v759 = vpow.pop %v758
      %v760 = vmul.f32 %v730, 1.442695
      %v761 = vpow.pop %v760
      %v762 = vmul.f32 %v731, 1.442695
      %v763 = vpow.pop %v762
      %v764 = vmul.f32 %v732, 1.442695
      %v765 = vpow.pop %v764
      %v766 = vmul.f32 %v733, 1.442695
      %v767 = vpow.pop %v766
      %v768 = vmul.f32 %v734, 1.442695
      %v769 = vpow.pop %v768
      %v770 = vmul.f32 %v735, 1.442695
      %v771 = vpow.pop %v770
      %v772 = vmul.f32 %v736, 1.442695
      %v773 = vpow.pop %v772
      %v774 = vmul.f32 %v737, 1.442695
      %v775 = vpow.pop %v774
      %v776 = vmul.f32 %v738, 1.442695
      %v777 = vpow.pop %v776
      %v778 = vmul.f32 %v739, 1.442695
      %v779 = vpow.pop %v778
      %v780 = vmul.f32 %v740, 1.442695
      %v781 = vpow.pop %v780
      %v782 = vmul.f32 %v741, 1.442695
      %v783 = vpow.pop %v782
      %v784 = vmul.f32 %v742, 1.442695
      %v785 = vpow.pop %v784
      %v786 = vmul.f32 %v743, 1.442695
      %v787 = vpow.pop %v786
      %v788 = vmul.f32 %v744, 1.442695
      %v789 = vpow.pop %v788
      %v790 = vmul.f32 %v745, 1.442695
      %v791 = vpow.pop %v790
      %v792 = vmul.f32 %v746, 1.442695
      %v793 = vpow.pop %v792
      %v794 = vmul.f32 %v747, 1.442695
      %v795 = vpow.pop %v794
      %v796 = vpack.c.bf16 %v755, %v749
      %v797 = vpack.c.bf16 %v757, %v751
      %v798 = vpack.c.bf16 %v759, %v753
      %v799 = vpack.c.bf16 %v767, %v761
      %v800 = vpack.c.bf16 %v769, %v763
      %v801 = vpack.c.bf16 %v771, %v765
      %v802 = vpack.c.bf16 %v779, %v773
      %v803 = vpack.c.bf16 %v781, %v775
      %v804 = vpack.c.bf16 %v783, %v777
      %v805 = vpack.c.bf16 %v791, %v785
      %v806 = vpack.c.bf16 %v793, %v787
      %v807 = vpack.c.bf16 %v795, %v789
      %v808 = vld [vmem:[%s264] sm:$0xff]
      %v809 = vld [vmem:[%s264 + $0x8] sm:$0xf]
      %v812 = vunpack.c.l.b16 %v808
      %v813 = vunpack.c.h.b16 %v808
      %v814 = vunpack.c.l.b16 %v809
      %v815 = vpack.c.b16 %v812, %v812
      %v816 = vpack.c.b16 %v813, %v813
      %v817 = vpack.c.b16 %v814, %v814
      %821 = vmatprep.subr.bf16.mxu0 %v797
      %822 = vmatpush1.bf16.xpose.msra.mxu0 %v796
      %823 = vmatprep.subr.bf16.mxu0 %v800
      %824 = vmatpush1.bf16.xpose.msra.mxu0 %v799
      %825 = vmatprep.subr.bf16.mxu0 %v803
      %826 = vmatpush1.bf16.xpose.msra.mxu0 %v802
      %827 = vmatprep.subr.bf16.mxu0 %v806
      %828 = vmatpush1.bf16.xpose.msra.mxu0 %v805
      %829 = vmatprep.subr.bf16.mxu0 0
      %830 = vmatpush1.bf16.xpose.msra.mxu0 0
      %831 = vmatprep.subr.bf16.mxu0 0
      %832 = vmatpush1.bf16.xpose.msra.mxu0 0
      %833 = vmatprep.subr.bf16.mxu0 0
      %834 = vmatpush1.bf16.xpose.msra.mxu0 0
      %835 = vmatprep.subr.bf16.mxu0 0
      %836 = vmatpush1.bf16.xpose.msra.mxu0 0
      %837 = vmatprep.subr.bf16.mxu0 0
      %838 = vmatpush1.bf16.xpose.msra.mxu0 0
      %839 = vmatprep.subr.bf16.mxu0 0
      %840 = vmatpush1.bf16.xpose.msra.mxu0 0
      %841 = vmatprep.subr.bf16.mxu0 0
      %842 = vmatpush1.bf16.xpose.msra.mxu0 0
      %843 = vmatprep.subr.bf16.mxu0 0
      %844 = vmatpush1.bf16.xpose.msra.mxu0 0
      %845 = vmatprep.subr.bf16.mxu0 0
      %846 = vmatpush1.bf16.xpose.msra.mxu0 0
      %847 = vmatprep.subr.bf16.mxu0 0
      %848 = vmatpush1.bf16.xpose.msra.mxu0 0
      %849 = vmatprep.subr.bf16.mxu0 0
      %850 = vmatpush1.bf16.xpose.msra.mxu0 0
      %851 = vmatprep.subr.bf16.mxu0 0
      %852 = vmatpush1.bf16.xpose.msra.mxu0 0
      %853 = vmatprep.mubr.bf16.mxu0 %v816
      %854 = vmatmul.mubr.bf16.gmra.mrb[0].mxu0 %v815
      %v855 = vpop.f32.mrb[0].mxu0
      %v856 = vadd.f32 0.0, %v855
      %v857 = vpop.f32.mrb[0].mxu0
      %v858 = vpop.f32.mrb[0].mxu0
      %v859 = vpop.f32.mrb[0].mxu0
      %860 = vdwg.mxu0
      %861 = vmatprep.subr.bf16.mxu0 0
      %862 = vmatpush1.bf16.xpose.msra.mxu0 %v798
      %863 = vmatprep.subr.bf16.mxu0 0
      %864 = vmatpush1.bf16.xpose.msra.mxu0 %v801
      %865 = vmatprep.subr.bf16.mxu0 0
      %866 = vmatpush1.bf16.xpose.msra.mxu0 %v804
      %867 = vmatprep.subr.bf16.mxu0 0
      %868 = vmatpush1.bf16.xpose.msra.mxu0 %v807
      %869 = vmatprep.subr.bf16.mxu0 0
      %870 = vmatpush1.bf16.xpose.msra.mxu0 0
      %871 = vmatprep.subr.bf16.mxu0 0
      %872 = vmatpush1.bf16.xpose.msra.mxu0 0
      %873 = vmatprep.subr.bf16.mxu0 0
      %874 = vmatpush1.bf16.xpose.msra.mxu0 0
      %875 = vmatprep.subr.bf16.mxu0 0
      %876 = vmatpush1.bf16.xpose.msra.mxu0 0
      %877 = vmatprep.subr.bf16.mxu0 0
      %878 = vmatpush1.bf16.xpose.msra.mxu0 0
      %879 = vmatprep.subr.bf16.mxu0 0
      %880 = vmatpush1.bf16.xpose.msra.mxu0 0
      %881 = vmatprep.subr.bf16.mxu0 0
      %882 = vmatpush1.bf16.xpose.msra.mxu0 0
      %883 = vmatprep.subr.bf16.mxu0 0
      %884 = vmatpush1.bf16.xpose.msra.mxu0 0
      %885 = vmatprep.subr.bf16.mxu0 0
      %886 = vmatpush1.bf16.xpose.msra.mxu0 0
      %887 = vmatprep.subr.bf16.mxu0 0
      %888 = vmatpush1.bf16.xpose.msra.mxu0 0
      %889 = vmatprep.subr.bf16.mxu0 0
      %890 = vmatpush1.bf16.xpose.msra.mxu0 0
      %891 = vmatprep.subr.bf16.mxu0 0
      %892 = vmatpush1.bf16.xpose.msra.mxu0 0
      %893 = vmatprep.mubr.bf16.mxu0 0
      %894 = vmatmul.mubr.bf16.gmra.mrb[0].mxu0 %v817
      %v895 = vpop.f32.mrb[0].mxu0
      %v896 = vadd.f32 %v856, %v895
      %v897 = vpop.f32.mrb[0].mxu0
      %v898 = vpop.f32.mrb[0].mxu0
      %v899 = vpop.f32.mrb[0].mxu0
      %900 = vdwg.mxu0
      %v901 = vrcp.pop %v896
      %v902 = vlaneseq
      %v903 = vshrl.u32 %v902, 7
      %v904 = vsub.s32 7, %v903
      %v905 = vrot.slane %v901, %v904
      %v906 = vmul.f32 %v896, %v905
      %vm907 = vcmask 522240
      %908 = vst.msk [vmem:[%s268] sm:$0x7f] %vm907, %v906
      %v909 = vlaneseq
      %v910 = vshrl.u32 %v909, 7
      %v911 = vadd.s32 %v910, 8
      %v912 = vadd.s32 %v910, 16
      %v913 = vadd.s32 %v910, 24
      %v914 = vadd.s32 %v910, 32
      %v915 = vadd.s32 %v910, 40
      %v916 = vadd.s32 %v910, 48
      %v917 = vadd.s32 %v910, 56
      %v918 = vld [vmem:[%s0] sm:$0x7]
      %v919 = vlaneseq
      %v920 = vshrl.u32 %v919, 7
      %v921 = vsub.s32 0, %v920
      %v922 = vrot.slane %v918, %v921
      %v923 = vlaneseq
      %v924 = vshrl.u32 %v923, 7
      %v925 = vsub.s32 1, %v924
      %v926 = vrot.slane %v918, %v925
      %v927 = vlaneseq
      %v928 = vshrl.u32 %v927, 7
      %v929 = vsub.s32 2, %v928
      %v930 = vrot.slane %v918, %v929
      %vm931 = vcmp.eq.s32.totalorder %v922, %v910
      %vm932 = vcmp.eq.s32.totalorder %v926, %v910
      %vm933 = vcmp.eq.s32.totalorder %v930, %v910
      %vm934 = vcmp.eq.s32.totalorder %v922, %v911
      %vm935 = vcmp.eq.s32.totalorder %v926, %v911
      %vm936 = vcmp.eq.s32.totalorder %v930, %v911
      %vm937 = vcmp.eq.s32.totalorder %v922, %v912
      %vm938 = vcmp.eq.s32.totalorder %v926, %v912
      %vm939 = vcmp.eq.s32.totalorder %v930, %v912
      %vm940 = vcmp.eq.s32.totalorder %v922, %v913
      %vm941 = vcmp.eq.s32.totalorder %v926, %v913
      %vm942 = vcmp.eq.s32.totalorder %v930, %v913
      %vm943 = vcmp.eq.s32.totalorder %v922, %v914
      %vm944 = vcmp.eq.s32.totalorder %v926, %v914
      %vm945 = vcmp.eq.s32.totalorder %v930, %v914
      %vm946 = vcmp.eq.s32.totalorder %v922, %v915
      %vm947 = vcmp.eq.s32.totalorder %v926, %v915
      %vm948 = vcmp.eq.s32.totalorder %v930, %v915
      %vm949 = vcmp.eq.s32.totalorder %v922, %v916
      %vm950 = vcmp.eq.s32.totalorder %v926, %v916
      %vm951 = vcmp.eq.s32.totalorder %v930, %v916
      %vm952 = vcmp.eq.s32.totalorder %v922, %v917
      %vm953 = vcmp.eq.s32.totalorder %v926, %v917
      %vm954 = vcmp.eq.s32.totalorder %v930, %v917
      %v955 = vsel %vm931, %v749, 0.0
      %v956 = vsel %vm932, %v751, 0.0
      %v957 = vsel %vm933, %v753, 0.0
      %v958 = vsel %vm934, %v755, 0.0
      %v959 = vsel %vm935, %v757, 0.0
      %v960 = vsel %vm936, %v759, 0.0
      %v961 = vsel %vm937, %v761, 0.0
      %v962 = vsel %vm938, %v763, 0.0
      %v963 = vsel %vm939, %v765, 0.0
      %v964 = vsel %vm940, %v767, 0.0
      %v965 = vsel %vm941, %v769, 0.0
      %v966 = vsel %vm942, %v771, 0.0
      %v967 = vsel %vm943, %v773, 0.0
      %v968 = vsel %vm944, %v775, 0.0
      %v969 = vsel %vm945, %v777, 0.0
      %v970 = vsel %vm946, %v779, 0.0
      %v971 = vsel %vm947, %v781, 0.0
      %v972 = vsel %vm948, %v783, 0.0
      %v973 = vsel %vm949, %v785, 0.0
      %v974 = vsel %vm950, %v787, 0.0
      %v975 = vsel %vm951, %v789, 0.0
      %v976 = vsel %vm952, %v791, 0.0
      %v977 = vsel %vm953, %v793, 0.0
      %v978 = vsel %vm954, %v795, 0.0
      %v979 = vadd.f32 %v955, %v956
      %v980 = vadd.f32 %v979, %v957
      %981 = vadd.xlane.f32.xlu0 %v980
      %v982 = vpop.xlane.xlu0 %981
      %v983 = vadd.f32 %v958, %v959
      %v984 = vadd.f32 %v983, %v960
      %985 = vadd.xlane.f32.xlu0 %v984
      %v986 = vpop.xlane.xlu0 %985
      %v987 = vadd.f32 %v961, %v962
      %v988 = vadd.f32 %v987, %v963
      %989 = vadd.xlane.f32.xlu0 %v988
      %v990 = vpop.xlane.xlu0 %989
      %v991 = vadd.f32 %v964, %v965
      %v992 = vadd.f32 %v991, %v966
      %993 = vadd.xlane.f32.xlu0 %v992
      %v994 = vpop.xlane.xlu0 %993
      %v995 = vadd.f32 %v967, %v968
      %v996 = vadd.f32 %v995, %v969
      %997 = vadd.xlane.f32.xlu0 %v996
      %v998 = vpop.xlane.xlu0 %997
      %v999 = vadd.f32 %v970, %v971
      %v1000 = vadd.f32 %v999, %v972
      %1001 = vadd.xlane.f32.xlu0 %v1000
      %v1002 = vpop.xlane.xlu0 %1001
      %v1003 = vadd.f32 %v973, %v974
      %v1004 = vadd.f32 %v1003, %v975
      %1005 = vadd.xlane.f32.xlu0 %v1004
      %v1006 = vpop.xlane.xlu0 %1005
      %v1007 = vadd.f32 %v976, %v977
      %v1008 = vadd.f32 %v1007, %v978
      %1009 = vadd.xlane.f32.xlu0 %v1008
      %v1010 = vpop.xlane.xlu0 %1009
      %v1011 = vlog2.pop %v896
      %v1012 = vmul.f32 %v1011, 0.6931472
      %v1014 = vrot.slane %v1012, 7
      %vm1016 = vcmask 516096
      %v1017 = vsel %vm1016, %v1014, 0.0
      %1018 = vadd.xlane.f32.xlu0 %v1017
      %v1019 = vpop.xlane.xlu0 %1018
      %v1020 = vrot.slane %v1019, 4
      %v1021 = vadd.f32 %v1019, %v1020
      %v1022 = vrot.slane %v1021, 2
      %v1023 = vadd.f32 %v1021, %v1022
      %v1024 = vrot.slane %v1023, 1
      %v1025 = vadd.f32 %v1023, %v1024
      %s1026 = vtos %v1025
      %v1027 = vrcp.pop 64.0
      %s1028 = vtos %v1027
      %s1029 = smul.f32 %s1026, %s1028
      %v1030 = vlog2.pop %v982
      %v1031 = vmul.f32 %v1030, 0.6931472
      %v1032 = vlog2.pop %v986
      %v1033 = vmul.f32 %v1032, 0.6931472
      %v1034 = vlog2.pop %v990
      %v1035 = vmul.f32 %v1034, 0.6931472
      %v1036 = vlog2.pop %v994
      %v1037 = vmul.f32 %v1036, 0.6931472
      %v1038 = vlog2.pop %v998
      %v1039 = vmul.f32 %v1038, 0.6931472
      %v1040 = vlog2.pop %v1002
      %v1041 = vmul.f32 %v1040, 0.6931472
      %v1042 = vlog2.pop %v1006
      %v1043 = vmul.f32 %v1042, 0.6931472
      %v1044 = vlog2.pop %v1010
      %v1045 = vmul.f32 %v1044, 0.6931472
      %vm1046 = vcmask 7168
      %v1047 = vsel %vm1046, %v1031, 0.0
      %v1048 = vsel %vm1046, %v1033, 0.0
      %v1049 = vadd.f32 %v1047, %v1048
      %v1050 = vsel %vm1046, %v1035, 0.0
      %v1051 = vadd.f32 %v1049, %v1050
      %v1052 = vsel %vm1046, %v1037, 0.0
      %v1053 = vadd.f32 %v1051, %v1052
      %v1054 = vsel %vm1046, %v1039, 0.0
      %v1055 = vadd.f32 %v1053, %v1054
      %v1056 = vsel %vm1046, %v1041, 0.0
      %v1057 = vadd.f32 %v1055, %v1056
      %v1058 = vsel %vm1046, %v1043, 0.0
      %v1059 = vadd.f32 %v1057, %v1058
      %v1060 = vsel %vm1046, %v1045, 0.0
      %v1061 = vadd.f32 %v1059, %v1060
      %1062 = vadd.xlane.f32.xlu0 %v1061
      %v1063 = vpop.xlane.xlu0 %1062
      %v1064 = vrot.slane %v1063, 4
      %v1065 = vadd.f32 %v1063, %v1064
      %v1066 = vrot.slane %v1065, 2
      %v1067 = vadd.f32 %v1065, %v1066
      %v1068 = vrot.slane %v1067, 1
      %v1069 = vadd.f32 %v1067, %v1068
      %s1070 = vtos %v1069
      %v1071 = vrcp.pop 64.0
      %s1072 = vtos %v1071
      %s1073 = smul.f32 %s1070, %s1072
      %s1074 = ssub.f32 %s1029, %s1073
      %v1075 = vstv %s1074
      %vm1076 = vcmask 0
      %1077 = vst.msk [vmem:[%s271] sm:$0x1] %vm1076, %v1075
      %p1078 = scmp.lt.s32.totalorder %s17, 1
      %s1079 = scalar_select %p1078, %s17, 1
      %s1080 = smul.addr %s1079, 8
      %s1081 = scalar_lea.vmem %s4, %s1080
      %p1082 = scmp.lt.s32.totalorder %s17, 1
      %s1083 = scalar_select %p1082, %s17, 1
      %s1084 = scalar_lea.vmem %s5, %s1083
      // Predicated region
      $region37: #{_lambda_.3} parent=35 // pred_check
        %p1085 = pneg %p134
      $region38: #{_lambda_.3} parent=35 // pred_check_branch
        %1087 = sbr.rel (%p1085) target = $region40
      $region39: #{_lambda_.3} parent=35 // pred_region
        _
      $region40: #{_lambda_.3} parent=35 // pred_fallthru
        _
      // Predicated region
      $region41: #{_lambda_.3} parent=35 // pred_check
        %p1088 = pneg %p160
      $region42: #{_lambda_.3} parent=35 // pred_check_branch
        %1090 = sbr.rel (%p1088) target = $region44
      $region43: #{_lambda_.3} parent=35 // pred_region
        _
      $region44: #{_lambda_.3} parent=35 // pred_fallthru
        _
    $region36: #{_lambda_.3} parent=5 // pred_fallthru
      _
    %p1091 = scmp.le.s32.totalorder 2, %s12
    // Predicated region
    $region45: #{_lambda_.3} parent=5 // pred_check
      %p1092 = pneg %p1091
    $region46: #{_lambda_.3} parent=5 // pred_check_branch
      %1094 = sbr.rel (%p1092) target = $region48
    $region47: #{_lambda_.3} parent=5 // pred_region
      %s1095 = ssub.s32 %s12, 2
      // Predicated region
      $region49: #{_lambda_.3} parent=47 // pred_check
        %p1096 = pneg %p140
      $region50: #{_lambda_.3} parent=47 // pred_check_branch
        %1098 = sbr.rel (%p1096) target = $region52
      $region51: #{_lambda_.3} parent=47 // pred_region
        %p1099 = scmp.lt.s32.totalorder %s18, 1
        %s1100 = scalar_select %p1099, %s18, 1
        %s1101 = smul.addr %s1100, 8
        %s1102 = scalar_lea.vmem %s4, %s1101
      $region52: #{_lambda_.3} parent=47 // pred_fallthru
        _
      // Predicated region
      $region53: #{_lambda_.3} parent=47 // pred_check
        %p1103 = pneg %p166
      $region54: #{_lambda_.3} parent=47 // pred_check_branch
        %1105 = sbr.rel (%p1103) target = $region56
      $region55: #{_lambda_.3} parent=47 // pred_region
        %p1106 = scmp.lt.s32.totalorder %s18, 1
        %s1107 = scalar_select %p1106, %s18, 1
        %s1108 = scalar_lea.vmem %s5, %s1107
      $region56: #{_lambda_.3} parent=47 // pred_fallthru
        _
    $region48: #{_lambda_.3} parent=5 // pred_fallthru
      _
  $region6: #{_lambda_.3} parent=0 // loop_footer
    %s16 = sadd.s32 1, %s12
  $region7: #{_lambda_.3} parent=0 // loop_footer_branch
    %11 = sbr.rel target = $region3
  $region8: #{_lambda_.3} parent=0 // loop_exit
    _

</llo_original>
